<compile_context>
chip_gen: v7x
topology: tpu7x:2x2x1
jax: 0.10.0
libtpu: 0.0.40
codegen_flags: <defaults>
</compile_context>

<pallas_src>
import functools

import jax
import jax.numpy as jnp
from jax import lax
from jax.experimental import pallas as pl
from jax.experimental.pallas import tpu as pltpu

NORM_EPS = 1e-5


def emfgcb_kernel(x_hbm,
                  w_hfe_ref, b_hfe_ref,
                  g1_ref, b1_ref, g2_ref, b2_ref,
                  g3a_ref, b3a_ref, g3b_ref, b3b_ref,
                  w_m1a_ref, w_m1b_ref, b_m1_ref,
                  w_m2_ref, b_m2_ref,
                  o_hbm,
                  x_vmem, o_vmem, in_sem, out_sem,
                  *, n_batch, hw, inv_count):
    # ---- gather: NCHW batch slices -> one lane-dense (C, L = N*H*W) buffer ----
    in_copies = [
        pltpu.make_async_copy(x_hbm.at[n],
                              x_vmem.at[:, n * hw:(n + 1) * hw],
                              in_sem.at[n])
        for n in range(n_batch)
    ]
    for cp in in_copies:
        cp.start()
    for cp in in_copies:
        cp.wait()

    x = x_vmem[...]                                   # (C, L) f32

    def bn_scale_bias(a, gamma_ref, beta_ref):
        # Training-mode BatchNorm2d stats over (N,H,W) == the lane axis of (C, L).
        # Two-pass (mean-subtracted) variance for numerical safety; folded into a
        # per-channel scale/bias so applying BN is a single FMA pass.
        mean = jnp.sum(a, axis=1, keepdims=True) * inv_count
        d = a - mean
        var = jnp.sum(d * d, axis=1, keepdims=True) * inv_count
        scale = gamma_ref[...] * lax.rsqrt(var + NORM_EPS)
        bias = beta_ref[...] - mean * scale
        return scale, bias

    def conv_fma(w, a, col_scale=None):
        # 1x1 conv as VPU broadcast-FMAs: out[o, :] = sum_c w[o, c] * a[c, :].
        # With K = 4..32 channels the MXU is pointless; this keeps everything f32
        # and skips the bf16 pack/cast passes.  `col_scale` folds a per-input-
        # channel scale (BN3) into the weight column (hidden x C work only).
        k = a.shape[0]
        out = None
        for c in range(k):
            wcol = w[:, c:c + 1]
            if col_scale is not None:
                wcol = wcol * col_scale[c:c + 1, 0:1]
            term = wcol * a[c:c + 1, :]
            out = term if out is None else out + term
        return out

    def matvec(w, v):
        # (O, C) @ (C, 1) as a tiny unrolled FMA (per-channel bias folding).
        k = v.shape[0]
        out = None
        for c in range(k):
            term = w[:, c:c + 1] * v[c:c + 1, 0:1]
            out = term if out is None else out + term
        return out

    # residual 1, BN1 fused into the residual: x1 = x*(1+s1) + t1
    s1, t1 = bn_scale_bias(x, g1_ref, b1_ref)
    x1 = x * (1.0 + s1) + t1

    # HFE reduces to its final 1x1 conv (conv1/group outputs are dead code).
    hfe = conv_fma(w_hfe_ref[...], x1) + b_hfe_ref[...]
    s2, t2 = bn_scale_bias(hfe, g2_ref, b2_ref)
    x2 = x1 + hfe * s2 + t2

    # BN3 over the channel-concat [x1, x2]: stats are per-channel, so evaluate
    # per concat half and fold scale/bias straight into the Mlp conv1 weights.
    s3a, t3a = bn_scale_bias(x1, g3a_ref, b3a_ref)
    s3b, t3b = bn_scale_bias(x2, g3b_ref, b3b_ref)

    w_m1a = w_m1a_ref[...]
    w_m1b = w_m1b_ref[...]
    pre = (conv_fma(w_m1a, x1, col_scale=s3a)
           + conv_fma(w_m1b, x2, col_scale=s3b)
           + matvec(w_m1a, t3a)
           + matvec(w_m1b, t3b)
           + b_m1_ref[...])
    h = jnp.maximum(pre, 0.0)                         # (hidden, L) f32, no bf16 round-trip

    # Mlp conv2 on the full sublane-dense (2C, L) slab + residual on concat([x1, x2]);
    # single unmasked full-tile store into the output VMEM buffer.
    o_vmem[...] = (jnp.concatenate([x1, x2], axis=0)
                   + conv_fma(w_m2_ref[...], h)
                   + b_m2_ref[...])

    # ---- scatter: (2C, L) result back to (N, 2C, H*W) batch slices in HBM ----
    out_copies = [
        pltpu.make_async_copy(o_vmem.at[:, n * hw:(n + 1) * hw],
                              o_hbm.at[n],
                              out_sem.at[n])
        for n in range(n_batch)
    ]
    for cp in out_copies:
        cp.start()
    for cp in out_copies:
        cp.wait()


def emfgcb_pallas(x, params):
    """x: (N, C, H, W) float32 -> (N, 2C, H, W) float32 (EMFGCB forward)."""
    (g1, b1, w_hfe, b_hfe, g2, b2, g3, b3, w_m1, b_m1, w_m2, b_m2) = params
    N, C, H, W = x.shape
    HW = H * W
    L = N * HW                      # lane axis; multiple of 128 at the test shapes
    C2 = 2 * C

    # Free reshape only -- no transpose pass, the NCHW->(C, L) gather happens via
    # per-batch DMAs inside the kernel.
    x_hbm = x.reshape(N, C, HW).astype(jnp.float32)

    col = lambda v: v.reshape(-1, 1).astype(jnp.float32)
    f32 = lambda w: w.astype(jnp.float32)

    # split BN3 / Mlp-conv1 params per concat half (stats are per-channel => exact)
    g3a, g3b = g3[:C], g3[C:]
    b3a, b3b = b3[:C], b3[C:]
    w_m1a, w_m1b = w_m1[:, :C], w_m1[:, C:]

    args = (x_hbm,
            f32(w_hfe), col(b_hfe),
            col(g1), col(b1), col(g2), col(b2),
            col(g3a), col(b3a), col(g3b), col(b3b),
            f32(w_m1a), f32(w_m1b), col(b_m1),
            f32(w_m2), col(b_m2))

    vmem = pl.BlockSpec(memory_space=pltpu.MemorySpace.VMEM)
    anym = pl.BlockSpec(memory_space=pl.ANY)

    out = pl.pallas_call(
        functools.partial(emfgcb_kernel, n_batch=N, hw=HW, inv_count=1.0 / float(L)),
        out_shape=jax.ShapeDtypeStruct((N, C2, HW), jnp.float32),
        in_specs=[anym] + [vmem] * (len(args) - 1),
        out_specs=anym,
        scratch_shapes=[pltpu.VMEM((C, L), jnp.float32),       # gathered input
                        pltpu.VMEM((C2, L), jnp.float32),      # sublane-dense output
                        pltpu.SemaphoreType.DMA((N,)),
                        pltpu.SemaphoreType.DMA((N,))],
        # Well under every generation's scoped-VMEM default at these sizes; set
        # explicitly so v5e (16 MiB default) and v7x (64 MiB physical) both fit.
        compiler_params=pltpu.CompilerParams(vmem_limit_bytes=32 * 1024 * 1024),
    )(*args)

    # free reshape back to NCHW
    return out.reshape(N, C2, H, W)


# ------------------------- plain-JAX reference (sanity check) -------------------------

def emfgcb_reference(x, params):
    (g1, b1, w_hfe, b_hfe, g2, b2, g3, b3, w_m1, b_m1, w_m2, b_m2) = params

    def bn(a, gamma, beta):
        mean = a.mean(axis=(0, 2, 3), keepdims=True)
        var = ((a - mean) ** 2).mean(axis=(0, 2, 3), keepdims=True)
        return ((a - mean) / jnp.sqrt(var + NORM_EPS)
                * gamma[None, :, None, None] + beta[None, :, None, None])

    def conv1x1(a, w, b):
        return jnp.einsum('oc,nchw->nohw', w, a) + b[None, :, None, None]

    x1 = x + bn(x, g1, b1)
    x2 = x1 + bn(conv1x1(x1, w_hfe, b_hfe), g2, b2)
    xc = jnp.concatenate([x1, x2], axis=1)
    y = bn(xc, g3, b3)
    h = jnp.maximum(conv1x1(y, w_m1, b_m1), 0.0)
    return xc + conv1x1(h, w_m2, b_m2)


def init_params(key, c_in, hidden):
    c_cat = 2 * c_in
    ks = jax.random.split(key, 12)
    nrm = lambda k, *s: jax.random.normal(k, s, jnp.float32)
    g1 = 1.0 + 0.1 * nrm(ks[0], c_in);        b1 = 0.1 * nrm(ks[1], c_in)
    w_hfe = 0.3 * nrm(ks[2], c_in, c_in);     b_hfe = 0.1 * nrm(ks[3], c_in)
    g2 = 1.0 + 0.1 * nrm(ks[4], c_in);        b2 = 0.1 * nrm(ks[5], c_in)
    g3 = 1.0 + 0.1 * nrm(ks[6], c_cat);       b3 = 0.1 * nrm(ks[7], c_cat)
    w_m1 = 0.3 * nrm(ks[8], hidden, c_cat);   b_m1 = 0.1 * nrm(ks[9], hidden)
    w_m2 = 0.3 * nrm(ks[10], c_cat, hidden);  b_m2 = 0.1 * nrm(ks[11], c_cat)
    return (g1, b1, w_hfe, b_hfe, g2, b2, g3, b3, w_m1, b_m1, w_m2, b_m2)


if __name__ == "__main__":
    key = jax.random.PRNGKey(0)
    kx, kp = jax.random.split(key)

    # Shapes implied by the module: the forward concatenates [x, out] along the
    # channel axis, so out_channels == 2 * in_channels; Mlp hidden dim is
    # _make_divisible(out_channels * mlp_ratio=2, 32) = 32.
    N, C_IN, H, W = 2, 4, 16, 16
    C_OUT = 2 * C_IN
    HIDDEN = 32

    x = jax.random.normal(kx, (N, C_IN, H, W), jnp.float32)
    params = init_params(kp, C_IN, HIDDEN)

    out = jax.block_until_ready(emfgcb_pallas(x, params))
    assert out.shape == (N, C_OUT, H, W)
    assert bool(jnp.isfinite(out).all())

    ref = emfgcb_reference(x, params)
    err = float(jnp.max(jnp.abs(out - ref)))
    if err < 1e-2:
        print("KERNEL_OK")
    else:
        print(f"MISMATCH: max abs err = {err}")
</pallas_src>

<mosaic_0001>
module attributes {stable_mosaic.version = 11 : i64} {
  func.func @emfgcb_kernel(%arg0: memref<2x4x256xf32, #tpu.memory_space<any>>, %arg1: memref<4x4xf32, #tpu.memory_space<vmem>>, %arg2: memref<4x1xf32, #tpu.memory_space<vmem>>, %arg3: memref<4x1xf32, #tpu.memory_space<vmem>>, %arg4: memref<4x1xf32, #tpu.memory_space<vmem>>, %arg5: memref<4x1xf32, #tpu.memory_space<vmem>>, %arg6: memref<4x1xf32, #tpu.memory_space<vmem>>, %arg7: memref<4x1xf32, #tpu.memory_space<vmem>>, %arg8: memref<4x1xf32, #tpu.memory_space<vmem>>, %arg9: memref<4x1xf32, #tpu.memory_space<vmem>>, %arg10: memref<4x1xf32, #tpu.memory_space<vmem>>, %arg11: memref<32x4xf32, #tpu.memory_space<vmem>>, %arg12: memref<32x4xf32, #tpu.memory_space<vmem>>, %arg13: memref<32x1xf32, #tpu.memory_space<vmem>>, %arg14: memref<8x32xf32, #tpu.memory_space<vmem>>, %arg15: memref<8x1xf32, #tpu.memory_space<vmem>>, %arg16: memref<2x8x256xf32, #tpu.memory_space<any>>, %arg17: memref<4x512xf32, #tpu.memory_space<vmem>>, %arg18: memref<8x512xf32, #tpu.memory_space<vmem>>, %arg19: memref<2x!tpu.dma_semaphore, #tpu.memory_space<semaphore_mem>>, %arg20: memref<2x!tpu.dma_semaphore, #tpu.memory_space<semaphore_mem>>) attributes {dimension_semantics = [], scalar_prefetch = 0 : i64, scratch_operands = 4 : i64, tpu.core_type = #tpu.core_type<tc>} {
    %c0_i32 = arith.constant 0 : i32
    %c0_i32_0 = arith.constant 0 : i32
    %c0_i32_1 = arith.constant 0 : i32
    %c0_i32_2 = arith.constant 0 : i32
    %0 = tpu.memref_slice %arg0[%c0_i32, %c0_i32_1, %c0_i32_2] : memref<2x4x256xf32, #tpu.memory_space<any>> -> memref<1x4x256xf32, #tpu.memory_space<any>>
    %1 = tpu.memref_squeeze %0 : memref<1x4x256xf32, #tpu.memory_space<any>> -> memref<4x256xf32, #tpu.memory_space<any>>
    %c0_i32_3 = arith.constant 0 : i32
    %c0_i32_4 = arith.constant 0 : i32
    %2 = tpu.memref_slice %arg17[%c0_i32_3, %c0_i32_4] : memref<4x512xf32, #tpu.memory_space<vmem>> -> memref<4x256xf32, #tpu.memory_space<vmem>>
    %3 = tpu.memref_slice %arg19[%c0_i32_0] : memref<2x!tpu.dma_semaphore, #tpu.memory_space<semaphore_mem>> -> memref<1x!tpu.dma_semaphore, #tpu.memory_space<semaphore_mem>>
    %4 = tpu.memref_squeeze %3 : memref<1x!tpu.dma_semaphore, #tpu.memory_space<semaphore_mem>> -> memref<!tpu.dma_semaphore, #tpu.memory_space<semaphore_mem>>
    tpu.enqueue_dma source(%1 : memref<4x256xf32, #tpu.memory_space<any>>) target(%2 : memref<4x256xf32, #tpu.memory_space<vmem>>) target_semaphore(%4 : memref<!tpu.dma_semaphore, #tpu.memory_space<semaphore_mem>>)
    %c1_i32 = arith.constant 1 : i32
    %c1_i32_5 = arith.constant 1 : i32
    %c0_i32_6 = arith.constant 0 : i32
    %c0_i32_7 = arith.constant 0 : i32
    %5 = tpu.memref_slice %arg0[%c1_i32, %c0_i32_6, %c0_i32_7] : memref<2x4x256xf32, #tpu.memory_space<any>> -> memref<1x4x256xf32, #tpu.memory_space<any>>
    %6 = tpu.memref_squeeze %5 : memref<1x4x256xf32, #tpu.memory_space<any>> -> memref<4x256xf32, #tpu.memory_space<any>>
    %c0_i32_8 = arith.constant 0 : i32
    %c256_i32 = arith.constant 256 : i32
    %7 = tpu.memref_slice %arg17[%c0_i32_8, %c256_i32] : memref<4x512xf32, #tpu.memory_space<vmem>> -> memref<4x256xf32, #tpu.memory_space<vmem>>
    %8 = tpu.memref_slice %arg19[%c1_i32_5] : memref<2x!tpu.dma_semaphore, #tpu.memory_space<semaphore_mem>> -> memref<1x!tpu.dma_semaphore, #tpu.memory_space<semaphore_mem>>
    %9 = tpu.memref_squeeze %8 : memref<1x!tpu.dma_semaphore, #tpu.memory_space<semaphore_mem>> -> memref<!tpu.dma_semaphore, #tpu.memory_space<semaphore_mem>>
    tpu.enqueue_dma source(%6 : memref<4x256xf32, #tpu.memory_space<any>>) target(%7 : memref<4x256xf32, #tpu.memory_space<vmem>>) target_semaphore(%9 : memref<!tpu.dma_semaphore, #tpu.memory_space<semaphore_mem>>)
    %c0_i32_9 = arith.constant 0 : i32
    %c0_i32_10 = arith.constant 0 : i32
    %c0_i32_11 = arith.constant 0 : i32
    %c0_i32_12 = arith.constant 0 : i32
    %10 = tpu.memref_slice %arg0[%c0_i32_9, %c0_i32_11, %c0_i32_12] : memref<2x4x256xf32, #tpu.memory_space<any>> -> memref<1x4x256xf32, #tpu.memory_space<any>>
    %11 = tpu.memref_squeeze %10 : memref<1x4x256xf32, #tpu.memory_space<any>> -> memref<4x256xf32, #tpu.memory_space<any>>
    %c0_i32_13 = arith.constant 0 : i32
    %c0_i32_14 = arith.constant 0 : i32
    %12 = tpu.memref_slice %arg17[%c0_i32_13, %c0_i32_14] : memref<4x512xf32, #tpu.memory_space<vmem>> -> memref<4x256xf32, #tpu.memory_space<vmem>>
    %13 = tpu.memref_slice %arg19[%c0_i32_10] : memref<2x!tpu.dma_semaphore, #tpu.memory_space<semaphore_mem>> -> memref<1x!tpu.dma_semaphore, #tpu.memory_space<semaphore_mem>>
    %14 = tpu.memref_squeeze %13 : memref<1x!tpu.dma_semaphore, #tpu.memory_space<semaphore_mem>> -> memref<!tpu.dma_semaphore, #tpu.memory_space<semaphore_mem>>
    tpu.wait_dma2 semaphore(%14 : memref<!tpu.dma_semaphore, #tpu.memory_space<semaphore_mem>>) src(%11 : memref<4x256xf32, #tpu.memory_space<any>>) dst(%12 : memref<4x256xf32, #tpu.memory_space<vmem>>)
    %c1_i32_15 = arith.constant 1 : i32
    %c1_i32_16 = arith.constant 1 : i32
    %c0_i32_17 = arith.constant 0 : i32
    %c0_i32_18 = arith.constant 0 : i32
    %15 = tpu.memref_slice %arg0[%c1_i32_15, %c0_i32_17, %c0_i32_18] : memref<2x4x256xf32, #tpu.memory_space<any>> -> memref<1x4x256xf32, #tpu.memory_space<any>>
    %16 = tpu.memref_squeeze %15 : memref<1x4x256xf32, #tpu.memory_space<any>> -> memref<4x256xf32, #tpu.memory_space<any>>
    %c0_i32_19 = arith.constant 0 : i32
    %c256_i32_20 = arith.constant 256 : i32
    %17 = tpu.memref_slice %arg17[%c0_i32_19, %c256_i32_20] : memref<4x512xf32, #tpu.memory_space<vmem>> -> memref<4x256xf32, #tpu.memory_space<vmem>>
    %18 = tpu.memref_slice %arg19[%c1_i32_16] : memref<2x!tpu.dma_semaphore, #tpu.memory_space<semaphore_mem>> -> memref<1x!tpu.dma_semaphore, #tpu.memory_space<semaphore_mem>>
    %19 = tpu.memref_squeeze %18 : memref<1x!tpu.dma_semaphore, #tpu.memory_space<semaphore_mem>> -> memref<!tpu.dma_semaphore, #tpu.memory_space<semaphore_mem>>
    tpu.wait_dma2 semaphore(%19 : memref<!tpu.dma_semaphore, #tpu.memory_space<semaphore_mem>>) src(%16 : memref<4x256xf32, #tpu.memory_space<any>>) dst(%17 : memref<4x256xf32, #tpu.memory_space<vmem>>)
    %c0 = arith.constant 0 : index
    %c0_21 = arith.constant 0 : index
    %20 = vector.load %arg17[%c0, %c0_21] : memref<4x512xf32, #tpu.memory_space<vmem>>, vector<4x512xf32>
    %cst = arith.constant dense<0.000000e+00> : vector<4xf32>
    %21 = vector.multi_reduction <add>, %20, %cst [1] : vector<4x512xf32> to vector<4xf32>
    %22 = vector.shape_cast %21 : vector<4xf32> to vector<4x1xf32>
    %cst_22 = arith.constant 0.001953125 : f32
    %23 = vector.broadcast %cst_22 : f32 to vector<4x1xf32>
    %24 = arith.mulf %22, %23 : vector<4x1xf32>
    %25 = vector.broadcast %24 : vector<4x1xf32> to vector<4x512xf32>
    %26 = arith.subf %20, %25 : vector<4x512xf32>
    %27 = arith.mulf %26, %26 : vector<4x512xf32>
    %cst_23 = arith.constant dense<0.000000e+00> : vector<4xf32>
    %28 = vector.multi_reduction <add>, %27, %cst_23 [1] : vector<4x512xf32> to vector<4xf32>
    %29 = vector.shape_cast %28 : vector<4xf32> to vector<4x1xf32>
    %cst_24 = arith.constant 0.001953125 : f32
    %30 = vector.broadcast %cst_24 : f32 to vector<4x1xf32>
    %31 = arith.mulf %29, %30 : vector<4x1xf32>
    %c0_25 = arith.constant 0 : index
    %c0_26 = arith.constant 0 : index
    %32 = vector.load %arg3[%c0_25, %c0_26] : memref<4x1xf32, #tpu.memory_space<vmem>>, vector<4x1xf32>
    %cst_27 = arith.constant 9.99999974E-6 : f32
    %33 = vector.broadcast %cst_27 : f32 to vector<4x1xf32>
    %34 = arith.addf %31, %33 : vector<4x1xf32>
    %35 = math.rsqrt %34 : vector<4x1xf32>
    %36 = arith.mulf %32, %35 : vector<4x1xf32>
    %c0_28 = arith.constant 0 : index
    %c0_29 = arith.constant 0 : index
    %37 = vector.load %arg4[%c0_28, %c0_29] : memref<4x1xf32, #tpu.memory_space<vmem>>, vector<4x1xf32>
    %38 = arith.mulf %24, %36 : vector<4x1xf32>
    %39 = arith.subf %37, %38 : vector<4x1xf32>
    %cst_30 = arith.constant 1.000000e+00 : f32
    %40 = vector.broadcast %cst_30 : f32 to vector<4x1xf32>
    %41 = arith.addf %40, %36 : vector<4x1xf32>
    %42 = vector.broadcast %41 : vector<4x1xf32> to vector<4x512xf32>
    %43 = arith.mulf %20, %42 : vector<4x512xf32>
    %44 = vector.broadcast %39 : vector<4x1xf32> to vector<4x512xf32>
    %45 = arith.addf %43, %44 : vector<4x512xf32>
    %c0_31 = arith.constant 0 : index
    %c0_32 = arith.constant 0 : index
    %46 = vector.load %arg1[%c0_31, %c0_32] : memref<4x4xf32, #tpu.memory_space<vmem>>, vector<4x4xf32>
    %47 = vector.extract_strided_slice %46 {offsets = [0, 0], sizes = [4, 1], strides = [1, 1]} : vector<4x4xf32> to vector<4x1xf32>
    %48 = vector.extract_strided_slice %45 {offsets = [0, 0], sizes = [1, 512], strides = [1, 1]} : vector<4x512xf32> to vector<1x512xf32>
    %49 = vector.broadcast %47 : vector<4x1xf32> to vector<4x512xf32>
    %50 = vector.broadcast %48 : vector<1x512xf32> to vector<4x512xf32>
    %51 = arith.mulf %49, %50 : vector<4x512xf32>
    %52 = vector.extract_strided_slice %46 {offsets = [0, 1], sizes = [4, 1], strides = [1, 1]} : vector<4x4xf32> to vector<4x1xf32>
    %53 = vector.extract_strided_slice %45 {offsets = [1, 0], sizes = [1, 512], strides = [1, 1]} : vector<4x512xf32> to vector<1x512xf32>
    %54 = vector.broadcast %52 : vector<4x1xf32> to vector<4x512xf32>
    %55 = vector.broadcast %53 : vector<1x512xf32> to vector<4x512xf32>
    %56 = arith.mulf %54, %55 : vector<4x512xf32>
    %57 = arith.addf %51, %56 : vector<4x512xf32>
    %58 = vector.extract_strided_slice %46 {offsets = [0, 2], sizes = [4, 1], strides = [1, 1]} : vector<4x4xf32> to vector<4x1xf32>
    %59 = vector.extract_strided_slice %45 {offsets = [2, 0], sizes = [1, 512], strides = [1, 1]} : vector<4x512xf32> to vector<1x512xf32>
    %60 = vector.broadcast %58 : vector<4x1xf32> to vector<4x512xf32>
    %61 = vector.broadcast %59 : vector<1x512xf32> to vector<4x512xf32>
    %62 = arith.mulf %60, %61 : vector<4x512xf32>
    %63 = arith.addf %57, %62 : vector<4x512xf32>
    %64 = vector.extract_strided_slice %46 {offsets = [0, 3], sizes = [4, 1], strides = [1, 1]} : vector<4x4xf32> to vector<4x1xf32>
    %65 = vector.extract_strided_slice %45 {offsets = [3, 0], sizes = [1, 512], strides = [1, 1]} : vector<4x512xf32> to vector<1x512xf32>
    %66 = vector.broadcast %64 : vector<4x1xf32> to vector<4x512xf32>
    %67 = vector.broadcast %65 : vector<1x512xf32> to vector<4x512xf32>
    %68 = arith.mulf %66, %67 : vector<4x512xf32>
    %69 = arith.addf %63, %68 : vector<4x512xf32>
    %c0_33 = arith.constant 0 : index
    %c0_34 = arith.constant 0 : index
    %70 = vector.load %arg2[%c0_33, %c0_34] : memref<4x1xf32, #tpu.memory_space<vmem>>, vector<4x1xf32>
    %71 = vector.broadcast %70 : vector<4x1xf32> to vector<4x512xf32>
    %72 = arith.addf %69, %71 : vector<4x512xf32>
    %cst_35 = arith.constant dense<0.000000e+00> : vector<4xf32>
    %73 = vector.multi_reduction <add>, %72, %cst_35 [1] : vector<4x512xf32> to vector<4xf32>
    %74 = vector.shape_cast %73 : vector<4xf32> to vector<4x1xf32>
    %cst_36 = arith.constant 0.001953125 : f32
    %75 = vector.broadcast %cst_36 : f32 to vector<4x1xf32>
    %76 = arith.mulf %74, %75 : vector<4x1xf32>
    %77 = vector.broadcast %76 : vector<4x1xf32> to vector<4x512xf32>
    %78 = arith.subf %72, %77 : vector<4x512xf32>
    %79 = arith.mulf %78, %78 : vector<4x512xf32>
    %cst_37 = arith.constant dense<0.000000e+00> : vector<4xf32>
    %80 = vector.multi_reduction <add>, %79, %cst_37 [1] : vector<4x512xf32> to vector<4xf32>
    %81 = vector.shape_cast %80 : vector<4xf32> to vector<4x1xf32>
    %cst_38 = arith.constant 0.001953125 : f32
    %82 = vector.broadcast %cst_38 : f32 to vector<4x1xf32>
    %83 = arith.mulf %81, %82 : vector<4x1xf32>
    %c0_39 = arith.constant 0 : index
    %c0_40 = arith.constant 0 : index
    %84 = vector.load %arg5[%c0_39, %c0_40] : memref<4x1xf32, #tpu.memory_space<vmem>>, vector<4x1xf32>
    %cst_41 = arith.constant 9.99999974E-6 : f32
    %85 = vector.broadcast %cst_41 : f32 to vector<4x1xf32>
    %86 = arith.addf %83, %85 : vector<4x1xf32>
    %87 = math.rsqrt %86 : vector<4x1xf32>
    %88 = arith.mulf %84, %87 : vector<4x1xf32>
    %c0_42 = arith.constant 0 : index
    %c0_43 = arith.constant 0 : index
    %89 = vector.load %arg6[%c0_42, %c0_43] : memref<4x1xf32, #tpu.memory_space<vmem>>, vector<4x1xf32>
    %90 = arith.mulf %76, %88 : vector<4x1xf32>
    %91 = arith.subf %89, %90 : vector<4x1xf32>
    %92 = vector.broadcast %88 : vector<4x1xf32> to vector<4x512xf32>
    %93 = arith.mulf %72, %92 : vector<4x512xf32>
    %94 = arith.addf %45, %93 : vector<4x512xf32>
    %95 = vector.broadcast %91 : vector<4x1xf32> to vector<4x512xf32>
    %96 = arith.addf %94, %95 : vector<4x512xf32>
    %cst_44 = arith.constant dense<0.000000e+00> : vector<4xf32>
    %97 = vector.multi_reduction <add>, %45, %cst_44 [1] : vector<4x512xf32> to vector<4xf32>
    %98 = vector.shape_cast %97 : vector<4xf32> to vector<4x1xf32>
    %cst_45 = arith.constant 0.001953125 : f32
    %99 = vector.broadcast %cst_45 : f32 to vector<4x1xf32>
    %100 = arith.mulf %98, %99 : vector<4x1xf32>
    %101 = vector.broadcast %100 : vector<4x1xf32> to vector<4x512xf32>
    %102 = arith.subf %45, %101 : vector<4x512xf32>
    %103 = arith.mulf %102, %102 : vector<4x512xf32>
    %cst_46 = arith.constant dense<0.000000e+00> : vector<4xf32>
    %104 = vector.multi_reduction <add>, %103, %cst_46 [1] : vector<4x512xf32> to vector<4xf32>
    %105 = vector.shape_cast %104 : vector<4xf32> to vector<4x1xf32>
    %cst_47 = arith.constant 0.001953125 : f32
    %106 = vector.broadcast %cst_47 : f32 to vector<4x1xf32>
    %107 = arith.mulf %105, %106 : vector<4x1xf32>
    %c0_48 = arith.constant 0 : index
    %c0_49 = arith.constant 0 : index
    %108 = vector.load %arg7[%c0_48, %c0_49] : memref<4x1xf32, #tpu.memory_space<vmem>>, vector<4x1xf32>
    %cst_50 = arith.constant 9.99999974E-6 : f32
    %109 = vector.broadcast %cst_50 : f32 to vector<4x1xf32>
    %110 = arith.addf %107, %109 : vector<4x1xf32>
    %111 = math.rsqrt %110 : vector<4x1xf32>
    %112 = arith.mulf %108, %111 : vector<4x1xf32>
    %c0_51 = arith.constant 0 : index
    %c0_52 = arith.constant 0 : index
    %113 = vector.load %arg8[%c0_51, %c0_52] : memref<4x1xf32, #tpu.memory_space<vmem>>, vector<4x1xf32>
    %114 = arith.mulf %100, %112 : vector<4x1xf32>
    %115 = arith.subf %113, %114 : vector<4x1xf32>
    %cst_53 = arith.constant dense<0.000000e+00> : vector<4xf32>
    %116 = vector.multi_reduction <add>, %96, %cst_53 [1] : vector<4x512xf32> to vector<4xf32>
    %117 = vector.shape_cast %116 : vector<4xf32> to vector<4x1xf32>
    %cst_54 = arith.constant 0.001953125 : f32
    %118 = vector.broadcast %cst_54 : f32 to vector<4x1xf32>
    %119 = arith.mulf %117, %118 : vector<4x1xf32>
    %120 = vector.broadcast %119 : vector<4x1xf32> to vector<4x512xf32>
    %121 = arith.subf %96, %120 : vector<4x512xf32>
    %122 = arith.mulf %121, %121 : vector<4x512xf32>
    %cst_55 = arith.constant dense<0.000000e+00> : vector<4xf32>
    %123 = vector.multi_reduction <add>, %122, %cst_55 [1] : vector<4x512xf32> to vector<4xf32>
    %124 = vector.shape_cast %123 : vector<4xf32> to vector<4x1xf32>
    %cst_56 = arith.constant 0.001953125 : f32
    %125 = vector.broadcast %cst_56 : f32 to vector<4x1xf32>
    %126 = arith.mulf %124, %125 : vector<4x1xf32>
    %c0_57 = arith.constant 0 : index
    %c0_58 = arith.constant 0 : index
    %127 = vector.load %arg9[%c0_57, %c0_58] : memref<4x1xf32, #tpu.memory_space<vmem>>, vector<4x1xf32>
    %cst_59 = arith.constant 9.99999974E-6 : f32
    %128 = vector.broadcast %cst_59 : f32 to vector<4x1xf32>
    %129 = arith.addf %126, %128 : vector<4x1xf32>
    %130 = math.rsqrt %129 : vector<4x1xf32>
    %131 = arith.mulf %127, %130 : vector<4x1xf32>
    %c0_60 = arith.constant 0 : index
    %c0_61 = arith.constant 0 : index
    %132 = vector.load %arg10[%c0_60, %c0_61] : memref<4x1xf32, #tpu.memory_space<vmem>>, vector<4x1xf32>
    %133 = arith.mulf %119, %131 : vector<4x1xf32>
    %134 = arith.subf %132, %133 : vector<4x1xf32>
    %c0_62 = arith.constant 0 : index
    %c0_63 = arith.constant 0 : index
    %135 = vector.load %arg11[%c0_62, %c0_63] : memref<32x4xf32, #tpu.memory_space<vmem>>, vector<32x4xf32>
    %c0_64 = arith.constant 0 : index
    %c0_65 = arith.constant 0 : index
    %136 = vector.load %arg12[%c0_64, %c0_65] : memref<32x4xf32, #tpu.memory_space<vmem>>, vector<32x4xf32>
    %137 = vector.extract_strided_slice %135 {offsets = [0, 0], sizes = [32, 1], strides = [1, 1]} : vector<32x4xf32> to vector<32x1xf32>
    %138 = vector.extract_strided_slice %112 {offsets = [0, 0], sizes = [1, 1], strides = [1, 1]} : vector<4x1xf32> to vector<1x1xf32>
    %139 = vector.broadcast %138 : vector<1x1xf32> to vector<32x1xf32>
    %140 = arith.mulf %137, %139 : vector<32x1xf32>
    %141 = vector.extract_strided_slice %45 {offsets = [0, 0], sizes = [1, 512], strides = [1, 1]} : vector<4x512xf32> to vector<1x512xf32>
    %142 = vector.broadcast %140 : vector<32x1xf32> to vector<32x512xf32>
    %143 = vector.broadcast %141 : vector<1x512xf32> to vector<32x512xf32>
    %144 = arith.mulf %142, %143 : vector<32x512xf32>
    %145 = vector.extract_strided_slice %135 {offsets = [0, 1], sizes = [32, 1], strides = [1, 1]} : vector<32x4xf32> to vector<32x1xf32>
    %146 = vector.extract_strided_slice %112 {offsets = [1, 0], sizes = [1, 1], strides = [1, 1]} : vector<4x1xf32> to vector<1x1xf32>
    %147 = vector.broadcast %146 : vector<1x1xf32> to vector<32x1xf32>
    %148 = arith.mulf %145, %147 : vector<32x1xf32>
    %149 = vector.extract_strided_slice %45 {offsets = [1, 0], sizes = [1, 512], strides = [1, 1]} : vector<4x512xf32> to vector<1x512xf32>
    %150 = vector.broadcast %148 : vector<32x1xf32> to vector<32x512xf32>
    %151 = vector.broadcast %149 : vector<1x512xf32> to vector<32x512xf32>
    %152 = arith.mulf %150, %151 : vector<32x512xf32>
    %153 = arith.addf %144, %152 : vector<32x512xf32>
    %154 = vector.extract_strided_slice %135 {offsets = [0, 2], sizes = [32, 1], strides = [1, 1]} : vector<32x4xf32> to vector<32x1xf32>
    %155 = vector.extract_strided_slice %112 {offsets = [2, 0], sizes = [1, 1], strides = [1, 1]} : vector<4x1xf32> to vector<1x1xf32>
    %156 = vector.broadcast %155 : vector<1x1xf32> to vector<32x1xf32>
    %157 = arith.mulf %154, %156 : vector<32x1xf32>
    %158 = vector.extract_strided_slice %45 {offsets = [2, 0], sizes = [1, 512], strides = [1, 1]} : vector<4x512xf32> to vector<1x512xf32>
    %159 = vector.broadcast %157 : vector<32x1xf32> to vector<32x512xf32>
    %160 = vector.broadcast %158 : vector<1x512xf32> to vector<32x512xf32>
    %161 = arith.mulf %159, %160 : vector<32x512xf32>
    %162 = arith.addf %153, %161 : vector<32x512xf32>
    %163 = vector.extract_strided_slice %135 {offsets = [0, 3], sizes = [32, 1], strides = [1, 1]} : vector<32x4xf32> to vector<32x1xf32>
    %164 = vector.extract_strided_slice %112 {offsets = [3, 0], sizes = [1, 1], strides = [1, 1]} : vector<4x1xf32> to vector<1x1xf32>
    %165 = vector.broadcast %164 : vector<1x1xf32> to vector<32x1xf32>
    %166 = arith.mulf %163, %165 : vector<32x1xf32>
    %167 = vector.extract_strided_slice %45 {offsets = [3, 0], sizes = [1, 512], strides = [1, 1]} : vector<4x512xf32> to vector<1x512xf32>
    %168 = vector.broadcast %166 : vector<32x1xf32> to vector<32x512xf32>
    %169 = vector.broadcast %167 : vector<1x512xf32> to vector<32x512xf32>
    %170 = arith.mulf %168, %169 : vector<32x512xf32>
    %171 = arith.addf %162, %170 : vector<32x512xf32>
    %172 = vector.extract_strided_slice %136 {offsets = [0, 0], sizes = [32, 1], strides = [1, 1]} : vector<32x4xf32> to vector<32x1xf32>
    %173 = vector.extract_strided_slice %131 {offsets = [0, 0], sizes = [1, 1], strides = [1, 1]} : vector<4x1xf32> to vector<1x1xf32>
    %174 = vector.broadcast %173 : vector<1x1xf32> to vector<32x1xf32>
    %175 = arith.mulf %172, %174 : vector<32x1xf32>
    %176 = vector.extract_strided_slice %96 {offsets = [0, 0], sizes = [1, 512], strides = [1, 1]} : vector<4x512xf32> to vector<1x512xf32>
    %177 = vector.broadcast %175 : vector<32x1xf32> to vector<32x512xf32>
    %178 = vector.broadcast %176 : vector<1x512xf32> to vector<32x512xf32>
    %179 = arith.mulf %177, %178 : vector<32x512xf32>
    %180 = vector.extract_strided_slice %136 {offsets = [0, 1], sizes = [32, 1], strides = [1, 1]} : vector<32x4xf32> to vector<32x1xf32>
    %181 = vector.extract_strided_slice %131 {offsets = [1, 0], sizes = [1, 1], strides = [1, 1]} : vector<4x1xf32> to vector<1x1xf32>
    %182 = vector.broadcast %181 : vector<1x1xf32> to vector<32x1xf32>
    %183 = arith.mulf %180, %182 : vector<32x1xf32>
    %184 = vector.extract_strided_slice %96 {offsets = [1, 0], sizes = [1, 512], strides = [1, 1]} : vector<4x512xf32> to vector<1x512xf32>
    %185 = vector.broadcast %183 : vector<32x1xf32> to vector<32x512xf32>
    %186 = vector.broadcast %184 : vector<1x512xf32> to vector<32x512xf32>
    %187 = arith.mulf %185, %186 : vector<32x512xf32>
    %188 = arith.addf %179, %187 : vector<32x512xf32>
    %189 = vector.extract_strided_slice %136 {offsets = [0, 2], sizes = [32, 1], strides = [1, 1]} : vector<32x4xf32> to vector<32x1xf32>
    %190 = vector.extract_strided_slice %131 {offsets = [2, 0], sizes = [1, 1], strides = [1, 1]} : vector<4x1xf32> to vector<1x1xf32>
    %191 = vector.broadcast %190 : vector<1x1xf32> to vector<32x1xf32>
    %192 = arith.mulf %189, %191 : vector<32x1xf32>
    %193 = vector.extract_strided_slice %96 {offsets = [2, 0], sizes = [1, 512], strides = [1, 1]} : vector<4x512xf32> to vector<1x512xf32>
    %194 = vector.broadcast %192 : vector<32x1xf32> to vector<32x512xf32>
    %195 = vector.broadcast %193 : vector<1x512xf32> to vector<32x512xf32>
    %196 = arith.mulf %194, %195 : vector<32x512xf32>
    %197 = arith.addf %188, %196 : vector<32x512xf32>
    %198 = vector.extract_strided_slice %136 {offsets = [0, 3], sizes = [32, 1], strides = [1, 1]} : vector<32x4xf32> to vector<32x1xf32>
    %199 = vector.extract_strided_slice %131 {offsets = [3, 0], sizes = [1, 1], strides = [1, 1]} : vector<4x1xf32> to vector<1x1xf32>
    %200 = vector.broadcast %199 : vector<1x1xf32> to vector<32x1xf32>
    %201 = arith.mulf %198, %200 : vector<32x1xf32>
    %202 = vector.extract_strided_slice %96 {offsets = [3, 0], sizes = [1, 512], strides = [1, 1]} : vector<4x512xf32> to vector<1x512xf32>
    %203 = vector.broadcast %201 : vector<32x1xf32> to vector<32x512xf32>
    %204 = vector.broadcast %202 : vector<1x512xf32> to vector<32x512xf32>
    %205 = arith.mulf %203, %204 : vector<32x512xf32>
    %206 = arith.addf %197, %205 : vector<32x512xf32>
    %207 = arith.addf %171, %206 : vector<32x512xf32>
    %208 = vector.extract_strided_slice %135 {offsets = [0, 0], sizes = [32, 1], strides = [1, 1]} : vector<32x4xf32> to vector<32x1xf32>
    %209 = vector.extract_strided_slice %115 {offsets = [0, 0], sizes = [1, 1], strides = [1, 1]} : vector<4x1xf32> to vector<1x1xf32>
    %210 = vector.broadcast %209 : vector<1x1xf32> to vector<32x1xf32>
    %211 = arith.mulf %208, %210 : vector<32x1xf32>
    %212 = vector.extract_strided_slice %135 {offsets = [0, 1], sizes = [32, 1], strides = [1, 1]} : vector<32x4xf32> to vector<32x1xf32>
    %213 = vector.extract_strided_slice %115 {offsets = [1, 0], sizes = [1, 1], strides = [1, 1]} : vector<4x1xf32> to vector<1x1xf32>
    %214 = vector.broadcast %213 : vector<1x1xf32> to vector<32x1xf32>
    %215 = arith.mulf %212, %214 : vector<32x1xf32>
    %216 = arith.addf %211, %215 : vector<32x1xf32>
    %217 = vector.extract_strided_slice %135 {offsets = [0, 2], sizes = [32, 1], strides = [1, 1]} : vector<32x4xf32> to vector<32x1xf32>
    %218 = vector.extract_strided_slice %115 {offsets = [2, 0], sizes = [1, 1], strides = [1, 1]} : vector<4x1xf32> to vector<1x1xf32>
    %219 = vector.broadcast %218 : vector<1x1xf32> to vector<32x1xf32>
    %220 = arith.mulf %217, %219 : vector<32x1xf32>
    %221 = arith.addf %216, %220 : vector<32x1xf32>
    %222 = vector.extract_strided_slice %135 {offsets = [0, 3], sizes = [32, 1], strides = [1, 1]} : vector<32x4xf32> to vector<32x1xf32>
    %223 = vector.extract_strided_slice %115 {offsets = [3, 0], sizes = [1, 1], strides = [1, 1]} : vector<4x1xf32> to vector<1x1xf32>
    %224 = vector.broadcast %223 : vector<1x1xf32> to vector<32x1xf32>
    %225 = arith.mulf %222, %224 : vector<32x1xf32>
    %226 = arith.addf %221, %225 : vector<32x1xf32>
    %227 = vector.broadcast %226 : vector<32x1xf32> to vector<32x512xf32>
    %228 = arith.addf %207, %227 : vector<32x512xf32>
    %229 = vector.extract_strided_slice %136 {offsets = [0, 0], sizes = [32, 1], strides = [1, 1]} : vector<32x4xf32> to vector<32x1xf32>
    %230 = vector.extract_strided_slice %134 {offsets = [0, 0], sizes = [1, 1], strides = [1, 1]} : vector<4x1xf32> to vector<1x1xf32>
    %231 = vector.broadcast %230 : vector<1x1xf32> to vector<32x1xf32>
    %232 = arith.mulf %229, %231 : vector<32x1xf32>
    %233 = vector.extract_strided_slice %136 {offsets = [0, 1], sizes = [32, 1], strides = [1, 1]} : vector<32x4xf32> to vector<32x1xf32>
    %234 = vector.extract_strided_slice %134 {offsets = [1, 0], sizes = [1, 1], strides = [1, 1]} : vector<4x1xf32> to vector<1x1xf32>
    %235 = vector.broadcast %234 : vector<1x1xf32> to vector<32x1xf32>
    %236 = arith.mulf %233, %235 : vector<32x1xf32>
    %237 = arith.addf %232, %236 : vector<32x1xf32>
    %238 = vector.extract_strided_slice %136 {offsets = [0, 2], sizes = [32, 1], strides = [1, 1]} : vector<32x4xf32> to vector<32x1xf32>
    %239 = vector.extract_strided_slice %134 {offsets = [2, 0], sizes = [1, 1], strides = [1, 1]} : vector<4x1xf32> to vector<1x1xf32>
    %240 = vector.broadcast %239 : vector<1x1xf32> to vector<32x1xf32>
    %241 = arith.mulf %238, %240 : vector<32x1xf32>
    %242 = arith.addf %237, %241 : vector<32x1xf32>
    %243 = vector.extract_strided_slice %136 {offsets = [0, 3], sizes = [32, 1], strides = [1, 1]} : vector<32x4xf32> to vector<32x1xf32>
    %244 = vector.extract_strided_slice %134 {offsets = [3, 0], sizes = [1, 1], strides = [1, 1]} : vector<4x1xf32> to vector<1x1xf32>
    %245 = vector.broadcast %244 : vector<1x1xf32> to vector<32x1xf32>
    %246 = arith.mulf %243, %245 : vector<32x1xf32>
    %247 = arith.addf %242, %246 : vector<32x1xf32>
    %248 = vector.broadcast %247 : vector<32x1xf32> to vector<32x512xf32>
    %249 = arith.addf %228, %248 : vector<32x512xf32>
    %c0_66 = arith.constant 0 : index
    %c0_67 = arith.constant 0 : index
    %250 = vector.load %arg13[%c0_66, %c0_67] : memref<32x1xf32, #tpu.memory_space<vmem>>, vector<32x1xf32>
    %251 = vector.broadcast %250 : vector<32x1xf32> to vector<32x512xf32>
    %252 = arith.addf %249, %251 : vector<32x512xf32>
    %cst_68 = arith.constant 0.000000e+00 : f32
    %253 = vector.broadcast %cst_68 : f32 to vector<32x512xf32>
    %254 = arith.maximumf %252, %253 : vector<32x512xf32>
    %255 = tpu.concatenate %45, %96 in 0 : vector<4x512xf32>, vector<4x512xf32> -> vector<8x512xf32>
    %c0_69 = arith.constant 0 : index
    %c0_70 = arith.constant 0 : index
    %256 = vector.load %arg14[%c0_69, %c0_70] : memref<8x32xf32, #tpu.memory_space<vmem>>, vector<8x32xf32>
    %257 = vector.extract_strided_slice %256 {offsets = [0, 0], sizes = [8, 1], strides = [1, 1]} : vector<8x32xf32> to vector<8x1xf32>
    %258 = vector.extract_strided_slice %254 {offsets = [0, 0], sizes = [1, 512], strides = [1, 1]} : vector<32x512xf32> to vector<1x512xf32>
    %259 = vector.broadcast %257 : vector<8x1xf32> to vector<8x512xf32>
    %260 = vector.broadcast %258 : vector<1x512xf32> to vector<8x512xf32>
    %261 = arith.mulf %259, %260 : vector<8x512xf32>
    %262 = vector.extract_strided_slice %256 {offsets = [0, 1], sizes = [8, 1], strides = [1, 1]} : vector<8x32xf32> to vector<8x1xf32>
    %263 = vector.extract_strided_slice %254 {offsets = [1, 0], sizes = [1, 512], strides = [1, 1]} : vector<32x512xf32> to vector<1x512xf32>
    %264 = vector.broadcast %262 : vector<8x1xf32> to vector<8x512xf32>
    %265 = vector.broadcast %263 : vector<1x512xf32> to vector<8x512xf32>
    %266 = arith.mulf %264, %265 : vector<8x512xf32>
    %267 = arith.addf %261, %266 : vector<8x512xf32>
    %268 = vector.extract_strided_slice %256 {offsets = [0, 2], sizes = [8, 1], strides = [1, 1]} : vector<8x32xf32> to vector<8x1xf32>
    %269 = vector.extract_strided_slice %254 {offsets = [2, 0], sizes = [1, 512], strides = [1, 1]} : vector<32x512xf32> to vector<1x512xf32>
    %270 = vector.broadcast %268 : vector<8x1xf32> to vector<8x512xf32>
    %271 = vector.broadcast %269 : vector<1x512xf32> to vector<8x512xf32>
    %272 = arith.mulf %270, %271 : vector<8x512xf32>
    %273 = arith.addf %267, %272 : vector<8x512xf32>
    %274 = vector.extract_strided_slice %256 {offsets = [0, 3], sizes = [8, 1], strides = [1, 1]} : vector<8x32xf32> to vector<8x1xf32>
    %275 = vector.extract_strided_slice %254 {offsets = [3, 0], sizes = [1, 512], strides = [1, 1]} : vector<32x512xf32> to vector<1x512xf32>
    %276 = vector.broadcast %274 : vector<8x1xf32> to vector<8x512xf32>
    %277 = vector.broadcast %275 : vector<1x512xf32> to vector<8x512xf32>
    %278 = arith.mulf %276, %277 : vector<8x512xf32>
    %279 = arith.addf %273, %278 : vector<8x512xf32>
    %280 = vector.extract_strided_slice %256 {offsets = [0, 4], sizes = [8, 1], strides = [1, 1]} : vector<8x32xf32> to vector<8x1xf32>
    %281 = vector.extract_strided_slice %254 {offsets = [4, 0], sizes = [1, 512], strides = [1, 1]} : vector<32x512xf32> to vector<1x512xf32>
    %282 = vector.broadcast %280 : vector<8x1xf32> to vector<8x512xf32>
    %283 = vector.broadcast %281 : vector<1x512xf32> to vector<8x512xf32>
    %284 = arith.mulf %282, %283 : vector<8x512xf32>
    %285 = arith.addf %279, %284 : vector<8x512xf32>
    %286 = vector.extract_strided_slice %256 {offsets = [0, 5], sizes = [8, 1], strides = [1, 1]} : vector<8x32xf32> to vector<8x1xf32>
    %287 = vector.extract_strided_slice %254 {offsets = [5, 0], sizes = [1, 512], strides = [1, 1]} : vector<32x512xf32> to vector<1x512xf32>
    %288 = vector.broadcast %286 : vector<8x1xf32> to vector<8x512xf32>
    %289 = vector.broadcast %287 : vector<1x512xf32> to vector<8x512xf32>
    %290 = arith.mulf %288, %289 : vector<8x512xf32>
    %291 = arith.addf %285, %290 : vector<8x512xf32>
    %292 = vector.extract_strided_slice %256 {offsets = [0, 6], sizes = [8, 1], strides = [1, 1]} : vector<8x32xf32> to vector<8x1xf32>
    %293 = vector.extract_strided_slice %254 {offsets = [6, 0], sizes = [1, 512], strides = [1, 1]} : vector<32x512xf32> to vector<1x512xf32>
    %294 = vector.broadcast %292 : vector<8x1xf32> to vector<8x512xf32>
    %295 = vector.broadcast %293 : vector<1x512xf32> to vector<8x512xf32>
    %296 = arith.mulf %294, %295 : vector<8x512xf32>
    %297 = arith.addf %291, %296 : vector<8x512xf32>
    %298 = vector.extract_strided_slice %256 {offsets = [0, 7], sizes = [8, 1], strides = [1, 1]} : vector<8x32xf32> to vector<8x1xf32>
    %299 = vector.extract_strided_slice %254 {offsets = [7, 0], sizes = [1, 512], strides = [1, 1]} : vector<32x512xf32> to vector<1x512xf32>
    %300 = vector.broadcast %298 : vector<8x1xf32> to vector<8x512xf32>
    %301 = vector.broadcast %299 : vector<1x512xf32> to vector<8x512xf32>
    %302 = arith.mulf %300, %301 : vector<8x512xf32>
    %303 = arith.addf %297, %302 : vector<8x512xf32>
    %304 = vector.extract_strided_slice %256 {offsets = [0, 8], sizes = [8, 1], strides = [1, 1]} : vector<8x32xf32> to vector<8x1xf32>
    %305 = vector.extract_strided_slice %254 {offsets = [8, 0], sizes = [1, 512], strides = [1, 1]} : vector<32x512xf32> to vector<1x512xf32>
    %306 = vector.broadcast %304 : vector<8x1xf32> to vector<8x512xf32>
    %307 = vector.broadcast %305 : vector<1x512xf32> to vector<8x512xf32>
    %308 = arith.mulf %306, %307 : vector<8x512xf32>
    %309 = arith.addf %303, %308 : vector<8x512xf32>
    %310 = vector.extract_strided_slice %256 {offsets = [0, 9], sizes = [8, 1], strides = [1, 1]} : vector<8x32xf32> to vector<8x1xf32>
    %311 = vector.extract_strided_slice %254 {offsets = [9, 0], sizes = [1, 512], strides = [1, 1]} : vector<32x512xf32> to vector<1x512xf32>
    %312 = vector.broadcast %310 : vector<8x1xf32> to vector<8x512xf32>
    %313 = vector.broadcast %311 : vector<1x512xf32> to vector<8x512xf32>
    %314 = arith.mulf %312, %313 : vector<8x512xf32>
    %315 = arith.addf %309, %314 : vector<8x512xf32>
    %316 = vector.extract_strided_slice %256 {offsets = [0, 10], sizes = [8, 1], strides = [1, 1]} : vector<8x32xf32> to vector<8x1xf32>
    %317 = vector.extract_strided_slice %254 {offsets = [10, 0], sizes = [1, 512], strides = [1, 1]} : vector<32x512xf32> to vector<1x512xf32>
    %318 = vector.broadcast %316 : vector<8x1xf32> to vector<8x512xf32>
    %319 = vector.broadcast %317 : vector<1x512xf32> to vector<8x512xf32>
    %320 = arith.mulf %318, %319 : vector<8x512xf32>
    %321 = arith.addf %315, %320 : vector<8x512xf32>
    %322 = vector.extract_strided_slice %256 {offsets = [0, 11], sizes = [8, 1], strides = [1, 1]} : vector<8x32xf32> to vector<8x1xf32>
    %323 = vector.extract_strided_slice %254 {offsets = [11, 0], sizes = [1, 512], strides = [1, 1]} : vector<32x512xf32> to vector<1x512xf32>
    %324 = vector.broadcast %322 : vector<8x1xf32> to vector<8x512xf32>
    %325 = vector.broadcast %323 : vector<1x512xf32> to vector<8x512xf32>
    %326 = arith.mulf %324, %325 : vector<8x512xf32>
    %327 = arith.addf %321, %326 : vector<8x512xf32>
    %328 = vector.extract_strided_slice %256 {offsets = [0, 12], sizes = [8, 1], strides = [1, 1]} : vector<8x32xf32> to vector<8x1xf32>
    %329 = vector.extract_strided_slice %254 {offsets = [12, 0], sizes = [1, 512], strides = [1, 1]} : vector<32x512xf32> to vector<1x512xf32>
    %330 = vector.broadcast %328 : vector<8x1xf32> to vector<8x512xf32>
    %331 = vector.broadcast %329 : vector<1x512xf32> to vector<8x512xf32>
    %332 = arith.mulf %330, %331 : vector<8x512xf32>
    %333 = arith.addf %327, %332 : vector<8x512xf32>
    %334 = vector.extract_strided_slice %256 {offsets = [0, 13], sizes = [8, 1], strides = [1, 1]} : vector<8x32xf32> to vector<8x1xf32>
    %335 = vector.extract_strided_slice %254 {offsets = [13, 0], sizes = [1, 512], strides = [1, 1]} : vector<32x512xf32> to vector<1x512xf32>
    %336 = vector.broadcast %334 : vector<8x1xf32> to vector<8x512xf32>
    %337 = vector.broadcast %335 : vector<1x512xf32> to vector<8x512xf32>
    %338 = arith.mulf %336, %337 : vector<8x512xf32>
    %339 = arith.addf %333, %338 : vector<8x512xf32>
    %340 = vector.extract_strided_slice %256 {offsets = [0, 14], sizes = [8, 1], strides = [1, 1]} : vector<8x32xf32> to vector<8x1xf32>
    %341 = vector.extract_strided_slice %254 {offsets = [14, 0], sizes = [1, 512], strides = [1, 1]} : vector<32x512xf32> to vector<1x512xf32>
    %342 = vector.broadcast %340 : vector<8x1xf32> to vector<8x512xf32>
    %343 = vector.broadcast %341 : vector<1x512xf32> to vector<8x512xf32>
    %344 = arith.mulf %342, %343 : vector<8x512xf32>
    %345 = arith.addf %339, %344 : vector<8x512xf32>
    %346 = vector.extract_strided_slice %256 {offsets = [0, 15], sizes = [8, 1], strides = [1, 1]} : vector<8x32xf32> to vector<8x1xf32>
    %347 = vector.extract_strided_slice %254 {offsets = [15, 0], sizes = [1, 512], strides = [1, 1]} : vector<32x512xf32> to vector<1x512xf32>
    %348 = vector.broadcast %346 : vector<8x1xf32> to vector<8x512xf32>
    %349 = vector.broadcast %347 : vector<1x512xf32> to vector<8x512xf32>
    %350 = arith.mulf %348, %349 : vector<8x512xf32>
    %351 = arith.addf %345, %350 : vector<8x512xf32>
    %352 = vector.extract_strided_slice %256 {offsets = [0, 16], sizes = [8, 1], strides = [1, 1]} : vector<8x32xf32> to vector<8x1xf32>
    %353 = vector.extract_strided_slice %254 {offsets = [16, 0], sizes = [1, 512], strides = [1, 1]} : vector<32x512xf32> to vector<1x512xf32>
    %354 = vector.broadcast %352 : vector<8x1xf32> to vector<8x512xf32>
    %355 = vector.broadcast %353 : vector<1x512xf32> to vector<8x512xf32>
    %356 = arith.mulf %354, %355 : vector<8x512xf32>
    %357 = arith.addf %351, %356 : vector<8x512xf32>
    %358 = vector.extract_strided_slice %256 {offsets = [0, 17], sizes = [8, 1], strides = [1, 1]} : vector<8x32xf32> to vector<8x1xf32>
    %359 = vector.extract_strided_slice %254 {offsets = [17, 0], sizes = [1, 512], strides = [1, 1]} : vector<32x512xf32> to vector<1x512xf32>
    %360 = vector.broadcast %358 : vector<8x1xf32> to vector<8x512xf32>
    %361 = vector.broadcast %359 : vector<1x512xf32> to vector<8x512xf32>
    %362 = arith.mulf %360, %361 : vector<8x512xf32>
    %363 = arith.addf %357, %362 : vector<8x512xf32>
    %364 = vector.extract_strided_slice %256 {offsets = [0, 18], sizes = [8, 1], strides = [1, 1]} : vector<8x32xf32> to vector<8x1xf32>
    %365 = vector.extract_strided_slice %254 {offsets = [18, 0], sizes = [1, 512], strides = [1, 1]} : vector<32x512xf32> to vector<1x512xf32>
    %366 = vector.broadcast %364 : vector<8x1xf32> to vector<8x512xf32>
    %367 = vector.broadcast %365 : vector<1x512xf32> to vector<8x512xf32>
    %368 = arith.mulf %366, %367 : vector<8x512xf32>
    %369 = arith.addf %363, %368 : vector<8x512xf32>
    %370 = vector.extract_strided_slice %256 {offsets = [0, 19], sizes = [8, 1], strides = [1, 1]} : vector<8x32xf32> to vector<8x1xf32>
    %371 = vector.extract_strided_slice %254 {offsets = [19, 0], sizes = [1, 512], strides = [1, 1]} : vector<32x512xf32> to vector<1x512xf32>
    %372 = vector.broadcast %370 : vector<8x1xf32> to vector<8x512xf32>
    %373 = vector.broadcast %371 : vector<1x512xf32> to vector<8x512xf32>
    %374 = arith.mulf %372, %373 : vector<8x512xf32>
    %375 = arith.addf %369, %374 : vector<8x512xf32>
    %376 = vector.extract_strided_slice %256 {offsets = [0, 20], sizes = [8, 1], strides = [1, 1]} : vector<8x32xf32> to vector<8x1xf32>
    %377 = vector.extract_strided_slice %254 {offsets = [20, 0], sizes = [1, 512], strides = [1, 1]} : vector<32x512xf32> to vector<1x512xf32>
    %378 = vector.broadcast %376 : vector<8x1xf32> to vector<8x512xf32>
    %379 = vector.broadcast %377 : vector<1x512xf32> to vector<8x512xf32>
    %380 = arith.mulf %378, %379 : vector<8x512xf32>
    %381 = arith.addf %375, %380 : vector<8x512xf32>
    %382 = vector.extract_strided_slice %256 {offsets = [0, 21], sizes = [8, 1], strides = [1, 1]} : vector<8x32xf32> to vector<8x1xf32>
    %383 = vector.extract_strided_slice %254 {offsets = [21, 0], sizes = [1, 512], strides = [1, 1]} : vector<32x512xf32> to vector<1x512xf32>
    %384 = vector.broadcast %382 : vector<8x1xf32> to vector<8x512xf32>
    %385 = vector.broadcast %383 : vector<1x512xf32> to vector<8x512xf32>
    %386 = arith.mulf %384, %385 : vector<8x512xf32>
    %387 = arith.addf %381, %386 : vector<8x512xf32>
    %388 = vector.extract_strided_slice %256 {offsets = [0, 22], sizes = [8, 1], strides = [1, 1]} : vector<8x32xf32> to vector<8x1xf32>
    %389 = vector.extract_strided_slice %254 {offsets = [22, 0], sizes = [1, 512], strides = [1, 1]} : vector<32x512xf32> to vector<1x512xf32>
    %390 = vector.broadcast %388 : vector<8x1xf32> to vector<8x512xf32>
    %391 = vector.broadcast %389 : vector<1x512xf32> to vector<8x512xf32>
    %392 = arith.mulf %390, %391 : vector<8x512xf32>
    %393 = arith.addf %387, %392 : vector<8x512xf32>
    %394 = vector.extract_strided_slice %256 {offsets = [0, 23], sizes = [8, 1], strides = [1, 1]} : vector<8x32xf32> to vector<8x1xf32>
    %395 = vector.extract_strided_slice %254 {offsets = [23, 0], sizes = [1, 512], strides = [1, 1]} : vector<32x512xf32> to vector<1x512xf32>
    %396 = vector.broadcast %394 : vector<8x1xf32> to vector<8x512xf32>
    %397 = vector.broadcast %395 : vector<1x512xf32> to vector<8x512xf32>
    %398 = arith.mulf %396, %397 : vector<8x512xf32>
    %399 = arith.addf %393, %398 : vector<8x512xf32>
    %400 = vector.extract_strided_slice %256 {offsets = [0, 24], sizes = [8, 1], strides = [1, 1]} : vector<8x32xf32> to vector<8x1xf32>
    %401 = vector.extract_strided_slice %254 {offsets = [24, 0], sizes = [1, 512], strides = [1, 1]} : vector<32x512xf32> to vector<1x512xf32>
    %402 = vector.broadcast %400 : vector<8x1xf32> to vector<8x512xf32>
    %403 = vector.broadcast %401 : vector<1x512xf32> to vector<8x512xf32>
    %404 = arith.mulf %402, %403 : vector<8x512xf32>
    %405 = arith.addf %399, %404 : vector<8x512xf32>
    %406 = vector.extract_strided_slice %256 {offsets = [0, 25], sizes = [8, 1], strides = [1, 1]} : vector<8x32xf32> to vector<8x1xf32>
    %407 = vector.extract_strided_slice %254 {offsets = [25, 0], sizes = [1, 512], strides = [1, 1]} : vector<32x512xf32> to vector<1x512xf32>
    %408 = vector.broadcast %406 : vector<8x1xf32> to vector<8x512xf32>
    %409 = vector.broadcast %407 : vector<1x512xf32> to vector<8x512xf32>
    %410 = arith.mulf %408, %409 : vector<8x512xf32>
    %411 = arith.addf %405, %410 : vector<8x512xf32>
    %412 = vector.extract_strided_slice %256 {offsets = [0, 26], sizes = [8, 1], strides = [1, 1]} : vector<8x32xf32> to vector<8x1xf32>
    %413 = vector.extract_strided_slice %254 {offsets = [26, 0], sizes = [1, 512], strides = [1, 1]} : vector<32x512xf32> to vector<1x512xf32>
    %414 = vector.broadcast %412 : vector<8x1xf32> to vector<8x512xf32>
    %415 = vector.broadcast %413 : vector<1x512xf32> to vector<8x512xf32>
    %416 = arith.mulf %414, %415 : vector<8x512xf32>
    %417 = arith.addf %411, %416 : vector<8x512xf32>
    %418 = vector.extract_strided_slice %256 {offsets = [0, 27], sizes = [8, 1], strides = [1, 1]} : vector<8x32xf32> to vector<8x1xf32>
    %419 = vector.extract_strided_slice %254 {offsets = [27, 0], sizes = [1, 512], strides = [1, 1]} : vector<32x512xf32> to vector<1x512xf32>
    %420 = vector.broadcast %418 : vector<8x1xf32> to vector<8x512xf32>
    %421 = vector.broadcast %419 : vector<1x512xf32> to vector<8x512xf32>
    %422 = arith.mulf %420, %421 : vector<8x512xf32>
    %423 = arith.addf %417, %422 : vector<8x512xf32>
    %424 = vector.extract_strided_slice %256 {offsets = [0, 28], sizes = [8, 1], strides = [1, 1]} : vector<8x32xf32> to vector<8x1xf32>
    %425 = vector.extract_strided_slice %254 {offsets = [28, 0], sizes = [1, 512], strides = [1, 1]} : vector<32x512xf32> to vector<1x512xf32>
    %426 = vector.broadcast %424 : vector<8x1xf32> to vector<8x512xf32>
    %427 = vector.broadcast %425 : vector<1x512xf32> to vector<8x512xf32>
    %428 = arith.mulf %426, %427 : vector<8x512xf32>
    %429 = arith.addf %423, %428 : vector<8x512xf32>
    %430 = vector.extract_strided_slice %256 {offsets = [0, 29], sizes = [8, 1], strides = [1, 1]} : vector<8x32xf32> to vector<8x1xf32>
    %431 = vector.extract_strided_slice %254 {offsets = [29, 0], sizes = [1, 512], strides = [1, 1]} : vector<32x512xf32> to vector<1x512xf32>
    %432 = vector.broadcast %430 : vector<8x1xf32> to vector<8x512xf32>
    %433 = vector.broadcast %431 : vector<1x512xf32> to vector<8x512xf32>
    %434 = arith.mulf %432, %433 : vector<8x512xf32>
    %435 = arith.addf %429, %434 : vector<8x512xf32>
    %436 = vector.extract_strided_slice %256 {offsets = [0, 30], sizes = [8, 1], strides = [1, 1]} : vector<8x32xf32> to vector<8x1xf32>
    %437 = vector.extract_strided_slice %254 {offsets = [30, 0], sizes = [1, 512], strides = [1, 1]} : vector<32x512xf32> to vector<1x512xf32>
    %438 = vector.broadcast %436 : vector<8x1xf32> to vector<8x512xf32>
    %439 = vector.broadcast %437 : vector<1x512xf32> to vector<8x512xf32>
    %440 = arith.mulf %438, %439 : vector<8x512xf32>
    %441 = arith.addf %435, %440 : vector<8x512xf32>
    %442 = vector.extract_strided_slice %256 {offsets = [0, 31], sizes = [8, 1], strides = [1, 1]} : vector<8x32xf32> to vector<8x1xf32>
    %443 = vector.extract_strided_slice %254 {offsets = [31, 0], sizes = [1, 512], strides = [1, 1]} : vector<32x512xf32> to vector<1x512xf32>
    %444 = vector.broadcast %442 : vector<8x1xf32> to vector<8x512xf32>
    %445 = vector.broadcast %443 : vector<1x512xf32> to vector<8x512xf32>
    %446 = arith.mulf %444, %445 : vector<8x512xf32>
    %447 = arith.addf %441, %446 : vector<8x512xf32>
    %448 = arith.addf %255, %447 : vector<8x512xf32>
    %c0_71 = arith.constant 0 : index
    %c0_72 = arith.constant 0 : index
    %449 = vector.load %arg15[%c0_71, %c0_72] : memref<8x1xf32, #tpu.memory_space<vmem>>, vector<8x1xf32>
    %450 = vector.broadcast %449 : vector<8x1xf32> to vector<8x512xf32>
    %451 = arith.addf %448, %450 : vector<8x512xf32>
    %c0_73 = arith.constant 0 : index
    %c0_74 = arith.constant 0 : index
    %452 = vector.load %arg18[%c0_73, %c0_74] : memref<8x512xf32, #tpu.memory_space<vmem>>, vector<8x512xf32>
    tpu.vector_store %arg18[%c0_73, %c0_74], %451 {strides = array<i32>} : memref<8x512xf32, #tpu.memory_space<vmem>>, vector<8x512xf32>,
    %c0_i32_75 = arith.constant 0 : i32
    %c0_i32_76 = arith.constant 0 : i32
    %c0_i32_77 = arith.constant 0 : i32
    %c0_i32_78 = arith.constant 0 : i32
    %453 = tpu.memref_slice %arg18[%c0_i32_77, %c0_i32_78] : memref<8x512xf32, #tpu.memory_space<vmem>> -> memref<8x256xf32, #tpu.memory_space<vmem>>
    %c0_i32_79 = arith.constant 0 : i32
    %c0_i32_80 = arith.constant 0 : i32
    %454 = tpu.memref_slice %arg16[%c0_i32_75, %c0_i32_79, %c0_i32_80] : memref<2x8x256xf32, #tpu.memory_space<any>> -> memref<1x8x256xf32, #tpu.memory_space<any>>
    %455 = tpu.memref_squeeze %454 : memref<1x8x256xf32, #tpu.memory_space<any>> -> memref<8x256xf32, #tpu.memory_space<any>>
    %456 = tpu.memref_slice %arg20[%c0_i32_76] : memref<2x!tpu.dma_semaphore, #tpu.memory_space<semaphore_mem>> -> memref<1x!tpu.dma_semaphore, #tpu.memory_space<semaphore_mem>>
    %457 = tpu.memref_squeeze %456 : memref<1x!tpu.dma_semaphore, #tpu.memory_space<semaphore_mem>> -> memref<!tpu.dma_semaphore, #tpu.memory_space<semaphore_mem>>
    tpu.enqueue_dma source(%453 : memref<8x256xf32, #tpu.memory_space<vmem>>) target(%455 : memref<8x256xf32, #tpu.memory_space<any>>) target_semaphore(%457 : memref<!tpu.dma_semaphore, #tpu.memory_space<semaphore_mem>>)
    %c1_i32_81 = arith.constant 1 : i32
    %c1_i32_82 = arith.constant 1 : i32
    %c0_i32_83 = arith.constant 0 : i32
    %c256_i32_84 = arith.constant 256 : i32
    %458 = tpu.memref_slice %arg18[%c0_i32_83, %c256_i32_84] : memref<8x512xf32, #tpu.memory_space<vmem>> -> memref<8x256xf32, #tpu.memory_space<vmem>>
    %c0_i32_85 = arith.constant 0 : i32
    %c0_i32_86 = arith.constant 0 : i32
    %459 = tpu.memref_slice %arg16[%c1_i32_81, %c0_i32_85, %c0_i32_86] : memref<2x8x256xf32, #tpu.memory_space<any>> -> memref<1x8x256xf32, #tpu.memory_space<any>>
    %460 = tpu.memref_squeeze %459 : memref<1x8x256xf32, #tpu.memory_space<any>> -> memref<8x256xf32, #tpu.memory_space<any>>
    %461 = tpu.memref_slice %arg20[%c1_i32_82] : memref<2x!tpu.dma_semaphore, #tpu.memory_space<semaphore_mem>> -> memref<1x!tpu.dma_semaphore, #tpu.memory_space<semaphore_mem>>
    %462 = tpu.memref_squeeze %461 : memref<1x!tpu.dma_semaphore, #tpu.memory_space<semaphore_mem>> -> memref<!tpu.dma_semaphore, #tpu.memory_space<semaphore_mem>>
    tpu.enqueue_dma source(%458 : memref<8x256xf32, #tpu.memory_space<vmem>>) target(%460 : memref<8x256xf32, #tpu.memory_space<any>>) target_semaphore(%462 : memref<!tpu.dma_semaphore, #tpu.memory_space<semaphore_mem>>)
    %c0_i32_87 = arith.constant 0 : i32
    %c0_i32_88 = arith.constant 0 : i32
    %c0_i32_89 = arith.constant 0 : i32
    %c0_i32_90 = arith.constant 0 : i32
    %463 = tpu.memref_slice %arg18[%c0_i32_89, %c0_i32_90] : memref<8x512xf32, #tpu.memory_space<vmem>> -> memref<8x256xf32, #tpu.memory_space<vmem>>
    %c0_i32_91 = arith.constant 0 : i32
    %c0_i32_92 = arith.constant 0 : i32
    %464 = tpu.memref_slice %arg16[%c0_i32_87, %c0_i32_91, %c0_i32_92] : memref<2x8x256xf32, #tpu.memory_space<any>> -> memref<1x8x256xf32, #tpu.memory_space<any>>
    %465 = tpu.memref_squeeze %464 : memref<1x8x256xf32, #tpu.memory_space<any>> -> memref<8x256xf32, #tpu.memory_space<any>>
    %466 = tpu.memref_slice %arg20[%c0_i32_88] : memref<2x!tpu.dma_semaphore, #tpu.memory_space<semaphore_mem>> -> memref<1x!tpu.dma_semaphore, #tpu.memory_space<semaphore_mem>>
    %467 = tpu.memref_squeeze %466 : memref<1x!tpu.dma_semaphore, #tpu.memory_space<semaphore_mem>> -> memref<!tpu.dma_semaphore, #tpu.memory_space<semaphore_mem>>
    tpu.wait_dma2 semaphore(%467 : memref<!tpu.dma_semaphore, #tpu.memory_space<semaphore_mem>>) src(%463 : memref<8x256xf32, #tpu.memory_space<vmem>>) dst(%465 : memref<8x256xf32, #tpu.memory_space<any>>)
    %c1_i32_93 = arith.constant 1 : i32
    %c1_i32_94 = arith.constant 1 : i32
    %c0_i32_95 = arith.constant 0 : i32
    %c256_i32_96 = arith.constant 256 : i32
    %468 = tpu.memref_slice %arg18[%c0_i32_95, %c256_i32_96] : memref<8x512xf32, #tpu.memory_space<vmem>> -> memref<8x256xf32, #tpu.memory_space<vmem>>
    %c0_i32_97 = arith.constant 0 : i32
    %c0_i32_98 = arith.constant 0 : i32
    %469 = tpu.memref_slice %arg16[%c1_i32_93, %c0_i32_97, %c0_i32_98] : memref<2x8x256xf32, #tpu.memory_space<any>> -> memref<1x8x256xf32, #tpu.memory_space<any>>
    %470 = tpu.memref_squeeze %469 : memref<1x8x256xf32, #tpu.memory_space<any>> -> memref<8x256xf32, #tpu.memory_space<any>>
    %471 = tpu.memref_slice %arg20[%c1_i32_94] : memref<2x!tpu.dma_semaphore, #tpu.memory_space<semaphore_mem>> -> memref<1x!tpu.dma_semaphore, #tpu.memory_space<semaphore_mem>>
    %472 = tpu.memref_squeeze %471 : memref<1x!tpu.dma_semaphore, #tpu.memory_space<semaphore_mem>> -> memref<!tpu.dma_semaphore, #tpu.memory_space<semaphore_mem>>
    tpu.wait_dma2 semaphore(%472 : memref<!tpu.dma_semaphore, #tpu.memory_space<semaphore_mem>>) src(%468 : memref<8x256xf32, #tpu.memory_space<vmem>>) dst(%470 : memref<8x256xf32, #tpu.memory_space<any>>)
    return
  }
}

</mosaic_0001>

<llo_original>
// kernel: tpu_custom_call.1
$region0: #{tpu_custom_call.1}
  #allocation0 [shape = 'u32[]', space=smem, size = 0x4, offset = 0x4, fixed_abs, tag = 'smem constant byte address 0x4 - core index']
  #allocation1 [shape = 'u32[144,128]{1,0:T(1,128)}', space=vmem, size = 0x12000, scoped, tag = 'internal scratch']
  #allocation2 [shape = 'f32[4,512]{1,0:T(4,128)}', space=vmem, size = 0x2000, scoped, tag = 'scratch operand']
  #allocation3 [shape = 'f32[8,512]{1,0:T(8,128)}', space=vmem, size = 0x4000, scoped, tag = 'scratch operand']
  #allocation4 [shape = 's32[2]{0}', space=sflag, size = 0x8, scoped, tag = 'scratch operand']
  #allocation5 [shape = 's32[2]{0}', space=sflag, size = 0x8, scoped, tag = 'scratch operand']
  #allocation6 [shape = 's32[]', space=sflag, size = 0x4, offset = 0, fixed_abs, tag = 'sflag constant byte address 0x0 - dummy sync flag']
  #allocation7 [shape = 's32[]', space=sflag, size = 0x4, offset = 0, fixed_abs, tag = 'sflag constant byte address 0x0 - dummy sync flag']
  #allocation8 [shape = 's32[]', space=sflag, size = 0x4, offset = 0, fixed_abs, tag = 'sflag constant byte address 0x0 - dummy sync flag']
  #allocation9 [shape = 's32[]', space=sflag, size = 0x4, offset = 0, fixed_abs, tag = 'sflag constant byte address 0x0 - dummy sync flag']
  #allocation10 [shape = 'u32[]', space=smem, size = 0x4, offset = 0x44, fixed_abs, tag = 'smem constant byte address 0x44 - assertion arg 0']
  #allocation11 [shape = 'u32[]', space=smem, size = 0x4, offset = 0x48, fixed_abs, tag = 'smem constant byte address 0x48 - assertion arg 1']
  #allocation12 [shape = 's32[]', space=sflag, size = 0x4, offset = 0, fixed_abs, tag = 'sflag constant byte address 0x0 - dummy sync flag']
  #allocation13 [shape = 's32[]', space=sflag, size = 0x4, offset = 0, fixed_abs, tag = 'sflag constant byte address 0x0 - dummy sync flag']
  %s0 = inlined_call_operand.vmem [shape: f32[2,4,256], index: 0, kind: input, shape index: {}]
  %s1 = inlined_call_operand.vmem [shape: f32[4,4], index: 1, kind: input, shape index: {}]
  %s2 = inlined_call_operand.vmem [shape: f32[4,1], index: 2, kind: input, shape index: {}]
  %s3 = inlined_call_operand.vmem [shape: f32[4,1], index: 3, kind: input, shape index: {}]
  %s4 = inlined_call_operand.vmem [shape: f32[4,1], index: 4, kind: input, shape index: {}]
  %s5 = inlined_call_operand.vmem [shape: f32[4,1], index: 5, kind: input, shape index: {}]
  %s6 = inlined_call_operand.vmem [shape: f32[4,1], index: 6, kind: input, shape index: {}]
  %s7 = inlined_call_operand.vmem [shape: f32[4,1], index: 7, kind: input, shape index: {}]
  %s8 = inlined_call_operand.vmem [shape: f32[4,1], index: 8, kind: input, shape index: {}]
  %s9 = inlined_call_operand.vmem [shape: f32[4,1], index: 9, kind: input, shape index: {}]
  %s10 = inlined_call_operand.vmem [shape: f32[4,1], index: 10, kind: input, shape index: {}]
  %s11 = inlined_call_operand.vmem [shape: f32[32,4], index: 11, kind: input, shape index: {}]
  %s12 = inlined_call_operand.vmem [shape: f32[32,4], index: 12, kind: input, shape index: {}]
  %s13 = inlined_call_operand.vmem [shape: f32[32,1], index: 13, kind: input, shape index: {}]
  %s14 = inlined_call_operand.vmem [shape: f32[8,32], index: 14, kind: input, shape index: {}]
  %s15 = inlined_call_operand.vmem [shape: f32[8,1], index: 15, kind: input, shape index: {}]
  %s16 = inlined_call_operand.hbm [shape: f32[2,8,256], index: 16, kind: output, shape index: {}]
  %s17 = sld [smem:[#allocation0]]
  $region138: #{tpu_custom_call.1} parent=0
    _
  %s19 = ssub.s32 1, %s17
  %s20 = scalar_select 0, %s19, %s17
  // Predicated region
  $region2: #{tpu_custom_call.1} parent=0 // pred_check
    _
  $region3: #{tpu_custom_call.1} parent=0 // pred_check_branch
    %22 = sbr.rel (0) target = $region5
  $region4: #{tpu_custom_call.1} parent=0 // pred_region
    _
  $region5: #{tpu_custom_call.1} parent=0 // pred_fallthru
    _
  // Predicated region
  $region6: #{tpu_custom_call.1} parent=0 // pred_check
    _
  $region7: #{tpu_custom_call.1} parent=0 // pred_check_branch
    %24 = sbr.rel (0) target = $region9
  $region8: #{tpu_custom_call.1} parent=0 // pred_region
    _
  $region9: #{tpu_custom_call.1} parent=0 // pred_fallthru
    _
  // Predicated region
  $region10: #{tpu_custom_call.1} parent=0 // pred_check
    _
  $region11: #{tpu_custom_call.1} parent=0 // pred_check_branch
    %26 = sbr.rel (0) target = $region13
  $region12: #{tpu_custom_call.1} parent=0 // pred_region
    _
  $region13: #{tpu_custom_call.1} parent=0 // pred_fallthru
    _
  // Predicated region
  $region14: #{tpu_custom_call.1} parent=0 // pred_check
    _
  $region15: #{tpu_custom_call.1} parent=0 // pred_check_branch
    %28 = sbr.rel (0) target = $region17
  $region16: #{tpu_custom_call.1} parent=0 // pred_region
    _
  $region17: #{tpu_custom_call.1} parent=0 // pred_fallthru
    _
  // Predicated region
  $region18: #{tpu_custom_call.1} parent=0 // pred_check
    _
  $region19: #{tpu_custom_call.1} parent=0 // pred_check_branch
    %30 = sbr.rel (0) target = $region21
  $region20: #{tpu_custom_call.1} parent=0 // pred_region
    _
  $region21: #{tpu_custom_call.1} parent=0 // pred_fallthru
    _
  // Predicated region
  $region22: #{tpu_custom_call.1} parent=0 // pred_check
    _
  $region23: #{tpu_custom_call.1} parent=0 // pred_check_branch
    %32 = sbr.rel (0) target = $region25
  $region24: #{tpu_custom_call.1} parent=0 // pred_region
    _
  $region25: #{tpu_custom_call.1} parent=0 // pred_fallthru
    _
  // Predicated region
  $region26: #{tpu_custom_call.1} parent=0 // pred_check
    _
  $region27: #{tpu_custom_call.1} parent=0 // pred_check_branch
    %34 = sbr.rel (0) target = $region29
  $region28: #{tpu_custom_call.1} parent=0 // pred_region
    _
  $region29: #{tpu_custom_call.1} parent=0 // pred_fallthru
    _
  // Predicated region
  $region30: #{tpu_custom_call.1} parent=0 // pred_check
    _
  $region31: #{tpu_custom_call.1} parent=0 // pred_check_branch
    %36 = sbr.rel (0) target = $region33
  $region32: #{tpu_custom_call.1} parent=0 // pred_region
    _
  $region33: #{tpu_custom_call.1} parent=0 // pred_fallthru
    _
  // Predicated region
  $region34: #{tpu_custom_call.1} parent=0 // pred_check
    _
  $region35: #{tpu_custom_call.1} parent=0 // pred_check_branch
    %38 = sbr.rel (0) target = $region37
  $region36: #{tpu_custom_call.1} parent=0 // pred_region
    _
  $region37: #{tpu_custom_call.1} parent=0 // pred_fallthru
    _
  // Predicated region
  $region38: #{tpu_custom_call.1} parent=0 // pred_check
    _
  $region39: #{tpu_custom_call.1} parent=0 // pred_check_branch
    %40 = sbr.rel (0) target = $region41
  $region40: #{tpu_custom_call.1} parent=0 // pred_region
    _
  $region41: #{tpu_custom_call.1} parent=0 // pred_fallthru
    _
  // Predicated region
  $region42: #{tpu_custom_call.1} parent=0 // pred_check
    _
  $region43: #{tpu_custom_call.1} parent=0 // pred_check_branch
    %42 = sbr.rel (0) target = $region45
  $region44: #{tpu_custom_call.1} parent=0 // pred_region
    _
  $region45: #{tpu_custom_call.1} parent=0 // pred_fallthru
    _
  // Predicated region
  $region46: #{tpu_custom_call.1} parent=0 // pred_check
    _
  $region47: #{tpu_custom_call.1} parent=0 // pred_check_branch
    %44 = sbr.rel (0) target = $region49
  $region48: #{tpu_custom_call.1} parent=0 // pred_region
    _
  $region49: #{tpu_custom_call.1} parent=0 // pred_fallthru
    _
  // Predicated region
  $region50: #{tpu_custom_call.1} parent=0 // pred_check
    _
  $region51: #{tpu_custom_call.1} parent=0 // pred_check_branch
    %46 = sbr.rel (0) target = $region53
  $region52: #{tpu_custom_call.1} parent=0 // pred_region
    _
  $region53: #{tpu_custom_call.1} parent=0 // pred_fallthru
    _
  // Predicated region
  $region54: #{tpu_custom_call.1} parent=0 // pred_check
    _
  $region55: #{tpu_custom_call.1} parent=0 // pred_check_branch
    %48 = sbr.rel (0) target = $region57
  $region56: #{tpu_custom_call.1} parent=0 // pred_region
    _
  $region57: #{tpu_custom_call.1} parent=0 // pred_fallthru
    _
  // Predicated region
  $region58: #{tpu_custom_call.1} parent=0 // pred_check
    _
  $region59: #{tpu_custom_call.1} parent=0 // pred_check_branch
    %50 = sbr.rel (0) target = $region61
  $region60: #{tpu_custom_call.1} parent=0 // pred_region
    _
  $region61: #{tpu_custom_call.1} parent=0 // pred_fallthru
    _
  %p52 = scmp.lt.u32.totalorder 8, 8
  %p53 = pneg %p52
  // Predicated region
  $region62: #{tpu_custom_call.1} parent=0 // pred_check
    _
  $region63: #{tpu_custom_call.1} parent=0 // pred_check_branch
    %55 = sbr.rel (%p52) target = $region65
  $region64: #{tpu_custom_call.1} parent=0 // pred_region
    %s70 = sand.u32 8, 7
    %p71 = scmp.eq.s32.totalorder %s70, 0
    // Predicated region
    $region77: #{tpu_custom_call.1} parent=64 // pred_check
      %p72 = pneg %p71
    $region78: #{tpu_custom_call.1} parent=64 // pred_check_branch
      %74 = sbr.rel (%p72) target = $region80
    $region79: #{tpu_custom_call.1} parent=64 // pred_region
      loop: start=0, step=1, limit=1
      $region81: #{tpu_custom_call.1} parent=79 // loop_pre_header
        _
      $region82: #{tpu_custom_call.1} parent=79 // loop_header
        %s76 = sphi 0, %s80
        %p77 = scmp.ge.s32.totalorder %s76, 1
        %s81 = sphi %s0, %s0
        %s82 = sphi [#allocation2], [#allocation2]
      $region83: #{tpu_custom_call.1} parent=79 // loop_header_branch
        %79 = sbr.rel (%p77) target = $region87
      $region84: #{tpu_custom_call.1} parent=79 // loop_body
        %v83 = vld [vmem:[%s81] sm:$0xff]
        %84 = vst [vmem:[%s82] sm:$0xff] %v83
      $region85: #{tpu_custom_call.1} parent=79 // loop_footer
        %s80 = sadd.s32 1, %s76
      $region86: #{tpu_custom_call.1} parent=79 // loop_footer_branch
        %75 = sbr.rel target = $region82
      $region87: #{tpu_custom_call.1} parent=79 // loop_exit
        _
    $region80: #{tpu_custom_call.1} parent=64 // pred_fallthru
      _
    %p85 = pneg %p71
    // Predicated region
    $region88: #{tpu_custom_call.1} parent=64 // pred_check
      _
    $region89: #{tpu_custom_call.1} parent=64 // pred_check_branch
      %87 = sbr.rel (%p71) target = $region91
    $region90: #{tpu_custom_call.1} parent=64 // pred_region
      %s88 = sand.u32 8, 7
    $region91: #{tpu_custom_call.1} parent=64 // pred_fallthru
      _
  $region65: #{tpu_custom_call.1} parent=0 // pred_fallthru
    _
  // Predicated region
  $region66: #{tpu_custom_call.1} parent=0 // pred_check
    %p56 = pneg %p52
  $region67: #{tpu_custom_call.1} parent=0 // pred_check_branch
    %58 = sbr.rel (%p56) target = $region69
  $region68: #{tpu_custom_call.1} parent=0 // pred_region
    %s59 = sshllo.u32 0, 8
    loop: start=0, step=1, limit=1
    $region70: #{tpu_custom_call.1} parent=68 // loop_pre_header
      _
    $region71: #{tpu_custom_call.1} parent=68 // loop_header
      %s61 = sphi 0, %s65
      %p62 = scmp.ge.s32.totalorder %s61, 1
      %s66 = sphi %s0, %s0
      %s67 = sphi [#allocation2], [#allocation2]
    $region72: #{tpu_custom_call.1} parent=68 // loop_header_branch
      %64 = sbr.rel (%p62) target = $region76
    $region73: #{tpu_custom_call.1} parent=68 // loop_body
      %v68 = vld [vmem:[%s66] sm:%s59]
      %69 = vst [vmem:[%s67] sm:%s59] %v68
    $region74: #{tpu_custom_call.1} parent=68 // loop_footer
      %s65 = sadd.s32 1, %s61
    $region75: #{tpu_custom_call.1} parent=68 // loop_footer_branch
      %60 = sbr.rel target = $region71
    $region76: #{tpu_custom_call.1} parent=68 // loop_exit
      _
  $region69: #{tpu_custom_call.1} parent=0 // pred_fallthru
    _
  // Predicated region
  $region92: #{tpu_custom_call.1} parent=0 // pred_check
    _
  $region93: #{tpu_custom_call.1} parent=0 // pred_check_branch
    %91 = sbr.rel (0) target = $region95
  $region94: #{tpu_custom_call.1} parent=0 // pred_region
    %92 = vsyncadd [#allocation4], 128
  $region95: #{tpu_custom_call.1} parent=0 // pred_fallthru
    _
  %s93 = scalar_lea.vmem %s0, 8
  %s94 = scalar_lea.vmem [#allocation2], 8
  %s95 = scalar_lea.sflag [#allocation4], 1
  %p97 = scmp.lt.u32.totalorder 8, 8
  %p98 = pneg %p97
  // Predicated region
  $region96: #{tpu_custom_call.1} parent=0 // pred_check
    _
  $region97: #{tpu_custom_call.1} parent=0 // pred_check_branch
    %100 = sbr.rel (%p97) target = $region99
  $region98: #{tpu_custom_call.1} parent=0 // pred_region
    %s115 = sand.u32 8, 7
    %p116 = scmp.eq.s32.totalorder %s115, 0
    // Predicated region
    $region111: #{tpu_custom_call.1} parent=98 // pred_check
      %p117 = pneg %p116
    $region112: #{tpu_custom_call.1} parent=98 // pred_check_branch
      %119 = sbr.rel (%p117) target = $region114
    $region113: #{tpu_custom_call.1} parent=98 // pred_region
      loop: start=0, step=1, limit=1
      $region115: #{tpu_custom_call.1} parent=113 // loop_pre_header
        _
      $region116: #{tpu_custom_call.1} parent=113 // loop_header
        %s121 = sphi 0, %s125
        %p122 = scmp.ge.s32.totalorder %s121, 1
        %s126 = sphi %s93, %s93
        %s127 = sphi %s94, %s94
      $region117: #{tpu_custom_call.1} parent=113 // loop_header_branch
        %124 = sbr.rel (%p122) target = $region121
      $region118: #{tpu_custom_call.1} parent=113 // loop_body
        %v128 = vld [vmem:[%s126] sm:$0xff]
        %129 = vst [vmem:[%s127] sm:$0xff] %v128
      $region119: #{tpu_custom_call.1} parent=113 // loop_footer
        %s125 = sadd.s32 1, %s121
      $region120: #{tpu_custom_call.1} parent=113 // loop_footer_branch
        %120 = sbr.rel target = $region116
      $region121: #{tpu_custom_call.1} parent=113 // loop_exit
        _
    $region114: #{tpu_custom_call.1} parent=98 // pred_fallthru
      _
    %p130 = pneg %p116
    // Predicated region
    $region122: #{tpu_custom_call.1} parent=98 // pred_check
      _
    $region123: #{tpu_custom_call.1} parent=98 // pred_check_branch
      %132 = sbr.rel (%p116) target = $region125
    $region124: #{tpu_custom_call.1} parent=98 // pred_region
      %s133 = sand.u32 8, 7
    $region125: #{tpu_custom_call.1} parent=98 // pred_fallthru
      _
  $region99: #{tpu_custom_call.1} parent=0 // pred_fallthru
    _
  // Predicated region
  $region100: #{tpu_custom_call.1} parent=0 // pred_check
    %p101 = pneg %p97
  $region101: #{tpu_custom_call.1} parent=0 // pred_check_branch
    %103 = sbr.rel (%p101) target = $region103
  $region102: #{tpu_custom_call.1} parent=0 // pred_region
    %s104 = sshllo.u32 0, 8
    loop: start=0, step=1, limit=1
    $region104: #{tpu_custom_call.1} parent=102 // loop_pre_header
      _
    $region105: #{tpu_custom_call.1} parent=102 // loop_header
      %s106 = sphi 0, %s110
      %p107 = scmp.ge.s32.totalorder %s106, 1
      %s111 = sphi %s93, %s93
      %s112 = sphi %s94, %s94
    $region106: #{tpu_custom_call.1} parent=102 // loop_header_branch
      %109 = sbr.rel (%p107) target = $region110
    $region107: #{tpu_custom_call.1} parent=102 // loop_body
      %v113 = vld [vmem:[%s111] sm:%s104]
      %114 = vst [vmem:[%s112] sm:%s104] %v113
    $region108: #{tpu_custom_call.1} parent=102 // loop_footer
      %s110 = sadd.s32 1, %s106
    $region109: #{tpu_custom_call.1} parent=102 // loop_footer_branch
      %105 = sbr.rel target = $region105
    $region110: #{tpu_custom_call.1} parent=102 // loop_exit
      _
  $region103: #{tpu_custom_call.1} parent=0 // pred_fallthru
    _
  // Predicated region
  $region126: #{tpu_custom_call.1} parent=0 // pred_check
    _
  $region127: #{tpu_custom_call.1} parent=0 // pred_check_branch
    %136 = sbr.rel (0) target = $region129
  $region128: #{tpu_custom_call.1} parent=0 // pred_region
    %137 = vsyncadd %s95, 128
  $region129: #{tpu_custom_call.1} parent=0 // pred_fallthru
    _
  %s138 = smul.u32 4, 1
  %s139 = smul.u32 %s138, 2
  %s140 = sshll.u32 %s139, 4
  %141 = dma.done [#allocation4], %s140
  %s142 = sshll.u32 %s139, 4
  %143 = dma.done %s95, %s142
  %v144 = vld [vmem:[#allocation2] sm:$0xff]
  %v145 = vld [vmem:[#allocation2 + $0x8] sm:$0xff]
  %v148 = vcombine.high %v144, %v144
  %v149 = vcombine.high %v145, %v145
  %vm152 = vcmask 1043456
  %v153 = vsel %vm152, %v144, 0.0
  %v154 = vsel %vm152, %v148, 0.0
  %v155 = vadd.f32 %v153, %v154
  %v156 = vsel %vm152, %v145, 0.0
  %v157 = vadd.f32 %v155, %v156
  %v158 = vsel %vm152, %v149, 0.0
  %v159 = vadd.f32 %v157, %v158
  %160 = vadd.xlane.f32.xlu0 %v159
  %v161 = vpop.xlane.xlu0 %160
  %v162 = vmul.f32 %v161, 0.001953125
  %v165 = vunpack.c.l.s4 839922192
  %v166 = vunpack.c.0.s8 %v165
  %v167 = vlaneseq
  %v168 = vshrl.u32 %v167, 7
  %v169 = vsub.s32 %v166, %v168
  %v170 = vrot.slane %v162, %v169
  %v172 = vsub.f32 %v144, %v170
  %v173 = vsub.f32 %v145, %v170
  %v174 = vmul.f32 %v172, %v172
  %v175 = vmul.f32 %v173, %v173
  %v178 = vcombine.high %v174, %v174
  %v179 = vcombine.high %v175, %v175
  %v182 = vsel %vm152, %v174, 0.0
  %v183 = vsel %vm152, %v178, 0.0
  %v184 = vadd.f32 %v182, %v183
  %v185 = vsel %vm152, %v175, 0.0
  %v186 = vadd.f32 %v184, %v185
  %v187 = vsel %vm152, %v179, 0.0
  %v188 = vadd.f32 %v186, %v187
  %189 = vadd.xlane.f32.xlu0 %v188
  %v190 = vpop.xlane.xlu0 %189
  %v191 = vmul.f32 %v190, 0.001953125
  %v192 = vld [vmem:[%s3] sm:$0xf]
  %v193 = vadd.f32 %v191, 1e-05
  %v194 = vrsqrt.pop %v193
  %v195 = vmul.f32 %v192, %v194
  %v196 = vld [vmem:[%s4] sm:$0xf]
  %v197 = vmul.f32 %v162, %v195
  %v198 = vsub.f32 %v196, %v197
  %v199 = vadd.f32 %v195, 1.0
  %201 = vset.pattern.permute.xlu0 0
  %202 = vperm.xlu0 %201, %v199
  %v203 = vpop.permute.xlu0 %202
  %v205 = vunpack.c.l.s4 839922192
  %v206 = vunpack.c.0.s8 %v205
  %v207 = vlaneseq
  %v208 = vshrl.u32 %v207, 7
  %v209 = vsub.s32 %v206, %v208
  %v210 = vrot.slane %v203, %v209
  %v212 = vmul.f32 %v144, %v210
  %v213 = vmul.f32 %v145, %v210
  %215 = vset.pattern.permute.xlu0 0
  %216 = vperm.xlu0 %215, %v198
  %v217 = vpop.permute.xlu0 %216
  %v219 = vunpack.c.l.s4 839922192
  %v220 = vunpack.c.0.s8 %v219
  %v221 = vlaneseq
  %v222 = vshrl.u32 %v221, 7
  %v223 = vsub.s32 %v220, %v222
  %v224 = vrot.slane %v217, %v223
  %v226 = vadd.f32 %v212, %v224
  %v227 = vadd.f32 %v213, %v224
  %v228 = vld [vmem:[%s1] sm:$0xf]
  %230 = vset.pattern.permute.xlu0 0
  %231 = vperm.xlu0 %230, %v228
  %v232 = vpop.permute.xlu0 %231
  %v236 = vlaneseq
  %v237 = vshrl.u32 %v236, 7
  %v238 = vsub.s32 0, %v237
  %v239 = vrot.slane %v226, %v238
  %v240 = vlaneseq
  %v241 = vshrl.u32 %v240, 7
  %v242 = vsub.s32 4, %v241
  %v243 = vrot.slane %v226, %v242
  %v244 = vlaneseq
  %v245 = vshrl.u32 %v244, 7
  %v246 = vsub.s32 0, %v245
  %v247 = vrot.slane %v227, %v246
  %v248 = vlaneseq
  %v249 = vshrl.u32 %v248, 7
  %v250 = vsub.s32 4, %v249
  %v251 = vrot.slane %v227, %v250
  %v256 = vlaneseq
  %v257 = vshrl.u32 %v256, 7
  %v258 = vsub.s32 0, %v257
  %v259 = vrot.slane %v239, %v258
  %v260 = vlaneseq
  %v261 = vshrl.u32 %v260, 7
  %v262 = vsub.s32 0, %v261
  %v263 = vrot.slane %v243, %v262
  %v264 = vlaneseq
  %v265 = vshrl.u32 %v264, 7
  %v266 = vsub.s32 0, %v265
  %v267 = vrot.slane %v247, %v266
  %v268 = vlaneseq
  %v269 = vshrl.u32 %v268, 7
  %v270 = vsub.s32 0, %v269
  %v271 = vrot.slane %v251, %v270
  %v272 = vmul.f32 %v232, %v259
  %v273 = vmul.f32 %v232, %v263
  %v274 = vmul.f32 %v232, %v267
  %v275 = vmul.f32 %v232, %v271
  %276 = vset.pattern.permute.xlu0 1
  %277 = vperm.xlu0 %276, %v228
  %v278 = vpop.permute.xlu0 %277
  %v280 = vlaneseq
  %v281 = vshrl.u32 %v280, 7
  %v282 = vsub.s32 1, %v281
  %v283 = vrot.slane %v226, %v282
  %v284 = vlaneseq
  %v285 = vshrl.u32 %v284, 7
  %v286 = vsub.s32 5, %v285
  %v287 = vrot.slane %v226, %v286
  %v288 = vlaneseq
  %v289 = vshrl.u32 %v288, 7
  %v290 = vsub.s32 1, %v289
  %v291 = vrot.slane %v227, %v290
  %v292 = vlaneseq
  %v293 = vshrl.u32 %v292, 7
  %v294 = vsub.s32 5, %v293
  %v295 = vrot.slane %v227, %v294
  %v300 = vlaneseq
  %v301 = vshrl.u32 %v300, 7
  %v302 = vsub.s32 1, %v301
  %v303 = vrot.slane %v283, %v302
  %v304 = vlaneseq
  %v305 = vshrl.u32 %v304, 7
  %v306 = vsub.s32 1, %v305
  %v307 = vrot.slane %v287, %v306
  %v308 = vlaneseq
  %v309 = vshrl.u32 %v308, 7
  %v310 = vsub.s32 1, %v309
  %v311 = vrot.slane %v291, %v310
  %v312 = vlaneseq
  %v313 = vshrl.u32 %v312, 7
  %v314 = vsub.s32 1, %v313
  %v315 = vrot.slane %v295, %v314
  %v316 = vmul.f32 %v278, %v303
  %v317 = vmul.f32 %v278, %v307
  %v318 = vmul.f32 %v278, %v311
  %v319 = vmul.f32 %v278, %v315
  %v320 = vadd.f32 %v272, %v316
  %v321 = vadd.f32 %v273, %v317
  %v322 = vadd.f32 %v274, %v318
  %v323 = vadd.f32 %v275, %v319
  %324 = vset.pattern.permute.xlu0 2
  %325 = vperm.xlu0 %324, %v228
  %v326 = vpop.permute.xlu0 %325
  %v328 = vlaneseq
  %v329 = vshrl.u32 %v328, 7
  %v330 = vsub.s32 2, %v329
  %v331 = vrot.slane %v226, %v330
  %v332 = vlaneseq
  %v333 = vshrl.u32 %v332, 7
  %v334 = vsub.s32 6, %v333
  %v335 = vrot.slane %v226, %v334
  %v336 = vlaneseq
  %v337 = vshrl.u32 %v336, 7
  %v338 = vsub.s32 2, %v337
  %v339 = vrot.slane %v227, %v338
  %v340 = vlaneseq
  %v341 = vshrl.u32 %v340, 7
  %v342 = vsub.s32 6, %v341
  %v343 = vrot.slane %v227, %v342
  %v348 = vlaneseq
  %v349 = vshrl.u32 %v348, 7
  %v350 = vsub.s32 2, %v349
  %v351 = vrot.slane %v331, %v350
  %v352 = vlaneseq
  %v353 = vshrl.u32 %v352, 7
  %v354 = vsub.s32 2, %v353
  %v355 = vrot.slane %v335, %v354
  %v356 = vlaneseq
  %v357 = vshrl.u32 %v356, 7
  %v358 = vsub.s32 2, %v357
  %v359 = vrot.slane %v339, %v358
  %v360 = vlaneseq
  %v361 = vshrl.u32 %v360, 7
  %v362 = vsub.s32 2, %v361
  %v363 = vrot.slane %v343, %v362
  %v364 = vmul.f32 %v326, %v351
  %v365 = vmul.f32 %v326, %v355
  %v366 = vmul.f32 %v326, %v359
  %v367 = vmul.f32 %v326, %v363
  %v368 = vadd.f32 %v320, %v364
  %v369 = vadd.f32 %v321, %v365
  %v370 = vadd.f32 %v322, %v366
  %v371 = vadd.f32 %v323, %v367
  %372 = vset.pattern.permute.xlu0 3
  %373 = vperm.xlu0 %372, %v228
  %v374 = vpop.permute.xlu0 %373
  %v376 = vlaneseq
  %v377 = vshrl.u32 %v376, 7
  %v378 = vsub.s32 3, %v377
  %v379 = vrot.slane %v226, %v378
  %v380 = vlaneseq
  %v381 = vshrl.u32 %v380, 7
  %v382 = vsub.s32 7, %v381
  %v383 = vrot.slane %v226, %v382
  %v384 = vlaneseq
  %v385 = vshrl.u32 %v384, 7
  %v386 = vsub.s32 3, %v385
  %v387 = vrot.slane %v227, %v386
  %v388 = vlaneseq
  %v389 = vshrl.u32 %v388, 7
  %v390 = vsub.s32 7, %v389
  %v391 = vrot.slane %v227, %v390
  %v396 = vlaneseq
  %v397 = vshrl.u32 %v396, 7
  %v398 = vsub.s32 3, %v397
  %v399 = vrot.slane %v379, %v398
  %v400 = vlaneseq
  %v401 = vshrl.u32 %v400, 7
  %v402 = vsub.s32 3, %v401
  %v403 = vrot.slane %v383, %v402
  %v404 = vlaneseq
  %v405 = vshrl.u32 %v404, 7
  %v406 = vsub.s32 3, %v405
  %v407 = vrot.slane %v387, %v406
  %v408 = vlaneseq
  %v409 = vshrl.u32 %v408, 7
  %v410 = vsub.s32 3, %v409
  %v411 = vrot.slane %v391, %v410
  %v412 = vmul.f32 %v374, %v399
  %v413 = vmul.f32 %v374, %v403
  %v414 = vmul.f32 %v374, %v407
  %v415 = vmul.f32 %v374, %v411
  %v416 = vadd.f32 %v368, %v412
  %v417 = vadd.f32 %v369, %v413
  %v418 = vadd.f32 %v370, %v414
  %v419 = vadd.f32 %v371, %v415
  %v420 = vld [vmem:[%s2] sm:$0xf]
  %422 = vset.pattern.permute.xlu0 0
  %423 = vperm.xlu0 %422, %v420
  %v424 = vpop.permute.xlu0 %423
  %v426 = vadd.f32 %v416, %v424
  %v427 = vadd.f32 %v417, %v424
  %v428 = vadd.f32 %v418, %v424
  %v429 = vadd.f32 %v419, %v424
  %v430 = vsel %vm152, %v426, 0.0
  %v431 = vsel %vm152, %v427, 0.0
  %v432 = vadd.f32 %v430, %v431
  %v433 = vsel %vm152, %v428, 0.0
  %v434 = vadd.f32 %v432, %v433
  %v435 = vsel %vm152, %v429, 0.0
  %v436 = vadd.f32 %v434, %v435
  %437 = vadd.xlane.f32.xlu0 %v436
  %v438 = vpop.xlane.xlu0 %437
  %v439 = vmul.f32 %v438, 0.001953125
  %v440 = vsub.f32 %v426, %v439
  %v441 = vsub.f32 %v427, %v439
  %v442 = vsub.f32 %v428, %v439
  %v443 = vsub.f32 %v429, %v439
  %v444 = vmul.f32 %v440, %v440
  %v445 = vmul.f32 %v441, %v441
  %v446 = vmul.f32 %v442, %v442
  %v447 = vmul.f32 %v443, %v443
  %v448 = vsel %vm152, %v444, 0.0
  %v449 = vsel %vm152, %v445, 0.0
  %v450 = vadd.f32 %v448, %v449
  %v451 = vsel %vm152, %v446, 0.0
  %v452 = vadd.f32 %v450, %v451
  %v453 = vsel %vm152, %v447, 0.0
  %v454 = vadd.f32 %v452, %v453
  %455 = vadd.xlane.f32.xlu0 %v454
  %v456 = vpop.xlane.xlu0 %455
  %v457 = vmul.f32 %v456, 0.001953125
  %v458 = vld [vmem:[%s5] sm:$0xf]
  %v459 = vadd.f32 %v457, 1e-05
  %v460 = vrsqrt.pop %v459
  %v461 = vmul.f32 %v458, %v460
  %v462 = vld [vmem:[%s6] sm:$0xf]
  %v463 = vmul.f32 %v439, %v461
  %v464 = vsub.f32 %v462, %v463
  %466 = vset.pattern.permute.xlu0 0
  %467 = vperm.xlu0 %466, %v461
  %v468 = vpop.permute.xlu0 %467
  %v470 = vmul.f32 %v426, %v468
  %v471 = vmul.f32 %v427, %v468
  %v472 = vmul.f32 %v428, %v468
  %v473 = vmul.f32 %v429, %v468
  %v478 = vcombine.low %v470, %v471
  %v479 = vcombine.low %v472, %v473
  %v482 = vadd.f32 %v226, %v478
  %v483 = vadd.f32 %v227, %v479
  %485 = vset.pattern.permute.xlu0 0
  %486 = vperm.xlu0 %485, %v464
  %v487 = vpop.permute.xlu0 %486
  %v489 = vunpack.c.l.s4 839922192
  %v490 = vunpack.c.0.s8 %v489
  %v491 = vlaneseq
  %v492 = vshrl.u32 %v491, 7
  %v493 = vsub.s32 %v490, %v492
  %v494 = vrot.slane %v487, %v493
  %v496 = vadd.f32 %v482, %v494
  %v497 = vadd.f32 %v483, %v494
  %v498 = vcombine.high %v226, %v226
  %v499 = vcombine.high %v227, %v227
  %v502 = vsel %vm152, %v226, 0.0
  %v503 = vsel %vm152, %v498, 0.0
  %v504 = vadd.f32 %v502, %v503
  %v505 = vsel %vm152, %v227, 0.0
  %v506 = vadd.f32 %v504, %v505
  %v507 = vsel %vm152, %v499, 0.0
  %v508 = vadd.f32 %v506, %v507
  %509 = vadd.xlane.f32.xlu0 %v508
  %v510 = vpop.xlane.xlu0 %509
  %v511 = vmul.f32 %v510, 0.001953125
  %v514 = vunpack.c.l.s4 839922192
  %v515 = vunpack.c.0.s8 %v514
  %v516 = vlaneseq
  %v517 = vshrl.u32 %v516, 7
  %v518 = vsub.s32 %v515, %v517
  %v519 = vrot.slane %v511, %v518
  %v521 = vsub.f32 %v226, %v519
  %v522 = vsub.f32 %v227, %v519
  %v523 = vmul.f32 %v521, %v521
  %v524 = vmul.f32 %v522, %v522
  %v527 = vcombine.high %v523, %v523
  %v528 = vcombine.high %v524, %v524
  %v531 = vsel %vm152, %v523, 0.0
  %v532 = vsel %vm152, %v527, 0.0
  %v533 = vadd.f32 %v531, %v532
  %v534 = vsel %vm152, %v524, 0.0
  %v535 = vadd.f32 %v533, %v534
  %v536 = vsel %vm152, %v528, 0.0
  %v537 = vadd.f32 %v535, %v536
  %538 = vadd.xlane.f32.xlu0 %v537
  %v539 = vpop.xlane.xlu0 %538
  %v540 = vmul.f32 %v539, 0.001953125
  %v541 = vld [vmem:[%s7] sm:$0xf]
  %v542 = vadd.f32 %v540, 1e-05
  %v543 = vrsqrt.pop %v542
  %v544 = vmul.f32 %v541, %v543
  %v545 = vld [vmem:[%s8] sm:$0xf]
  %v546 = vmul.f32 %v511, %v544
  %v547 = vsub.f32 %v545, %v546
  %v550 = vcombine.high %v496, %v496
  %v551 = vcombine.high %v497, %v497
  %v554 = vsel %vm152, %v496, 0.0
  %v555 = vsel %vm152, %v550, 0.0
  %v556 = vadd.f32 %v554, %v555
  %v557 = vsel %vm152, %v497, 0.0
  %v558 = vadd.f32 %v556, %v557
  %v559 = vsel %vm152, %v551, 0.0
  %v560 = vadd.f32 %v558, %v559
  %561 = vadd.xlane.f32.xlu0 %v560
  %v562 = vpop.xlane.xlu0 %561
  %v563 = vmul.f32 %v562, 0.001953125
  %v566 = vunpack.c.l.s4 839922192
  %v567 = vunpack.c.0.s8 %v566
  %v568 = vlaneseq
  %v569 = vshrl.u32 %v568, 7
  %v570 = vsub.s32 %v567, %v569
  %v571 = vrot.slane %v563, %v570
  %v573 = vsub.f32 %v496, %v571
  %v574 = vsub.f32 %v497, %v571
  %v575 = vmul.f32 %v573, %v573
  %v576 = vmul.f32 %v574, %v574
  %v579 = vcombine.high %v575, %v575
  %v580 = vcombine.high %v576, %v576
  %v583 = vsel %vm152, %v575, 0.0
  %v584 = vsel %vm152, %v579, 0.0
  %v585 = vadd.f32 %v583, %v584
  %v586 = vsel %vm152, %v576, 0.0
  %v587 = vadd.f32 %v585, %v586
  %v588 = vsel %vm152, %v580, 0.0
  %v589 = vadd.f32 %v587, %v588
  %590 = vadd.xlane.f32.xlu0 %v589
  %v591 = vpop.xlane.xlu0 %590
  %v592 = vmul.f32 %v591, 0.001953125
  %v593 = vld [vmem:[%s9] sm:$0xf]
  %v594 = vadd.f32 %v592, 1e-05
  %v595 = vrsqrt.pop %v594
  %v596 = vmul.f32 %v593, %v595
  %v597 = vld [vmem:[%s10] sm:$0xf]
  %v598 = vmul.f32 %v563, %v596
  %v599 = vsub.f32 %v597, %v598
  %v600 = vld [vmem:[%s11] sm:$0xff]
  %v601 = vld [vmem:[%s11 + $0x8] sm:$0xff]
  %v602 = vld [vmem:[%s11 + $0x10] sm:$0xff]
  %v603 = vld [vmem:[%s11 + $0x18] sm:$0xff]
  %v604 = vld [vmem:[%s12] sm:$0xff]
  %v605 = vld [vmem:[%s12 + $0x8] sm:$0xff]
  %v606 = vld [vmem:[%s12 + $0x10] sm:$0xff]
  %v607 = vld [vmem:[%s12 + $0x18] sm:$0xff]
  %v608 = vlaneseq
  %v609 = vshrl.u32 %v608, 7
  %v610 = vsub.s32 0, %v609
  %v611 = vrot.slane %v544, %v610
  %v612 = vmul.f32 %v600, %v611
  %v613 = vmul.f32 %v601, %v611
  %v614 = vmul.f32 %v602, %v611
  %v615 = vmul.f32 %v603, %v611
  %617 = vset.pattern.permute.xlu0 0
  %618 = vperm.xlu0 %617, %v612
  %v619 = vpop.permute.xlu0 %618
  %622 = vset.pattern.permute.xlu0 0
  %623 = vperm.xlu0 %622, %v613
  %v624 = vpop.permute.xlu0 %623
  %627 = vset.pattern.permute.xlu0 0
  %628 = vperm.xlu0 %627, %v614
  %v629 = vpop.permute.xlu0 %628
  %632 = vset.pattern.permute.xlu0 0
  %633 = vperm.xlu0 %632, %v615
  %v634 = vpop.permute.xlu0 %633
  %v636 = vmul.f32 %v619, %v259
  %v637 = vmul.f32 %v619, %v263
  %v638 = vmul.f32 %v619, %v267
  %v639 = vmul.f32 %v619, %v271
  %v640 = vmul.f32 %v624, %v259
  %v641 = vmul.f32 %v624, %v263
  %v642 = vmul.f32 %v624, %v267
  %v643 = vmul.f32 %v624, %v271
  %v644 = vmul.f32 %v629, %v259
  %v645 = vmul.f32 %v629, %v263
  %v646 = vmul.f32 %v629, %v267
  %v647 = vmul.f32 %v629, %v271
  %v648 = vmul.f32 %v634, %v259
  %v649 = vmul.f32 %v634, %v263
  %v650 = vmul.f32 %v634, %v267
  %v651 = vmul.f32 %v634, %v271
  %v652 = vlaneseq
  %v653 = vshrl.u32 %v652, 7
  %v654 = vsub.s32 1, %v653
  %v655 = vrot.slane %v544, %v654
  %657 = vrot.lane.b32.xlu0 %v655, 1
  %v658 = vpop.permute.xlu0 %657
  %v660 = vmul.f32 %v600, %v658
  %v661 = vmul.f32 %v601, %v658
  %v662 = vmul.f32 %v602, %v658
  %v663 = vmul.f32 %v603, %v658
  %665 = vset.pattern.permute.xlu0 1
  %666 = vperm.xlu0 %665, %v660
  %v667 = vpop.permute.xlu0 %666
  %670 = vset.pattern.permute.xlu0 1
  %671 = vperm.xlu0 %670, %v661
  %v672 = vpop.permute.xlu0 %671
  %675 = vset.pattern.permute.xlu0 1
  %676 = vperm.xlu0 %675, %v662
  %v677 = vpop.permute.xlu0 %676
  %680 = vset.pattern.permute.xlu0 1
  %681 = vperm.xlu0 %680, %v663
  %v682 = vpop.permute.xlu0 %681
  %v684 = vmul.f32 %v667, %v303
  %v685 = vmul.f32 %v667, %v307
  %v686 = vmul.f32 %v667, %v311
  %v687 = vmul.f32 %v667, %v315
  %v688 = vmul.f32 %v672, %v303
  %v689 = vmul.f32 %v672, %v307
  %v690 = vmul.f32 %v672, %v311
  %v691 = vmul.f32 %v672, %v315
  %v692 = vmul.f32 %v677, %v303
  %v693 = vmul.f32 %v677, %v307
  %v694 = vmul.f32 %v677, %v311
  %v695 = vmul.f32 %v677, %v315
  %v696 = vmul.f32 %v682, %v303
  %v697 = vmul.f32 %v682, %v307
  %v698 = vmul.f32 %v682, %v311
  %v699 = vmul.f32 %v682, %v315
  %v700 = vadd.f32 %v636, %v684
  %v701 = vadd.f32 %v637, %v685
  %v702 = vadd.f32 %v638, %v686
  %v703 = vadd.f32 %v639, %v687
  %v704 = vadd.f32 %v640, %v688
  %v705 = vadd.f32 %v641, %v689
  %v706 = vadd.f32 %v642, %v690
  %v707 = vadd.f32 %v643, %v691
  %v708 = vadd.f32 %v644, %v692
  %v709 = vadd.f32 %v645, %v693
  %v710 = vadd.f32 %v646, %v694
  %v711 = vadd.f32 %v647, %v695
  %v712 = vadd.f32 %v648, %v696
  %v713 = vadd.f32 %v649, %v697
  %v714 = vadd.f32 %v650, %v698
  %v715 = vadd.f32 %v651, %v699
  %v716 = vlaneseq
  %v717 = vshrl.u32 %v716, 7
  %v718 = vsub.s32 2, %v717
  %v719 = vrot.slane %v544, %v718
  %721 = vrot.lane.b32.xlu0 %v719, 2
  %v722 = vpop.permute.xlu0 %721
  %v724 = vmul.f32 %v600, %v722
  %v725 = vmul.f32 %v601, %v722
  %v726 = vmul.f32 %v602, %v722
  %v727 = vmul.f32 %v603, %v722
  %729 = vset.pattern.permute.xlu0 2
  %730 = vperm.xlu0 %729, %v724
  %v731 = vpop.permute.xlu0 %730
  %734 = vset.pattern.permute.xlu0 2
  %735 = vperm.xlu0 %734, %v725
  %v736 = vpop.permute.xlu0 %735
  %739 = vset.pattern.permute.xlu0 2
  %740 = vperm.xlu0 %739, %v726
  %v741 = vpop.permute.xlu0 %740
  %744 = vset.pattern.permute.xlu0 2
  %745 = vperm.xlu0 %744, %v727
  %v746 = vpop.permute.xlu0 %745
  %v748 = vmul.f32 %v731, %v351
  %v749 = vmul.f32 %v731, %v355
  %v750 = vmul.f32 %v731, %v359
  %v751 = vmul.f32 %v731, %v363
  %v752 = vmul.f32 %v736, %v351
  %v753 = vmul.f32 %v736, %v355
  %v754 = vmul.f32 %v736, %v359
  %v755 = vmul.f32 %v736, %v363
  %v756 = vmul.f32 %v741, %v351
  %v757 = vmul.f32 %v741, %v355
  %v758 = vmul.f32 %v741, %v359
  %v759 = vmul.f32 %v741, %v363
  %v760 = vmul.f32 %v746, %v351
  %v761 = vmul.f32 %v746, %v355
  %v762 = vmul.f32 %v746, %v359
  %v763 = vmul.f32 %v746, %v363
  %v764 = vadd.f32 %v700, %v748
  %v765 = vadd.f32 %v701, %v749
  %v766 = vadd.f32 %v702, %v750
  %v767 = vadd.f32 %v703, %v751
  %v768 = vadd.f32 %v704, %v752
  %v769 = vadd.f32 %v705, %v753
  %v770 = vadd.f32 %v706, %v754
  %v771 = vadd.f32 %v707, %v755
  %v772 = vadd.f32 %v708, %v756
  %v773 = vadd.f32 %v709, %v757
  %v774 = vadd.f32 %v710, %v758
  %v775 = vadd.f32 %v711, %v759
  %v776 = vadd.f32 %v712, %v760
  %v777 = vadd.f32 %v713, %v761
  %v778 = vadd.f32 %v714, %v762
  %v779 = vadd.f32 %v715, %v763
  %v780 = vlaneseq
  %v781 = vshrl.u32 %v780, 7
  %v782 = vsub.s32 3, %v781
  %v783 = vrot.slane %v544, %v782
  %785 = vrot.lane.b32.xlu0 %v783, 3
  %v786 = vpop.permute.xlu0 %785
  %v788 = vmul.f32 %v600, %v786
  %v789 = vmul.f32 %v601, %v786
  %v790 = vmul.f32 %v602, %v786
  %v791 = vmul.f32 %v603, %v786
  %793 = vset.pattern.permute.xlu0 3
  %794 = vperm.xlu0 %793, %v788
  %v795 = vpop.permute.xlu0 %794
  %798 = vset.pattern.permute.xlu0 3
  %799 = vperm.xlu0 %798, %v789
  %v800 = vpop.permute.xlu0 %799
  %803 = vset.pattern.permute.xlu0 3
  %804 = vperm.xlu0 %803, %v790
  %v805 = vpop.permute.xlu0 %804
  %808 = vset.pattern.permute.xlu0 3
  %809 = vperm.xlu0 %808, %v791
  %v810 = vpop.permute.xlu0 %809
  %v812 = vmul.f32 %v795, %v399
  %v813 = vmul.f32 %v795, %v403
  %v814 = vmul.f32 %v795, %v407
  %v815 = vmul.f32 %v795, %v411
  %v816 = vmul.f32 %v800, %v399
  %v817 = vmul.f32 %v800, %v403
  %v818 = vmul.f32 %v800, %v407
  %v819 = vmul.f32 %v800, %v411
  %v820 = vmul.f32 %v805, %v399
  %v821 = vmul.f32 %v805, %v403
  %v822 = vmul.f32 %v805, %v407
  %v823 = vmul.f32 %v805, %v411
  %v824 = vmul.f32 %v810, %v399
  %v825 = vmul.f32 %v810, %v403
  %v826 = vmul.f32 %v810, %v407
  %v827 = vmul.f32 %v810, %v411
  %v828 = vadd.f32 %v764, %v812
  %v829 = vadd.f32 %v765, %v813
  %v830 = vadd.f32 %v766, %v814
  %v831 = vadd.f32 %v767, %v815
  %v832 = vadd.f32 %v768, %v816
  %v833 = vadd.f32 %v769, %v817
  %v834 = vadd.f32 %v770, %v818
  %v835 = vadd.f32 %v771, %v819
  %v836 = vadd.f32 %v772, %v820
  %v837 = vadd.f32 %v773, %v821
  %v838 = vadd.f32 %v774, %v822
  %v839 = vadd.f32 %v775, %v823
  %v840 = vadd.f32 %v776, %v824
  %v841 = vadd.f32 %v777, %v825
  %v842 = vadd.f32 %v778, %v826
  %v843 = vadd.f32 %v779, %v827
  %v844 = vlaneseq
  %v845 = vshrl.u32 %v844, 7
  %v846 = vsub.s32 0, %v845
  %v847 = vrot.slane %v596, %v846
  %v848 = vmul.f32 %v604, %v847
  %v849 = vmul.f32 %v605, %v847
  %v850 = vmul.f32 %v606, %v847
  %v851 = vmul.f32 %v607, %v847
  %853 = vset.pattern.permute.xlu0 0
  %854 = vperm.xlu0 %853, %v848
  %v855 = vpop.permute.xlu0 %854
  %858 = vset.pattern.permute.xlu0 0
  %859 = vperm.xlu0 %858, %v849
  %v860 = vpop.permute.xlu0 %859
  %863 = vset.pattern.permute.xlu0 0
  %864 = vperm.xlu0 %863, %v850
  %v865 = vpop.permute.xlu0 %864
  %868 = vset.pattern.permute.xlu0 0
  %869 = vperm.xlu0 %868, %v851
  %v870 = vpop.permute.xlu0 %869
  %v872 = vlaneseq
  %v873 = vshrl.u32 %v872, 7
  %v874 = vsub.s32 0, %v873
  %v875 = vrot.slane %v496, %v874
  %v876 = vlaneseq
  %v877 = vshrl.u32 %v876, 7
  %v878 = vsub.s32 4, %v877
  %v879 = vrot.slane %v496, %v878
  %v880 = vlaneseq
  %v881 = vshrl.u32 %v880, 7
  %v882 = vsub.s32 0, %v881
  %v883 = vrot.slane %v497, %v882
  %v884 = vlaneseq
  %v885 = vshrl.u32 %v884, 7
  %v886 = vsub.s32 4, %v885
  %v887 = vrot.slane %v497, %v886
  %v892 = vlaneseq
  %v893 = vshrl.u32 %v892, 7
  %v894 = vsub.s32 0, %v893
  %v895 = vrot.slane %v875, %v894
  %v896 = vlaneseq
  %v897 = vshrl.u32 %v896, 7
  %v898 = vsub.s32 0, %v897
  %v899 = vrot.slane %v879, %v898
  %v900 = vlaneseq
  %v901 = vshrl.u32 %v900, 7
  %v902 = vsub.s32 0, %v901
  %v903 = vrot.slane %v883, %v902
  %v904 = vlaneseq
  %v905 = vshrl.u32 %v904, 7
  %v906 = vsub.s32 0, %v905
  %v907 = vrot.slane %v887, %v906
  %v908 = vmul.f32 %v855, %v895
  %v909 = vmul.f32 %v855, %v899
  %v910 = vmul.f32 %v855, %v903
  %v911 = vmul.f32 %v855, %v907
  %v912 = vmul.f32 %v860, %v895
  %v913 = vmul.f32 %v860, %v899
  %v914 = vmul.f32 %v860, %v903
  %v915 = vmul.f32 %v860, %v907
  %v916 = vmul.f32 %v865, %v895
  %v917 = vmul.f32 %v865, %v899
  %v918 = vmul.f32 %v865, %v903
  %v919 = vmul.f32 %v865, %v907
  %v920 = vmul.f32 %v870, %v895
  %v921 = vmul.f32 %v870, %v899
  %v922 = vmul.f32 %v870, %v903
  %v923 = vmul.f32 %v870, %v907
  %v924 = vlaneseq
  %v925 = vshrl.u32 %v924, 7
  %v926 = vsub.s32 1, %v925
  %v927 = vrot.slane %v596, %v926
  %929 = vrot.lane.b32.xlu0 %v927, 1
  %v930 = vpop.permute.xlu0 %929
  %v932 = vmul.f32 %v604, %v930
  %v933 = vmul.f32 %v605, %v930
  %v934 = vmul.f32 %v606, %v930
  %v935 = vmul.f32 %v607, %v930
  %937 = vset.pattern.permute.xlu0 1
  %938 = vperm.xlu0 %937, %v932
  %v939 = vpop.permute.xlu0 %938
  %942 = vset.pattern.permute.xlu0 1
  %943 = vperm.xlu0 %942, %v933
  %v944 = vpop.permute.xlu0 %943
  %947 = vset.pattern.permute.xlu0 1
  %948 = vperm.xlu0 %947, %v934
  %v949 = vpop.permute.xlu0 %948
  %952 = vset.pattern.permute.xlu0 1
  %953 = vperm.xlu0 %952, %v935
  %v954 = vpop.permute.xlu0 %953
  %v956 = vlaneseq
  %v957 = vshrl.u32 %v956, 7
  %v958 = vsub.s32 1, %v957
  %v959 = vrot.slane %v496, %v958
  %v960 = vlaneseq
  %v961 = vshrl.u32 %v960, 7
  %v962 = vsub.s32 5, %v961
  %v963 = vrot.slane %v496, %v962
  %v964 = vlaneseq
  %v965 = vshrl.u32 %v964, 7
  %v966 = vsub.s32 1, %v965
  %v967 = vrot.slane %v497, %v966
  %v968 = vlaneseq
  %v969 = vshrl.u32 %v968, 7
  %v970 = vsub.s32 5, %v969
  %v971 = vrot.slane %v497, %v970
  %v976 = vlaneseq
  %v977 = vshrl.u32 %v976, 7
  %v978 = vsub.s32 1, %v977
  %v979 = vrot.slane %v959, %v978
  %v980 = vlaneseq
  %v981 = vshrl.u32 %v980, 7
  %v982 = vsub.s32 1, %v981
  %v983 = vrot.slane %v963, %v982
  %v984 = vlaneseq
  %v985 = vshrl.u32 %v984, 7
  %v986 = vsub.s32 1, %v985
  %v987 = vrot.slane %v967, %v986
  %v988 = vlaneseq
  %v989 = vshrl.u32 %v988, 7
  %v990 = vsub.s32 1, %v989
  %v991 = vrot.slane %v971, %v990
  %v992 = vmul.f32 %v939, %v979
  %v993 = vmul.f32 %v939, %v983
  %v994 = vmul.f32 %v939, %v987
  %v995 = vmul.f32 %v939, %v991
  %v996 = vmul.f32 %v944, %v979
  %v997 = vmul.f32 %v944, %v983
  %v998 = vmul.f32 %v944, %v987
  %v999 = vmul.f32 %v944, %v991
  %v1000 = vmul.f32 %v949, %v979
  %v1001 = vmul.f32 %v949, %v983
  %v1002 = vmul.f32 %v949, %v987
  %v1003 = vmul.f32 %v949, %v991
  %v1004 = vmul.f32 %v954, %v979
  %v1005 = vmul.f32 %v954, %v983
  %v1006 = vmul.f32 %v954, %v987
  %v1007 = vmul.f32 %v954, %v991
  %v1008 = vadd.f32 %v908, %v992
  %v1009 = vadd.f32 %v909, %v993
  %v1010 = vadd.f32 %v910, %v994
  %v1011 = vadd.f32 %v911, %v995
  %v1012 = vadd.f32 %v912, %v996
  %v1013 = vadd.f32 %v913, %v997
  %v1014 = vadd.f32 %v914, %v998
  %v1015 = vadd.f32 %v915, %v999
  %v1016 = vadd.f32 %v916, %v1000
  %v1017 = vadd.f32 %v917, %v1001
  %v1018 = vadd.f32 %v918, %v1002
  %v1019 = vadd.f32 %v919, %v1003
  %v1020 = vadd.f32 %v920, %v1004
  %v1021 = vadd.f32 %v921, %v1005
  %v1022 = vadd.f32 %v922, %v1006
  %v1023 = vadd.f32 %v923, %v1007
  %v1024 = vlaneseq
  %v1025 = vshrl.u32 %v1024, 7
  %v1026 = vsub.s32 2, %v1025
  %v1027 = vrot.slane %v596, %v1026
  %1029 = vrot.lane.b32.xlu0 %v1027, 2
  %v1030 = vpop.permute.xlu0 %1029
  %v1032 = vmul.f32 %v604, %v1030
  %v1033 = vmul.f32 %v605, %v1030
  %v1034 = vmul.f32 %v606, %v1030
  %v1035 = vmul.f32 %v607, %v1030
  %1037 = vset.pattern.permute.xlu0 2
  %1038 = vperm.xlu0 %1037, %v1032
  %v1039 = vpop.permute.xlu0 %1038
  %1042 = vset.pattern.permute.xlu0 2
  %1043 = vperm.xlu0 %1042, %v1033
  %v1044 = vpop.permute.xlu0 %1043
  %1047 = vset.pattern.permute.xlu0 2
  %1048 = vperm.xlu0 %1047, %v1034
  %v1049 = vpop.permute.xlu0 %1048
  %1052 = vset.pattern.permute.xlu0 2
  %1053 = vperm.xlu0 %1052, %v1035
  %v1054 = vpop.permute.xlu0 %1053
  %v1056 = vlaneseq
  %v1057 = vshrl.u32 %v1056, 7
  %v1058 = vsub.s32 2, %v1057
  %v1059 = vrot.slane %v496, %v1058
  %v1060 = vlaneseq
  %v1061 = vshrl.u32 %v1060, 7
  %v1062 = vsub.s32 6, %v1061
  %v1063 = vrot.slane %v496, %v1062
  %v1064 = vlaneseq
  %v1065 = vshrl.u32 %v1064, 7
  %v1066 = vsub.s32 2, %v1065
  %v1067 = vrot.slane %v497, %v1066
  %v1068 = vlaneseq
  %v1069 = vshrl.u32 %v1068, 7
  %v1070 = vsub.s32 6, %v1069
  %v1071 = vrot.slane %v497, %v1070
  %v1076 = vlaneseq
  %v1077 = vshrl.u32 %v1076, 7
  %v1078 = vsub.s32 2, %v1077
  %v1079 = vrot.slane %v1059, %v1078
  %v1080 = vlaneseq
  %v1081 = vshrl.u32 %v1080, 7
  %v1082 = vsub.s32 2, %v1081
  %v1083 = vrot.slane %v1063, %v1082
  %v1084 = vlaneseq
  %v1085 = vshrl.u32 %v1084, 7
  %v1086 = vsub.s32 2, %v1085
  %v1087 = vrot.slane %v1067, %v1086
  %v1088 = vlaneseq
  %v1089 = vshrl.u32 %v1088, 7
  %v1090 = vsub.s32 2, %v1089
  %v1091 = vrot.slane %v1071, %v1090
  %v1092 = vmul.f32 %v1039, %v1079
  %v1093 = vmul.f32 %v1039, %v1083
  %v1094 = vmul.f32 %v1039, %v1087
  %v1095 = vmul.f32 %v1039, %v1091
  %v1096 = vmul.f32 %v1044, %v1079
  %v1097 = vmul.f32 %v1044, %v1083
  %v1098 = vmul.f32 %v1044, %v1087
  %v1099 = vmul.f32 %v1044, %v1091
  %v1100 = vmul.f32 %v1049, %v1079
  %v1101 = vmul.f32 %v1049, %v1083
  %v1102 = vmul.f32 %v1049, %v1087
  %v1103 = vmul.f32 %v1049, %v1091
  %v1104 = vmul.f32 %v1054, %v1079
  %v1105 = vmul.f32 %v1054, %v1083
  %v1106 = vmul.f32 %v1054, %v1087
  %v1107 = vmul.f32 %v1054, %v1091
  %v1108 = vadd.f32 %v1008, %v1092
  %v1109 = vadd.f32 %v1009, %v1093
  %v1110 = vadd.f32 %v1010, %v1094
  %v1111 = vadd.f32 %v1011, %v1095
  %v1112 = vadd.f32 %v1012, %v1096
  %v1113 = vadd.f32 %v1013, %v1097
  %v1114 = vadd.f32 %v1014, %v1098
  %v1115 = vadd.f32 %v1015, %v1099
  %v1116 = vadd.f32 %v1016, %v1100
  %v1117 = vadd.f32 %v1017, %v1101
  %v1118 = vadd.f32 %v1018, %v1102
  %v1119 = vadd.f32 %v1019, %v1103
  %v1120 = vadd.f32 %v1020, %v1104
  %v1121 = vadd.f32 %v1021, %v1105
  %v1122 = vadd.f32 %v1022, %v1106
  %v1123 = vadd.f32 %v1023, %v1107
  %v1124 = vlaneseq
  %v1125 = vshrl.u32 %v1124, 7
  %v1126 = vsub.s32 3, %v1125
  %v1127 = vrot.slane %v596, %v1126
  %1129 = vrot.lane.b32.xlu0 %v1127, 3
  %v1130 = vpop.permute.xlu0 %1129
  %v1132 = vmul.f32 %v604, %v1130
  %v1133 = vmul.f32 %v605, %v1130
  %v1134 = vmul.f32 %v606, %v1130
  %v1135 = vmul.f32 %v607, %v1130
  %1137 = vset.pattern.permute.xlu0 3
  %1138 = vperm.xlu0 %1137, %v1132
  %v1139 = vpop.permute.xlu0 %1138
  %1142 = vset.pattern.permute.xlu0 3
  %1143 = vperm.xlu0 %1142, %v1133
  %v1144 = vpop.permute.xlu0 %1143
  %1147 = vset.pattern.permute.xlu0 3
  %1148 = vperm.xlu0 %1147, %v1134
  %v1149 = vpop.permute.xlu0 %1148
  %1152 = vset.pattern.permute.xlu0 3
  %1153 = vperm.xlu0 %1152, %v1135
  %v1154 = vpop.permute.xlu0 %1153
  %v1156 = vlaneseq
  %v1157 = vshrl.u32 %v1156, 7
  %v1158 = vsub.s32 3, %v1157
  %v1159 = vrot.slane %v496, %v1158
  %v1160 = vlaneseq
  %v1161 = vshrl.u32 %v1160, 7
  %v1162 = vsub.s32 7, %v1161
  %v1163 = vrot.slane %v496, %v1162
  %v1164 = vlaneseq
  %v1165 = vshrl.u32 %v1164, 7
  %v1166 = vsub.s32 3, %v1165
  %v1167 = vrot.slane %v497, %v1166
  %v1168 = vlaneseq
  %v1169 = vshrl.u32 %v1168, 7
  %v1170 = vsub.s32 7, %v1169
  %v1171 = vrot.slane %v497, %v1170
  %v1176 = vlaneseq
  %v1177 = vshrl.u32 %v1176, 7
  %v1178 = vsub.s32 3, %v1177
  %v1179 = vrot.slane %v1159, %v1178
  %v1180 = vlaneseq
  %v1181 = vshrl.u32 %v1180, 7
  %v1182 = vsub.s32 3, %v1181
  %v1183 = vrot.slane %v1163, %v1182
  %v1184 = vlaneseq
  %v1185 = vshrl.u32 %v1184, 7
  %v1186 = vsub.s32 3, %v1185
  %v1187 = vrot.slane %v1167, %v1186
  %v1188 = vlaneseq
  %v1189 = vshrl.u32 %v1188, 7
  %v1190 = vsub.s32 3, %v1189
  %v1191 = vrot.slane %v1171, %v1190
  %v1192 = vmul.f32 %v1139, %v1179
  %v1193 = vmul.f32 %v1139, %v1183
  %v1194 = vmul.f32 %v1139, %v1187
  %v1195 = vmul.f32 %v1139, %v1191
  %v1196 = vmul.f32 %v1144, %v1179
  %v1197 = vmul.f32 %v1144, %v1183
  %v1198 = vmul.f32 %v1144, %v1187
  %v1199 = vmul.f32 %v1144, %v1191
  %v1200 = vmul.f32 %v1149, %v1179
  %v1201 = vmul.f32 %v1149, %v1183
  %v1202 = vmul.f32 %v1149, %v1187
  %v1203 = vmul.f32 %v1149, %v1191
  %v1204 = vmul.f32 %v1154, %v1179
  %v1205 = vmul.f32 %v1154, %v1183
  %v1206 = vmul.f32 %v1154, %v1187
  %v1207 = vmul.f32 %v1154, %v1191
  %v1208 = vadd.f32 %v1108, %v1192
  %v1209 = vadd.f32 %v1109, %v1193
  %v1210 = vadd.f32 %v1110, %v1194
  %v1211 = vadd.f32 %v1111, %v1195
  %v1212 = vadd.f32 %v1112, %v1196
  %v1213 = vadd.f32 %v1113, %v1197
  %v1214 = vadd.f32 %v1114, %v1198
  %v1215 = vadd.f32 %v1115, %v1199
  %v1216 = vadd.f32 %v1116, %v1200
  %v1217 = vadd.f32 %v1117, %v1201
  %v1218 = vadd.f32 %v1118, %v1202
  %v1219 = vadd.f32 %v1119, %v1203
  %v1220 = vadd.f32 %v1120, %v1204
  %v1221 = vadd.f32 %v1121, %v1205
  %v1222 = vadd.f32 %v1122, %v1206
  %v1223 = vadd.f32 %v1123, %v1207
  %v1224 = vadd.f32 %v828, %v1208
  %v1225 = vadd.f32 %v829, %v1209
  %v1226 = vadd.f32 %v830, %v1210
  %v1227 = vadd.f32 %v831, %v1211
  %v1228 = vadd.f32 %v832, %v1212
  %v1229 = vadd.f32 %v833, %v1213
  %v1230 = vadd.f32 %v834, %v1214
  %v1231 = vadd.f32 %v835, %v1215
  %v1232 = vadd.f32 %v836, %v1216
  %v1233 = vadd.f32 %v837, %v1217
  %v1234 = vadd.f32 %v838, %v1218
  %v1235 = vadd.f32 %v839, %v1219
  %v1236 = vadd.f32 %v840, %v1220
  %v1237 = vadd.f32 %v841, %v1221
  %v1238 = vadd.f32 %v842, %v1222
  %v1239 = vadd.f32 %v843, %v1223
  %v1240 = vlaneseq
  %v1241 = vshrl.u32 %v1240, 7
  %v1242 = vsub.s32 0, %v1241
  %v1243 = vrot.slane %v547, %v1242
  %v1244 = vmul.f32 %v600, %v1243
  %v1245 = vmul.f32 %v601, %v1243
  %v1246 = vmul.f32 %v602, %v1243
  %v1247 = vmul.f32 %v603, %v1243
  %v1248 = vlaneseq
  %v1249 = vshrl.u32 %v1248, 7
  %v1250 = vsub.s32 1, %v1249
  %v1251 = vrot.slane %v547, %v1250
  %1253 = vrot.lane.b32.xlu0 %v1251, 1
  %v1254 = vpop.permute.xlu0 %1253
  %v1256 = vmul.f32 %v600, %v1254
  %v1257 = vmul.f32 %v601, %v1254
  %v1258 = vmul.f32 %v602, %v1254
  %v1259 = vmul.f32 %v603, %v1254
  %1264 = vrot.lane.b32.xlu0 %v1256, 127
  %v1265 = vpop.permute.xlu0 %1264
  %1266 = vrot.lane.b32.xlu0 %v1257, 127
  %v1267 = vpop.permute.xlu0 %1266
  %1268 = vrot.lane.b32.xlu0 %v1258, 127
  %v1269 = vpop.permute.xlu0 %1268
  %1270 = vrot.lane.b32.xlu0 %v1259, 127
  %v1271 = vpop.permute.xlu0 %1270
  %v1276 = vadd.f32 %v1244, %v1265
  %v1277 = vadd.f32 %v1245, %v1267
  %v1278 = vadd.f32 %v1246, %v1269
  %v1279 = vadd.f32 %v1247, %v1271
  %v1280 = vlaneseq
  %v1281 = vshrl.u32 %v1280, 7
  %v1282 = vsub.s32 2, %v1281
  %v1283 = vrot.slane %v547, %v1282
  %1285 = vrot.lane.b32.xlu0 %v1283, 2
  %v1286 = vpop.permute.xlu0 %1285
  %v1288 = vmul.f32 %v600, %v1286
  %v1289 = vmul.f32 %v601, %v1286
  %v1290 = vmul.f32 %v602, %v1286
  %v1291 = vmul.f32 %v603, %v1286
  %1296 = vrot.lane.b32.xlu0 %v1288, 126
  %v1297 = vpop.permute.xlu0 %1296
  %1298 = vrot.lane.b32.xlu0 %v1289, 126
  %v1299 = vpop.permute.xlu0 %1298
  %1300 = vrot.lane.b32.xlu0 %v1290, 126
  %v1301 = vpop.permute.xlu0 %1300
  %1302 = vrot.lane.b32.xlu0 %v1291, 126
  %v1303 = vpop.permute.xlu0 %1302
  %v1308 = vadd.f32 %v1276, %v1297
  %v1309 = vadd.f32 %v1277, %v1299
  %v1310 = vadd.f32 %v1278, %v1301
  %v1311 = vadd.f32 %v1279, %v1303
  %v1312 = vlaneseq
  %v1313 = vshrl.u32 %v1312, 7
  %v1314 = vsub.s32 3, %v1313
  %v1315 = vrot.slane %v547, %v1314
  %1317 = vrot.lane.b32.xlu0 %v1315, 3
  %v1318 = vpop.permute.xlu0 %1317
  %v1320 = vmul.f32 %v600, %v1318
  %v1321 = vmul.f32 %v601, %v1318
  %v1322 = vmul.f32 %v602, %v1318
  %v1323 = vmul.f32 %v603, %v1318
  %1328 = vrot.lane.b32.xlu0 %v1320, 125
  %v1329 = vpop.permute.xlu0 %1328
  %1330 = vrot.lane.b32.xlu0 %v1321, 125
  %v1331 = vpop.permute.xlu0 %1330
  %1332 = vrot.lane.b32.xlu0 %v1322, 125
  %v1333 = vpop.permute.xlu0 %1332
  %1334 = vrot.lane.b32.xlu0 %v1323, 125
  %v1335 = vpop.permute.xlu0 %1334
  %v1340 = vadd.f32 %v1308, %v1329
  %v1341 = vadd.f32 %v1309, %v1331
  %v1342 = vadd.f32 %v1310, %v1333
  %v1343 = vadd.f32 %v1311, %v1335
  %1345 = vset.pattern.permute.xlu0 0
  %1346 = vperm.xlu0 %1345, %v1340
  %v1347 = vpop.permute.xlu0 %1346
  %1350 = vset.pattern.permute.xlu0 0
  %1351 = vperm.xlu0 %1350, %v1341
  %v1352 = vpop.permute.xlu0 %1351
  %1355 = vset.pattern.permute.xlu0 0
  %1356 = vperm.xlu0 %1355, %v1342
  %v1357 = vpop.permute.xlu0 %1356
  %1360 = vset.pattern.permute.xlu0 0
  %1361 = vperm.xlu0 %1360, %v1343
  %v1362 = vpop.permute.xlu0 %1361
  %v1364 = vadd.f32 %v1224, %v1347
  %v1365 = vadd.f32 %v1225, %v1347
  %v1366 = vadd.f32 %v1226, %v1347
  %v1367 = vadd.f32 %v1227, %v1347
  %v1368 = vadd.f32 %v1228, %v1352
  %v1369 = vadd.f32 %v1229, %v1352
  %v1370 = vadd.f32 %v1230, %v1352
  %v1371 = vadd.f32 %v1231, %v1352
  %v1372 = vadd.f32 %v1232, %v1357
  %v1373 = vadd.f32 %v1233, %v1357
  %v1374 = vadd.f32 %v1234, %v1357
  %v1375 = vadd.f32 %v1235, %v1357
  %v1376 = vadd.f32 %v1236, %v1362
  %v1377 = vadd.f32 %v1237, %v1362
  %v1378 = vadd.f32 %v1238, %v1362
  %v1379 = vadd.f32 %v1239, %v1362
  %v1380 = vlaneseq
  %v1381 = vshrl.u32 %v1380, 7
  %v1382 = vsub.s32 0, %v1381
  %v1383 = vrot.slane %v599, %v1382
  %v1384 = vmul.f32 %v604, %v1383
  %v1385 = vmul.f32 %v605, %v1383
  %v1386 = vmul.f32 %v606, %v1383
  %v1387 = vmul.f32 %v607, %v1383
  %v1388 = vlaneseq
  %v1389 = vshrl.u32 %v1388, 7
  %v1390 = vsub.s32 1, %v1389
  %v1391 = vrot.slane %v599, %v1390
  %1393 = vrot.lane.b32.xlu0 %v1391, 1
  %v1394 = vpop.permute.xlu0 %1393
  %v1396 = vmul.f32 %v604, %v1394
  %v1397 = vmul.f32 %v605, %v1394
  %v1398 = vmul.f32 %v606, %v1394
  %v1399 = vmul.f32 %v607, %v1394
  %1404 = vrot.lane.b32.xlu0 %v1396, 127
  %v1405 = vpop.permute.xlu0 %1404
  %1406 = vrot.lane.b32.xlu0 %v1397, 127
  %v1407 = vpop.permute.xlu0 %1406
  %1408 = vrot.lane.b32.xlu0 %v1398, 127
  %v1409 = vpop.permute.xlu0 %1408
  %1410 = vrot.lane.b32.xlu0 %v1399, 127
  %v1411 = vpop.permute.xlu0 %1410
  %v1416 = vadd.f32 %v1384, %v1405
  %v1417 = vadd.f32 %v1385, %v1407
  %v1418 = vadd.f32 %v1386, %v1409
  %v1419 = vadd.f32 %v1387, %v1411
  %v1420 = vlaneseq
  %v1421 = vshrl.u32 %v1420, 7
  %v1422 = vsub.s32 2, %v1421
  %v1423 = vrot.slane %v599, %v1422
  %1425 = vrot.lane.b32.xlu0 %v1423, 2
  %v1426 = vpop.permute.xlu0 %1425
  %v1428 = vmul.f32 %v604, %v1426
  %v1429 = vmul.f32 %v605, %v1426
  %v1430 = vmul.f32 %v606, %v1426
  %v1431 = vmul.f32 %v607, %v1426
  %1436 = vrot.lane.b32.xlu0 %v1428, 126
  %v1437 = vpop.permute.xlu0 %1436
  %1438 = vrot.lane.b32.xlu0 %v1429, 126
  %v1439 = vpop.permute.xlu0 %1438
  %1440 = vrot.lane.b32.xlu0 %v1430, 126
  %v1441 = vpop.permute.xlu0 %1440
  %1442 = vrot.lane.b32.xlu0 %v1431, 126
  %v1443 = vpop.permute.xlu0 %1442
  %v1448 = vadd.f32 %v1416, %v1437
  %v1449 = vadd.f32 %v1417, %v1439
  %v1450 = vadd.f32 %v1418, %v1441
  %v1451 = vadd.f32 %v1419, %v1443
  %v1452 = vlaneseq
  %v1453 = vshrl.u32 %v1452, 7
  %v1454 = vsub.s32 3, %v1453
  %v1455 = vrot.slane %v599, %v1454
  %1457 = vrot.lane.b32.xlu0 %v1455, 3
  %v1458 = vpop.permute.xlu0 %1457
  %v1460 = vmul.f32 %v604, %v1458
  %v1461 = vmul.f32 %v605, %v1458
  %v1462 = vmul.f32 %v606, %v1458
  %v1463 = vmul.f32 %v607, %v1458
  %1468 = vrot.lane.b32.xlu0 %v1460, 125
  %v1469 = vpop.permute.xlu0 %1468
  %1470 = vrot.lane.b32.xlu0 %v1461, 125
  %v1471 = vpop.permute.xlu0 %1470
  %1472 = vrot.lane.b32.xlu0 %v1462, 125
  %v1473 = vpop.permute.xlu0 %1472
  %1474 = vrot.lane.b32.xlu0 %v1463, 125
  %v1475 = vpop.permute.xlu0 %1474
  %v1480 = vadd.f32 %v1448, %v1469
  %v1481 = vadd.f32 %v1449, %v1471
  %v1482 = vadd.f32 %v1450, %v1473
  %v1483 = vadd.f32 %v1451, %v1475
  %1485 = vset.pattern.permute.xlu0 0
  %1486 = vperm.xlu0 %1485, %v1480
  %v1487 = vpop.permute.xlu0 %1486
  %1490 = vset.pattern.permute.xlu0 0
  %1491 = vperm.xlu0 %1490, %v1481
  %v1492 = vpop.permute.xlu0 %1491
  %1495 = vset.pattern.permute.xlu0 0
  %1496 = vperm.xlu0 %1495, %v1482
  %v1497 = vpop.permute.xlu0 %1496
  %1500 = vset.pattern.permute.xlu0 0
  %1501 = vperm.xlu0 %1500, %v1483
  %v1502 = vpop.permute.xlu0 %1501
  %v1504 = vadd.f32 %v1364, %v1487
  %v1505 = vadd.f32 %v1365, %v1487
  %v1506 = vadd.f32 %v1366, %v1487
  %v1507 = vadd.f32 %v1367, %v1487
  %v1508 = vadd.f32 %v1368, %v1492
  %v1509 = vadd.f32 %v1369, %v1492
  %v1510 = vadd.f32 %v1370, %v1492
  %v1511 = vadd.f32 %v1371, %v1492
  %v1512 = vadd.f32 %v1372, %v1497
  %v1513 = vadd.f32 %v1373, %v1497
  %v1514 = vadd.f32 %v1374, %v1497
  %v1515 = vadd.f32 %v1375, %v1497
  %v1516 = vadd.f32 %v1376, %v1502
  %v1517 = vadd.f32 %v1377, %v1502
  %v1518 = vadd.f32 %v1378, %v1502
  %v1519 = vadd.f32 %v1379, %v1502
  %v1520 = vld [vmem:[%s13] sm:$0xff]
  %v1521 = vld [vmem:[%s13 + $0x8] sm:$0xff]
  %v1522 = vld [vmem:[%s13 + $0x10] sm:$0xff]
  %v1523 = vld [vmem:[%s13 + $0x18] sm:$0xff]
  %1525 = vset.pattern.permute.xlu0 0
  %1526 = vperm.xlu0 %1525, %v1520
  %v1527 = vpop.permute.xlu0 %1526
  %1530 = vset.pattern.permute.xlu0 0
  %1531 = vperm.xlu0 %1530, %v1521
  %v1532 = vpop.permute.xlu0 %1531
  %1535 = vset.pattern.permute.xlu0 0
  %1536 = vperm.xlu0 %1535, %v1522
  %v1537 = vpop.permute.xlu0 %1536
  %1540 = vset.pattern.permute.xlu0 0
  %1541 = vperm.xlu0 %1540, %v1523
  %v1542 = vpop.permute.xlu0 %1541
  %v1544 = vadd.f32 %v1504, %v1527
  %v1545 = vadd.f32 %v1505, %v1527
  %v1546 = vadd.f32 %v1506, %v1527
  %v1547 = vadd.f32 %v1507, %v1527
  %v1548 = vadd.f32 %v1508, %v1532
  %v1549 = vadd.f32 %v1509, %v1532
  %v1550 = vadd.f32 %v1510, %v1532
  %v1551 = vadd.f32 %v1511, %v1532
  %v1552 = vadd.f32 %v1512, %v1537
  %v1553 = vadd.f32 %v1513, %v1537
  %v1554 = vadd.f32 %v1514, %v1537
  %v1555 = vadd.f32 %v1515, %v1537
  %v1556 = vadd.f32 %v1516, %v1542
  %v1557 = vadd.f32 %v1517, %v1542
  %v1558 = vadd.f32 %v1518, %v1542
  %v1559 = vadd.f32 %v1519, %v1542
  %v1560 = vmax.f32 %v1544, 0.0
  %v1561 = vmax.f32 %v1545, 0.0
  %v1562 = vmax.f32 %v1546, 0.0
  %v1563 = vmax.f32 %v1547, 0.0
  %v1564 = vmax.f32 %v1548, 0.0
  %v1565 = vmax.f32 %v1549, 0.0
  %v1566 = vmax.f32 %v1550, 0.0
  %v1567 = vmax.f32 %v1551, 0.0
  %v1568 = vmax.f32 %v1552, 0.0
  %v1569 = vmax.f32 %v1553, 0.0
  %v1570 = vmax.f32 %v1554, 0.0
  %v1571 = vmax.f32 %v1555, 0.0
  %v1572 = vmax.f32 %v1556, 0.0
  %v1573 = vmax.f32 %v1557, 0.0
  %v1574 = vmax.f32 %v1558, 0.0
  %v1575 = vmax.f32 %v1559, 0.0
  %v1576 = vcombine.low %v496, %v496
  %v1577 = vcombine.low %v497, %v497
  %v1580 = vsel %vm152, %v226, %v1576
  %v1581 = vsel %vm152, %v498, %v496
  %v1582 = vsel %vm152, %v227, %v1577
  %v1583 = vsel %vm152, %v499, %v497
  %v1584 = vld [vmem:[%s14] sm:$0xff]
  %1586 = vset.pattern.permute.xlu0 0
  %1587 = vperm.xlu0 %1586, %v1584
  %v1588 = vpop.permute.xlu0 %1587
  %v1590 = vlaneseq
  %v1591 = vshrl.u32 %v1590, 7
  %v1592 = vsub.s32 0, %v1591
  %v1593 = vrot.slane %v1560, %v1592
  %v1594 = vlaneseq
  %v1595 = vshrl.u32 %v1594, 7
  %v1596 = vsub.s32 0, %v1595
  %v1597 = vrot.slane %v1561, %v1596
  %v1598 = vlaneseq
  %v1599 = vshrl.u32 %v1598, 7
  %v1600 = vsub.s32 0, %v1599
  %v1601 = vrot.slane %v1562, %v1600
  %v1602 = vlaneseq
  %v1603 = vshrl.u32 %v1602, 7
  %v1604 = vsub.s32 0, %v1603
  %v1605 = vrot.slane %v1563, %v1604
  %v1606 = vmul.f32 %v1588, %v1593
  %v1607 = vmul.f32 %v1588, %v1597
  %v1608 = vmul.f32 %v1588, %v1601
  %v1609 = vmul.f32 %v1588, %v1605
  %1610 = vset.pattern.permute.xlu0 1
  %1611 = vperm.xlu0 %1610, %v1584
  %v1612 = vpop.permute.xlu0 %1611
  %v1614 = vlaneseq
  %v1615 = vshrl.u32 %v1614, 7
  %v1616 = vsub.s32 1, %v1615
  %v1617 = vrot.slane %v1560, %v1616
  %v1618 = vlaneseq
  %v1619 = vshrl.u32 %v1618, 7
  %v1620 = vsub.s32 1, %v1619
  %v1621 = vrot.slane %v1561, %v1620
  %v1622 = vlaneseq
  %v1623 = vshrl.u32 %v1622, 7
  %v1624 = vsub.s32 1, %v1623
  %v1625 = vrot.slane %v1562, %v1624
  %v1626 = vlaneseq
  %v1627 = vshrl.u32 %v1626, 7
  %v1628 = vsub.s32 1, %v1627
  %v1629 = vrot.slane %v1563, %v1628
  %v1630 = vmul.f32 %v1612, %v1617
  %v1631 = vmul.f32 %v1612, %v1621
  %v1632 = vmul.f32 %v1612, %v1625
  %v1633 = vmul.f32 %v1612, %v1629
  %v1634 = vadd.f32 %v1606, %v1630
  %v1635 = vadd.f32 %v1607, %v1631
  %v1636 = vadd.f32 %v1608, %v1632
  %v1637 = vadd.f32 %v1609, %v1633
  %1638 = vset.pattern.permute.xlu0 2
  %1639 = vperm.xlu0 %1638, %v1584
  %v1640 = vpop.permute.xlu0 %1639
  %v1642 = vlaneseq
  %v1643 = vshrl.u32 %v1642, 7
  %v1644 = vsub.s32 2, %v1643
  %v1645 = vrot.slane %v1560, %v1644
  %v1646 = vlaneseq
  %v1647 = vshrl.u32 %v1646, 7
  %v1648 = vsub.s32 2, %v1647
  %v1649 = vrot.slane %v1561, %v1648
  %v1650 = vlaneseq
  %v1651 = vshrl.u32 %v1650, 7
  %v1652 = vsub.s32 2, %v1651
  %v1653 = vrot.slane %v1562, %v1652
  %v1654 = vlaneseq
  %v1655 = vshrl.u32 %v1654, 7
  %v1656 = vsub.s32 2, %v1655
  %v1657 = vrot.slane %v1563, %v1656
  %v1658 = vmul.f32 %v1640, %v1645
  %v1659 = vmul.f32 %v1640, %v1649
  %v1660 = vmul.f32 %v1640, %v1653
  %v1661 = vmul.f32 %v1640, %v1657
  %v1662 = vadd.f32 %v1634, %v1658
  %v1663 = vadd.f32 %v1635, %v1659
  %v1664 = vadd.f32 %v1636, %v1660
  %v1665 = vadd.f32 %v1637, %v1661
  %1666 = vset.pattern.permute.xlu0 3
  %1667 = vperm.xlu0 %1666, %v1584
  %v1668 = vpop.permute.xlu0 %1667
  %v1670 = vlaneseq
  %v1671 = vshrl.u32 %v1670, 7
  %v1672 = vsub.s32 3, %v1671
  %v1673 = vrot.slane %v1560, %v1672
  %v1674 = vlaneseq
  %v1675 = vshrl.u32 %v1674, 7
  %v1676 = vsub.s32 3, %v1675
  %v1677 = vrot.slane %v1561, %v1676
  %v1678 = vlaneseq
  %v1679 = vshrl.u32 %v1678, 7
  %v1680 = vsub.s32 3, %v1679
  %v1681 = vrot.slane %v1562, %v1680
  %v1682 = vlaneseq
  %v1683 = vshrl.u32 %v1682, 7
  %v1684 = vsub.s32 3, %v1683
  %v1685 = vrot.slane %v1563, %v1684
  %v1686 = vmul.f32 %v1668, %v1673
  %v1687 = vmul.f32 %v1668, %v1677
  %v1688 = vmul.f32 %v1668, %v1681
  %v1689 = vmul.f32 %v1668, %v1685
  %v1690 = vadd.f32 %v1662, %v1686
  %v1691 = vadd.f32 %v1663, %v1687
  %v1692 = vadd.f32 %v1664, %v1688
  %v1693 = vadd.f32 %v1665, %v1689
  %1694 = vset.pattern.permute.xlu0 4
  %1695 = vperm.xlu0 %1694, %v1584
  %v1696 = vpop.permute.xlu0 %1695
  %v1698 = vlaneseq
  %v1699 = vshrl.u32 %v1698, 7
  %v1700 = vsub.s32 4, %v1699
  %v1701 = vrot.slane %v1560, %v1700
  %v1702 = vlaneseq
  %v1703 = vshrl.u32 %v1702, 7
  %v1704 = vsub.s32 4, %v1703
  %v1705 = vrot.slane %v1561, %v1704
  %v1706 = vlaneseq
  %v1707 = vshrl.u32 %v1706, 7
  %v1708 = vsub.s32 4, %v1707
  %v1709 = vrot.slane %v1562, %v1708
  %v1710 = vlaneseq
  %v1711 = vshrl.u32 %v1710, 7
  %v1712 = vsub.s32 4, %v1711
  %v1713 = vrot.slane %v1563, %v1712
  %v1714 = vmul.f32 %v1696, %v1701
  %v1715 = vmul.f32 %v1696, %v1705
  %v1716 = vmul.f32 %v1696, %v1709
  %v1717 = vmul.f32 %v1696, %v1713
  %v1718 = vadd.f32 %v1690, %v1714
  %v1719 = vadd.f32 %v1691, %v1715
  %v1720 = vadd.f32 %v1692, %v1716
  %v1721 = vadd.f32 %v1693, %v1717
  %1722 = vset.pattern.permute.xlu0 5
  %1723 = vperm.xlu0 %1722, %v1584
  %v1724 = vpop.permute.xlu0 %1723
  %v1726 = vlaneseq
  %v1727 = vshrl.u32 %v1726, 7
  %v1728 = vsub.s32 5, %v1727
  %v1729 = vrot.slane %v1560, %v1728
  %v1730 = vlaneseq
  %v1731 = vshrl.u32 %v1730, 7
  %v1732 = vsub.s32 5, %v1731
  %v1733 = vrot.slane %v1561, %v1732
  %v1734 = vlaneseq
  %v1735 = vshrl.u32 %v1734, 7
  %v1736 = vsub.s32 5, %v1735
  %v1737 = vrot.slane %v1562, %v1736
  %v1738 = vlaneseq
  %v1739 = vshrl.u32 %v1738, 7
  %v1740 = vsub.s32 5, %v1739
  %v1741 = vrot.slane %v1563, %v1740
  %v1742 = vmul.f32 %v1724, %v1729
  %v1743 = vmul.f32 %v1724, %v1733
  %v1744 = vmul.f32 %v1724, %v1737
  %v1745 = vmul.f32 %v1724, %v1741
  %v1746 = vadd.f32 %v1718, %v1742
  %v1747 = vadd.f32 %v1719, %v1743
  %v1748 = vadd.f32 %v1720, %v1744
  %v1749 = vadd.f32 %v1721, %v1745
  %1750 = vset.pattern.permute.xlu0 6
  %1751 = vperm.xlu0 %1750, %v1584
  %v1752 = vpop.permute.xlu0 %1751
  %v1754 = vlaneseq
  %v1755 = vshrl.u32 %v1754, 7
  %v1756 = vsub.s32 6, %v1755
  %v1757 = vrot.slane %v1560, %v1756
  %v1758 = vlaneseq
  %v1759 = vshrl.u32 %v1758, 7
  %v1760 = vsub.s32 6, %v1759
  %v1761 = vrot.slane %v1561, %v1760
  %v1762 = vlaneseq
  %v1763 = vshrl.u32 %v1762, 7
  %v1764 = vsub.s32 6, %v1763
  %v1765 = vrot.slane %v1562, %v1764
  %v1766 = vlaneseq
  %v1767 = vshrl.u32 %v1766, 7
  %v1768 = vsub.s32 6, %v1767
  %v1769 = vrot.slane %v1563, %v1768
  %v1770 = vmul.f32 %v1752, %v1757
  %v1771 = vmul.f32 %v1752, %v1761
  %v1772 = vmul.f32 %v1752, %v1765
  %v1773 = vmul.f32 %v1752, %v1769
  %v1774 = vadd.f32 %v1746, %v1770
  %v1775 = vadd.f32 %v1747, %v1771
  %v1776 = vadd.f32 %v1748, %v1772
  %v1777 = vadd.f32 %v1749, %v1773
  %1778 = vset.pattern.permute.xlu0 7
  %1779 = vperm.xlu0 %1778, %v1584
  %v1780 = vpop.permute.xlu0 %1779
  %v1782 = vlaneseq
  %v1783 = vshrl.u32 %v1782, 7
  %v1784 = vsub.s32 7, %v1783
  %v1785 = vrot.slane %v1560, %v1784
  %v1786 = vlaneseq
  %v1787 = vshrl.u32 %v1786, 7
  %v1788 = vsub.s32 7, %v1787
  %v1789 = vrot.slane %v1561, %v1788
  %v1790 = vlaneseq
  %v1791 = vshrl.u32 %v1790, 7
  %v1792 = vsub.s32 7, %v1791
  %v1793 = vrot.slane %v1562, %v1792
  %v1794 = vlaneseq
  %v1795 = vshrl.u32 %v1794, 7
  %v1796 = vsub.s32 7, %v1795
  %v1797 = vrot.slane %v1563, %v1796
  %v1798 = vmul.f32 %v1780, %v1785
  %v1799 = vmul.f32 %v1780, %v1789
  %v1800 = vmul.f32 %v1780, %v1793
  %v1801 = vmul.f32 %v1780, %v1797
  %v1802 = vadd.f32 %v1774, %v1798
  %v1803 = vadd.f32 %v1775, %v1799
  %v1804 = vadd.f32 %v1776, %v1800
  %v1805 = vadd.f32 %v1777, %v1801
  %1806 = vset.pattern.permute.xlu0 8
  %1807 = vperm.xlu0 %1806, %v1584
  %v1808 = vpop.permute.xlu0 %1807
  %v1810 = vlaneseq
  %v1811 = vshrl.u32 %v1810, 7
  %v1812 = vsub.s32 0, %v1811
  %v1813 = vrot.slane %v1564, %v1812
  %v1814 = vlaneseq
  %v1815 = vshrl.u32 %v1814, 7
  %v1816 = vsub.s32 0, %v1815
  %v1817 = vrot.slane %v1565, %v1816
  %v1818 = vlaneseq
  %v1819 = vshrl.u32 %v1818, 7
  %v1820 = vsub.s32 0, %v1819
  %v1821 = vrot.slane %v1566, %v1820
  %v1822 = vlaneseq
  %v1823 = vshrl.u32 %v1822, 7
  %v1824 = vsub.s32 0, %v1823
  %v1825 = vrot.slane %v1567, %v1824
  %v1826 = vmul.f32 %v1808, %v1813
  %v1827 = vmul.f32 %v1808, %v1817
  %v1828 = vmul.f32 %v1808, %v1821
  %v1829 = vmul.f32 %v1808, %v1825
  %v1830 = vadd.f32 %v1802, %v1826
  %v1831 = vadd.f32 %v1803, %v1827
  %v1832 = vadd.f32 %v1804, %v1828
  %v1833 = vadd.f32 %v1805, %v1829
  %1834 = vset.pattern.permute.xlu0 9
  %1835 = vperm.xlu0 %1834, %v1584
  %v1836 = vpop.permute.xlu0 %1835
  %v1838 = vlaneseq
  %v1839 = vshrl.u32 %v1838, 7
  %v1840 = vsub.s32 1, %v1839
  %v1841 = vrot.slane %v1564, %v1840
  %v1842 = vlaneseq
  %v1843 = vshrl.u32 %v1842, 7
  %v1844 = vsub.s32 1, %v1843
  %v1845 = vrot.slane %v1565, %v1844
  %v1846 = vlaneseq
  %v1847 = vshrl.u32 %v1846, 7
  %v1848 = vsub.s32 1, %v1847
  %v1849 = vrot.slane %v1566, %v1848
  %v1850 = vlaneseq
  %v1851 = vshrl.u32 %v1850, 7
  %v1852 = vsub.s32 1, %v1851
  %v1853 = vrot.slane %v1567, %v1852
  %v1854 = vmul.f32 %v1836, %v1841
  %v1855 = vmul.f32 %v1836, %v1845
  %v1856 = vmul.f32 %v1836, %v1849
  %v1857 = vmul.f32 %v1836, %v1853
  %v1858 = vadd.f32 %v1830, %v1854
  %v1859 = vadd.f32 %v1831, %v1855
  %v1860 = vadd.f32 %v1832, %v1856
  %v1861 = vadd.f32 %v1833, %v1857
  %1862 = vset.pattern.permute.xlu0 10
  %1863 = vperm.xlu0 %1862, %v1584
  %v1864 = vpop.permute.xlu0 %1863
  %v1866 = vlaneseq
  %v1867 = vshrl.u32 %v1866, 7
  %v1868 = vsub.s32 2, %v1867
  %v1869 = vrot.slane %v1564, %v1868
  %v1870 = vlaneseq
  %v1871 = vshrl.u32 %v1870, 7
  %v1872 = vsub.s32 2, %v1871
  %v1873 = vrot.slane %v1565, %v1872
  %v1874 = vlaneseq
  %v1875 = vshrl.u32 %v1874, 7
  %v1876 = vsub.s32 2, %v1875
  %v1877 = vrot.slane %v1566, %v1876
  %v1878 = vlaneseq
  %v1879 = vshrl.u32 %v1878, 7
  %v1880 = vsub.s32 2, %v1879
  %v1881 = vrot.slane %v1567, %v1880
  %v1882 = vmul.f32 %v1864, %v1869
  %v1883 = vmul.f32 %v1864, %v1873
  %v1884 = vmul.f32 %v1864, %v1877
  %v1885 = vmul.f32 %v1864, %v1881
  %v1886 = vadd.f32 %v1858, %v1882
  %v1887 = vadd.f32 %v1859, %v1883
  %v1888 = vadd.f32 %v1860, %v1884
  %v1889 = vadd.f32 %v1861, %v1885
  %1890 = vset.pattern.permute.xlu0 11
  %1891 = vperm.xlu0 %1890, %v1584
  %v1892 = vpop.permute.xlu0 %1891
  %v1894 = vlaneseq
  %v1895 = vshrl.u32 %v1894, 7
  %v1896 = vsub.s32 3, %v1895
  %v1897 = vrot.slane %v1564, %v1896
  %v1898 = vlaneseq
  %v1899 = vshrl.u32 %v1898, 7
  %v1900 = vsub.s32 3, %v1899
  %v1901 = vrot.slane %v1565, %v1900
  %v1902 = vlaneseq
  %v1903 = vshrl.u32 %v1902, 7
  %v1904 = vsub.s32 3, %v1903
  %v1905 = vrot.slane %v1566, %v1904
  %v1906 = vlaneseq
  %v1907 = vshrl.u32 %v1906, 7
  %v1908 = vsub.s32 3, %v1907
  %v1909 = vrot.slane %v1567, %v1908
  %v1910 = vmul.f32 %v1892, %v1897
  %v1911 = vmul.f32 %v1892, %v1901
  %v1912 = vmul.f32 %v1892, %v1905
  %v1913 = vmul.f32 %v1892, %v1909
  %v1914 = vadd.f32 %v1886, %v1910
  %v1915 = vadd.f32 %v1887, %v1911
  %v1916 = vadd.f32 %v1888, %v1912
  %v1917 = vadd.f32 %v1889, %v1913
  %1918 = vset.pattern.permute.xlu0 12
  %1919 = vperm.xlu0 %1918, %v1584
  %v1920 = vpop.permute.xlu0 %1919
  %v1922 = vlaneseq
  %v1923 = vshrl.u32 %v1922, 7
  %v1924 = vsub.s32 4, %v1923
  %v1925 = vrot.slane %v1564, %v1924
  %v1926 = vlaneseq
  %v1927 = vshrl.u32 %v1926, 7
  %v1928 = vsub.s32 4, %v1927
  %v1929 = vrot.slane %v1565, %v1928
  %v1930 = vlaneseq
  %v1931 = vshrl.u32 %v1930, 7
  %v1932 = vsub.s32 4, %v1931
  %v1933 = vrot.slane %v1566, %v1932
  %v1934 = vlaneseq
  %v1935 = vshrl.u32 %v1934, 7
  %v1936 = vsub.s32 4, %v1935
  %v1937 = vrot.slane %v1567, %v1936
  %v1938 = vmul.f32 %v1920, %v1925
  %v1939 = vmul.f32 %v1920, %v1929
  %v1940 = vmul.f32 %v1920, %v1933
  %v1941 = vmul.f32 %v1920, %v1937
  %v1942 = vadd.f32 %v1914, %v1938
  %v1943 = vadd.f32 %v1915, %v1939
  %v1944 = vadd.f32 %v1916, %v1940
  %v1945 = vadd.f32 %v1917, %v1941
  %1946 = vset.pattern.permute.xlu0 13
  %1947 = vperm.xlu0 %1946, %v1584
  %v1948 = vpop.permute.xlu0 %1947
  %v1950 = vlaneseq
  %v1951 = vshrl.u32 %v1950, 7
  %v1952 = vsub.s32 5, %v1951
  %v1953 = vrot.slane %v1564, %v1952
  %v1954 = vlaneseq
  %v1955 = vshrl.u32 %v1954, 7
  %v1956 = vsub.s32 5, %v1955
  %v1957 = vrot.slane %v1565, %v1956
  %v1958 = vlaneseq
  %v1959 = vshrl.u32 %v1958, 7
  %v1960 = vsub.s32 5, %v1959
  %v1961 = vrot.slane %v1566, %v1960
  %v1962 = vlaneseq
  %v1963 = vshrl.u32 %v1962, 7
  %v1964 = vsub.s32 5, %v1963
  %v1965 = vrot.slane %v1567, %v1964
  %v1966 = vmul.f32 %v1948, %v1953
  %v1967 = vmul.f32 %v1948, %v1957
  %v1968 = vmul.f32 %v1948, %v1961
  %v1969 = vmul.f32 %v1948, %v1965
  %v1970 = vadd.f32 %v1942, %v1966
  %v1971 = vadd.f32 %v1943, %v1967
  %v1972 = vadd.f32 %v1944, %v1968
  %v1973 = vadd.f32 %v1945, %v1969
  %1974 = vset.pattern.permute.xlu0 14
  %1975 = vperm.xlu0 %1974, %v1584
  %v1976 = vpop.permute.xlu0 %1975
  %v1978 = vlaneseq
  %v1979 = vshrl.u32 %v1978, 7
  %v1980 = vsub.s32 6, %v1979
  %v1981 = vrot.slane %v1564, %v1980
  %v1982 = vlaneseq
  %v1983 = vshrl.u32 %v1982, 7
  %v1984 = vsub.s32 6, %v1983
  %v1985 = vrot.slane %v1565, %v1984
  %v1986 = vlaneseq
  %v1987 = vshrl.u32 %v1986, 7
  %v1988 = vsub.s32 6, %v1987
  %v1989 = vrot.slane %v1566, %v1988
  %v1990 = vlaneseq
  %v1991 = vshrl.u32 %v1990, 7
  %v1992 = vsub.s32 6, %v1991
  %v1993 = vrot.slane %v1567, %v1992
  %v1994 = vmul.f32 %v1976, %v1981
  %v1995 = vmul.f32 %v1976, %v1985
  %v1996 = vmul.f32 %v1976, %v1989
  %v1997 = vmul.f32 %v1976, %v1993
  %v1998 = vadd.f32 %v1970, %v1994
  %v1999 = vadd.f32 %v1971, %v1995
  %v2000 = vadd.f32 %v1972, %v1996
  %v2001 = vadd.f32 %v1973, %v1997
  %2002 = vset.pattern.permute.xlu0 15
  %2003 = vperm.xlu0 %2002, %v1584
  %v2004 = vpop.permute.xlu0 %2003
  %v2006 = vlaneseq
  %v2007 = vshrl.u32 %v2006, 7
  %v2008 = vsub.s32 7, %v2007
  %v2009 = vrot.slane %v1564, %v2008
  %v2010 = vlaneseq
  %v2011 = vshrl.u32 %v2010, 7
  %v2012 = vsub.s32 7, %v2011
  %v2013 = vrot.slane %v1565, %v2012
  %v2014 = vlaneseq
  %v2015 = vshrl.u32 %v2014, 7
  %v2016 = vsub.s32 7, %v2015
  %v2017 = vrot.slane %v1566, %v2016
  %v2018 = vlaneseq
  %v2019 = vshrl.u32 %v2018, 7
  %v2020 = vsub.s32 7, %v2019
  %v2021 = vrot.slane %v1567, %v2020
  %v2022 = vmul.f32 %v2004, %v2009
  %v2023 = vmul.f32 %v2004, %v2013
  %v2024 = vmul.f32 %v2004, %v2017
  %v2025 = vmul.f32 %v2004, %v2021
  %v2026 = vadd.f32 %v1998, %v2022
  %v2027 = vadd.f32 %v1999, %v2023
  %v2028 = vadd.f32 %v2000, %v2024
  %v2029 = vadd.f32 %v2001, %v2025
  %2030 = vset.pattern.permute.xlu0 16
  %2031 = vperm.xlu0 %2030, %v1584
  %v2032 = vpop.permute.xlu0 %2031
  %v2034 = vlaneseq
  %v2035 = vshrl.u32 %v2034, 7
  %v2036 = vsub.s32 0, %v2035
  %v2037 = vrot.slane %v1568, %v2036
  %v2038 = vlaneseq
  %v2039 = vshrl.u32 %v2038, 7
  %v2040 = vsub.s32 0, %v2039
  %v2041 = vrot.slane %v1569, %v2040
  %v2042 = vlaneseq
  %v2043 = vshrl.u32 %v2042, 7
  %v2044 = vsub.s32 0, %v2043
  %v2045 = vrot.slane %v1570, %v2044
  %v2046 = vlaneseq
  %v2047 = vshrl.u32 %v2046, 7
  %v2048 = vsub.s32 0, %v2047
  %v2049 = vrot.slane %v1571, %v2048
  %v2050 = vmul.f32 %v2032, %v2037
  %v2051 = vmul.f32 %v2032, %v2041
  %v2052 = vmul.f32 %v2032, %v2045
  %v2053 = vmul.f32 %v2032, %v2049
  %v2054 = vadd.f32 %v2026, %v2050
  %v2055 = vadd.f32 %v2027, %v2051
  %v2056 = vadd.f32 %v2028, %v2052
  %v2057 = vadd.f32 %v2029, %v2053
  %2058 = vset.pattern.permute.xlu0 17
  %2059 = vperm.xlu0 %2058, %v1584
  %v2060 = vpop.permute.xlu0 %2059
  %v2062 = vlaneseq
  %v2063 = vshrl.u32 %v2062, 7
  %v2064 = vsub.s32 1, %v2063
  %v2065 = vrot.slane %v1568, %v2064
  %v2066 = vlaneseq
  %v2067 = vshrl.u32 %v2066, 7
  %v2068 = vsub.s32 1, %v2067
  %v2069 = vrot.slane %v1569, %v2068
  %v2070 = vlaneseq
  %v2071 = vshrl.u32 %v2070, 7
  %v2072 = vsub.s32 1, %v2071
  %v2073 = vrot.slane %v1570, %v2072
  %v2074 = vlaneseq
  %v2075 = vshrl.u32 %v2074, 7
  %v2076 = vsub.s32 1, %v2075
  %v2077 = vrot.slane %v1571, %v2076
  %v2078 = vmul.f32 %v2060, %v2065
  %v2079 = vmul.f32 %v2060, %v2069
  %v2080 = vmul.f32 %v2060, %v2073
  %v2081 = vmul.f32 %v2060, %v2077
  %v2082 = vadd.f32 %v2054, %v2078
  %v2083 = vadd.f32 %v2055, %v2079
  %v2084 = vadd.f32 %v2056, %v2080
  %v2085 = vadd.f32 %v2057, %v2081
  %2086 = vset.pattern.permute.xlu0 18
  %2087 = vperm.xlu0 %2086, %v1584
  %v2088 = vpop.permute.xlu0 %2087
  %v2090 = vlaneseq
  %v2091 = vshrl.u32 %v2090, 7
  %v2092 = vsub.s32 2, %v2091
  %v2093 = vrot.slane %v1568, %v2092
  %v2094 = vlaneseq
  %v2095 = vshrl.u32 %v2094, 7
  %v2096 = vsub.s32 2, %v2095
  %v2097 = vrot.slane %v1569, %v2096
  %v2098 = vlaneseq
  %v2099 = vshrl.u32 %v2098, 7
  %v2100 = vsub.s32 2, %v2099
  %v2101 = vrot.slane %v1570, %v2100
  %v2102 = vlaneseq
  %v2103 = vshrl.u32 %v2102, 7
  %v2104 = vsub.s32 2, %v2103
  %v2105 = vrot.slane %v1571, %v2104
  %v2106 = vmul.f32 %v2088, %v2093
  %v2107 = vmul.f32 %v2088, %v2097
  %v2108 = vmul.f32 %v2088, %v2101
  %v2109 = vmul.f32 %v2088, %v2105
  %v2110 = vadd.f32 %v2082, %v2106
  %v2111 = vadd.f32 %v2083, %v2107
  %v2112 = vadd.f32 %v2084, %v2108
  %v2113 = vadd.f32 %v2085, %v2109
  %2114 = vset.pattern.permute.xlu0 19
  %2115 = vperm.xlu0 %2114, %v1584
  %v2116 = vpop.permute.xlu0 %2115
  %v2118 = vlaneseq
  %v2119 = vshrl.u32 %v2118, 7
  %v2120 = vsub.s32 3, %v2119
  %v2121 = vrot.slane %v1568, %v2120
  %v2122 = vlaneseq
  %v2123 = vshrl.u32 %v2122, 7
  %v2124 = vsub.s32 3, %v2123
  %v2125 = vrot.slane %v1569, %v2124
  %v2126 = vlaneseq
  %v2127 = vshrl.u32 %v2126, 7
  %v2128 = vsub.s32 3, %v2127
  %v2129 = vrot.slane %v1570, %v2128
  %v2130 = vlaneseq
  %v2131 = vshrl.u32 %v2130, 7
  %v2132 = vsub.s32 3, %v2131
  %v2133 = vrot.slane %v1571, %v2132
  %v2134 = vmul.f32 %v2116, %v2121
  %v2135 = vmul.f32 %v2116, %v2125
  %v2136 = vmul.f32 %v2116, %v2129
  %v2137 = vmul.f32 %v2116, %v2133
  %v2138 = vadd.f32 %v2110, %v2134
  %v2139 = vadd.f32 %v2111, %v2135
  %v2140 = vadd.f32 %v2112, %v2136
  %v2141 = vadd.f32 %v2113, %v2137
  %2142 = vset.pattern.permute.xlu0 20
  %2143 = vperm.xlu0 %2142, %v1584
  %v2144 = vpop.permute.xlu0 %2143
  %v2146 = vlaneseq
  %v2147 = vshrl.u32 %v2146, 7
  %v2148 = vsub.s32 4, %v2147
  %v2149 = vrot.slane %v1568, %v2148
  %v2150 = vlaneseq
  %v2151 = vshrl.u32 %v2150, 7
  %v2152 = vsub.s32 4, %v2151
  %v2153 = vrot.slane %v1569, %v2152
  %v2154 = vlaneseq
  %v2155 = vshrl.u32 %v2154, 7
  %v2156 = vsub.s32 4, %v2155
  %v2157 = vrot.slane %v1570, %v2156
  %v2158 = vlaneseq
  %v2159 = vshrl.u32 %v2158, 7
  %v2160 = vsub.s32 4, %v2159
  %v2161 = vrot.slane %v1571, %v2160
  %v2162 = vmul.f32 %v2144, %v2149
  %v2163 = vmul.f32 %v2144, %v2153
  %v2164 = vmul.f32 %v2144, %v2157
  %v2165 = vmul.f32 %v2144, %v2161
  %v2166 = vadd.f32 %v2138, %v2162
  %v2167 = vadd.f32 %v2139, %v2163
  %v2168 = vadd.f32 %v2140, %v2164
  %v2169 = vadd.f32 %v2141, %v2165
  %2170 = vset.pattern.permute.xlu0 21
  %2171 = vperm.xlu0 %2170, %v1584
  %v2172 = vpop.permute.xlu0 %2171
  %v2174 = vlaneseq
  %v2175 = vshrl.u32 %v2174, 7
  %v2176 = vsub.s32 5, %v2175
  %v2177 = vrot.slane %v1568, %v2176
  %v2178 = vlaneseq
  %v2179 = vshrl.u32 %v2178, 7
  %v2180 = vsub.s32 5, %v2179
  %v2181 = vrot.slane %v1569, %v2180
  %v2182 = vlaneseq
  %v2183 = vshrl.u32 %v2182, 7
  %v2184 = vsub.s32 5, %v2183
  %v2185 = vrot.slane %v1570, %v2184
  %v2186 = vlaneseq
  %v2187 = vshrl.u32 %v2186, 7
  %v2188 = vsub.s32 5, %v2187
  %v2189 = vrot.slane %v1571, %v2188
  %v2190 = vmul.f32 %v2172, %v2177
  %v2191 = vmul.f32 %v2172, %v2181
  %v2192 = vmul.f32 %v2172, %v2185
  %v2193 = vmul.f32 %v2172, %v2189
  %v2194 = vadd.f32 %v2166, %v2190
  %v2195 = vadd.f32 %v2167, %v2191
  %v2196 = vadd.f32 %v2168, %v2192
  %v2197 = vadd.f32 %v2169, %v2193
  %2198 = vset.pattern.permute.xlu0 22
  %2199 = vperm.xlu0 %2198, %v1584
  %v2200 = vpop.permute.xlu0 %2199
  %v2202 = vlaneseq
  %v2203 = vshrl.u32 %v2202, 7
  %v2204 = vsub.s32 6, %v2203
  %v2205 = vrot.slane %v1568, %v2204
  %v2206 = vlaneseq
  %v2207 = vshrl.u32 %v2206, 7
  %v2208 = vsub.s32 6, %v2207
  %v2209 = vrot.slane %v1569, %v2208
  %v2210 = vlaneseq
  %v2211 = vshrl.u32 %v2210, 7
  %v2212 = vsub.s32 6, %v2211
  %v2213 = vrot.slane %v1570, %v2212
  %v2214 = vlaneseq
  %v2215 = vshrl.u32 %v2214, 7
  %v2216 = vsub.s32 6, %v2215
  %v2217 = vrot.slane %v1571, %v2216
  %v2218 = vmul.f32 %v2200, %v2205
  %v2219 = vmul.f32 %v2200, %v2209
  %v2220 = vmul.f32 %v2200, %v2213
  %v2221 = vmul.f32 %v2200, %v2217
  %v2222 = vadd.f32 %v2194, %v2218
  %v2223 = vadd.f32 %v2195, %v2219
  %v2224 = vadd.f32 %v2196, %v2220
  %v2225 = vadd.f32 %v2197, %v2221
  %2226 = vset.pattern.permute.xlu0 23
  %2227 = vperm.xlu0 %2226, %v1584
  %v2228 = vpop.permute.xlu0 %2227
  %v2230 = vlaneseq
  %v2231 = vshrl.u32 %v2230, 7
  %v2232 = vsub.s32 7, %v2231
  %v2233 = vrot.slane %v1568, %v2232
  %v2234 = vlaneseq
  %v2235 = vshrl.u32 %v2234, 7
  %v2236 = vsub.s32 7, %v2235
  %v2237 = vrot.slane %v1569, %v2236
  %v2238 = vlaneseq
  %v2239 = vshrl.u32 %v2238, 7
  %v2240 = vsub.s32 7, %v2239
  %v2241 = vrot.slane %v1570, %v2240
  %v2242 = vlaneseq
  %v2243 = vshrl.u32 %v2242, 7
  %v2244 = vsub.s32 7, %v2243
  %v2245 = vrot.slane %v1571, %v2244
  %v2246 = vmul.f32 %v2228, %v2233
  %v2247 = vmul.f32 %v2228, %v2237
  %v2248 = vmul.f32 %v2228, %v2241
  %v2249 = vmul.f32 %v2228, %v2245
  %v2250 = vadd.f32 %v2222, %v2246
  %v2251 = vadd.f32 %v2223, %v2247
  %v2252 = vadd.f32 %v2224, %v2248
  %v2253 = vadd.f32 %v2225, %v2249
  %2254 = vset.pattern.permute.xlu0 24
  %2255 = vperm.xlu0 %2254, %v1584
  %v2256 = vpop.permute.xlu0 %2255
  %v2258 = vlaneseq
  %v2259 = vshrl.u32 %v2258, 7
  %v2260 = vsub.s32 0, %v2259
  %v2261 = vrot.slane %v1572, %v2260
  %v2262 = vlaneseq
  %v2263 = vshrl.u32 %v2262, 7
  %v2264 = vsub.s32 0, %v2263
  %v2265 = vrot.slane %v1573, %v2264
  %v2266 = vlaneseq
  %v2267 = vshrl.u32 %v2266, 7
  %v2268 = vsub.s32 0, %v2267
  %v2269 = vrot.slane %v1574, %v2268
  %v2270 = vlaneseq
  %v2271 = vshrl.u32 %v2270, 7
  %v2272 = vsub.s32 0, %v2271
  %v2273 = vrot.slane %v1575, %v2272
  %v2274 = vmul.f32 %v2256, %v2261
  %v2275 = vmul.f32 %v2256, %v2265
  %v2276 = vmul.f32 %v2256, %v2269
  %v2277 = vmul.f32 %v2256, %v2273
  %v2278 = vadd.f32 %v2250, %v2274
  %v2279 = vadd.f32 %v2251, %v2275
  %v2280 = vadd.f32 %v2252, %v2276
  %v2281 = vadd.f32 %v2253, %v2277
  %2282 = vset.pattern.permute.xlu0 25
  %2283 = vperm.xlu0 %2282, %v1584
  %v2284 = vpop.permute.xlu0 %2283
  %v2286 = vlaneseq
  %v2287 = vshrl.u32 %v2286, 7
  %v2288 = vsub.s32 1, %v2287
  %v2289 = vrot.slane %v1572, %v2288
  %v2290 = vlaneseq
  %v2291 = vshrl.u32 %v2290, 7
  %v2292 = vsub.s32 1, %v2291
  %v2293 = vrot.slane %v1573, %v2292
  %v2294 = vlaneseq
  %v2295 = vshrl.u32 %v2294, 7
  %v2296 = vsub.s32 1, %v2295
  %v2297 = vrot.slane %v1574, %v2296
  %v2298 = vlaneseq
  %v2299 = vshrl.u32 %v2298, 7
  %v2300 = vsub.s32 1, %v2299
  %v2301 = vrot.slane %v1575, %v2300
  %v2302 = vmul.f32 %v2284, %v2289
  %v2303 = vmul.f32 %v2284, %v2293
  %v2304 = vmul.f32 %v2284, %v2297
  %v2305 = vmul.f32 %v2284, %v2301
  %v2306 = vadd.f32 %v2278, %v2302
  %v2307 = vadd.f32 %v2279, %v2303
  %v2308 = vadd.f32 %v2280, %v2304
  %v2309 = vadd.f32 %v2281, %v2305
  %2310 = vset.pattern.permute.xlu0 26
  %2311 = vperm.xlu0 %2310, %v1584
  %v2312 = vpop.permute.xlu0 %2311
  %v2314 = vlaneseq
  %v2315 = vshrl.u32 %v2314, 7
  %v2316 = vsub.s32 2, %v2315
  %v2317 = vrot.slane %v1572, %v2316
  %v2318 = vlaneseq
  %v2319 = vshrl.u32 %v2318, 7
  %v2320 = vsub.s32 2, %v2319
  %v2321 = vrot.slane %v1573, %v2320
  %v2322 = vlaneseq
  %v2323 = vshrl.u32 %v2322, 7
  %v2324 = vsub.s32 2, %v2323
  %v2325 = vrot.slane %v1574, %v2324
  %v2326 = vlaneseq
  %v2327 = vshrl.u32 %v2326, 7
  %v2328 = vsub.s32 2, %v2327
  %v2329 = vrot.slane %v1575, %v2328
  %v2330 = vmul.f32 %v2312, %v2317
  %v2331 = vmul.f32 %v2312, %v2321
  %v2332 = vmul.f32 %v2312, %v2325
  %v2333 = vmul.f32 %v2312, %v2329
  %v2334 = vadd.f32 %v2306, %v2330
  %v2335 = vadd.f32 %v2307, %v2331
  %v2336 = vadd.f32 %v2308, %v2332
  %v2337 = vadd.f32 %v2309, %v2333
  %2338 = vset.pattern.permute.xlu0 27
  %2339 = vperm.xlu0 %2338, %v1584
  %v2340 = vpop.permute.xlu0 %2339
  %v2342 = vlaneseq
  %v2343 = vshrl.u32 %v2342, 7
  %v2344 = vsub.s32 3, %v2343
  %v2345 = vrot.slane %v1572, %v2344
  %v2346 = vlaneseq
  %v2347 = vshrl.u32 %v2346, 7
  %v2348 = vsub.s32 3, %v2347
  %v2349 = vrot.slane %v1573, %v2348
  %v2350 = vlaneseq
  %v2351 = vshrl.u32 %v2350, 7
  %v2352 = vsub.s32 3, %v2351
  %v2353 = vrot.slane %v1574, %v2352
  %v2354 = vlaneseq
  %v2355 = vshrl.u32 %v2354, 7
  %v2356 = vsub.s32 3, %v2355
  %v2357 = vrot.slane %v1575, %v2356
  %v2358 = vmul.f32 %v2340, %v2345
  %v2359 = vmul.f32 %v2340, %v2349
  %v2360 = vmul.f32 %v2340, %v2353
  %v2361 = vmul.f32 %v2340, %v2357
  %v2362 = vadd.f32 %v2334, %v2358
  %v2363 = vadd.f32 %v2335, %v2359
  %v2364 = vadd.f32 %v2336, %v2360
  %v2365 = vadd.f32 %v2337, %v2361
  %2366 = vset.pattern.permute.xlu0 28
  %2367 = vperm.xlu0 %2366, %v1584
  %v2368 = vpop.permute.xlu0 %2367
  %v2370 = vlaneseq
  %v2371 = vshrl.u32 %v2370, 7
  %v2372 = vsub.s32 4, %v2371
  %v2373 = vrot.slane %v1572, %v2372
  %v2374 = vlaneseq
  %v2375 = vshrl.u32 %v2374, 7
  %v2376 = vsub.s32 4, %v2375
  %v2377 = vrot.slane %v1573, %v2376
  %v2378 = vlaneseq
  %v2379 = vshrl.u32 %v2378, 7
  %v2380 = vsub.s32 4, %v2379
  %v2381 = vrot.slane %v1574, %v2380
  %v2382 = vlaneseq
  %v2383 = vshrl.u32 %v2382, 7
  %v2384 = vsub.s32 4, %v2383
  %v2385 = vrot.slane %v1575, %v2384
  %v2386 = vmul.f32 %v2368, %v2373
  %v2387 = vmul.f32 %v2368, %v2377
  %v2388 = vmul.f32 %v2368, %v2381
  %v2389 = vmul.f32 %v2368, %v2385
  %v2390 = vadd.f32 %v2362, %v2386
  %v2391 = vadd.f32 %v2363, %v2387
  %v2392 = vadd.f32 %v2364, %v2388
  %v2393 = vadd.f32 %v2365, %v2389
  %2394 = vset.pattern.permute.xlu0 29
  %2395 = vperm.xlu0 %2394, %v1584
  %v2396 = vpop.permute.xlu0 %2395
  %v2398 = vlaneseq
  %v2399 = vshrl.u32 %v2398, 7
  %v2400 = vsub.s32 5, %v2399
  %v2401 = vrot.slane %v1572, %v2400
  %v2402 = vlaneseq
  %v2403 = vshrl.u32 %v2402, 7
  %v2404 = vsub.s32 5, %v2403
  %v2405 = vrot.slane %v1573, %v2404
  %v2406 = vlaneseq
  %v2407 = vshrl.u32 %v2406, 7
  %v2408 = vsub.s32 5, %v2407
  %v2409 = vrot.slane %v1574, %v2408
  %v2410 = vlaneseq
  %v2411 = vshrl.u32 %v2410, 7
  %v2412 = vsub.s32 5, %v2411
  %v2413 = vrot.slane %v1575, %v2412
  %v2414 = vmul.f32 %v2396, %v2401
  %v2415 = vmul.f32 %v2396, %v2405
  %v2416 = vmul.f32 %v2396, %v2409
  %v2417 = vmul.f32 %v2396, %v2413
  %v2418 = vadd.f32 %v2390, %v2414
  %v2419 = vadd.f32 %v2391, %v2415
  %v2420 = vadd.f32 %v2392, %v2416
  %v2421 = vadd.f32 %v2393, %v2417
  %2422 = vset.pattern.permute.xlu0 30
  %2423 = vperm.xlu0 %2422, %v1584
  %v2424 = vpop.permute.xlu0 %2423
  %v2426 = vlaneseq
  %v2427 = vshrl.u32 %v2426, 7
  %v2428 = vsub.s32 6, %v2427
  %v2429 = vrot.slane %v1572, %v2428
  %v2430 = vlaneseq
  %v2431 = vshrl.u32 %v2430, 7
  %v2432 = vsub.s32 6, %v2431
  %v2433 = vrot.slane %v1573, %v2432
  %v2434 = vlaneseq
  %v2435 = vshrl.u32 %v2434, 7
  %v2436 = vsub.s32 6, %v2435
  %v2437 = vrot.slane %v1574, %v2436
  %v2438 = vlaneseq
  %v2439 = vshrl.u32 %v2438, 7
  %v2440 = vsub.s32 6, %v2439
  %v2441 = vrot.slane %v1575, %v2440
  %v2442 = vmul.f32 %v2424, %v2429
  %v2443 = vmul.f32 %v2424, %v2433
  %v2444 = vmul.f32 %v2424, %v2437
  %v2445 = vmul.f32 %v2424, %v2441
  %v2446 = vadd.f32 %v2418, %v2442
  %v2447 = vadd.f32 %v2419, %v2443
  %v2448 = vadd.f32 %v2420, %v2444
  %v2449 = vadd.f32 %v2421, %v2445
  %2450 = vset.pattern.permute.xlu0 31
  %2451 = vperm.xlu0 %2450, %v1584
  %v2452 = vpop.permute.xlu0 %2451
  %v2454 = vlaneseq
  %v2455 = vshrl.u32 %v2454, 7
  %v2456 = vsub.s32 7, %v2455
  %v2457 = vrot.slane %v1572, %v2456
  %v2458 = vlaneseq
  %v2459 = vshrl.u32 %v2458, 7
  %v2460 = vsub.s32 7, %v2459
  %v2461 = vrot.slane %v1573, %v2460
  %v2462 = vlaneseq
  %v2463 = vshrl.u32 %v2462, 7
  %v2464 = vsub.s32 7, %v2463
  %v2465 = vrot.slane %v1574, %v2464
  %v2466 = vlaneseq
  %v2467 = vshrl.u32 %v2466, 7
  %v2468 = vsub.s32 7, %v2467
  %v2469 = vrot.slane %v1575, %v2468
  %v2470 = vmul.f32 %v2452, %v2457
  %v2471 = vmul.f32 %v2452, %v2461
  %v2472 = vmul.f32 %v2452, %v2465
  %v2473 = vmul.f32 %v2452, %v2469
  %v2474 = vadd.f32 %v2446, %v2470
  %v2475 = vadd.f32 %v2447, %v2471
  %v2476 = vadd.f32 %v2448, %v2472
  %v2477 = vadd.f32 %v2449, %v2473
  %v2478 = vadd.f32 %v1580, %v2474
  %v2479 = vadd.f32 %v1581, %v2475
  %v2480 = vadd.f32 %v1582, %v2476
  %v2481 = vadd.f32 %v1583, %v2477
  %v2482 = vld [vmem:[%s15] sm:$0xff]
  %2484 = vset.pattern.permute.xlu0 0
  %2485 = vperm.xlu0 %2484, %v2482
  %v2486 = vpop.permute.xlu0 %2485
  %v2488 = vadd.f32 %v2478, %v2486
  %v2489 = vadd.f32 %v2479, %v2486
  %v2490 = vadd.f32 %v2480, %v2486
  %v2491 = vadd.f32 %v2481, %v2486
  %2492 = vst [vmem:[#allocation3] sm:$0xff] %v2488
  %2493 = vst [vmem:[#allocation3 + $0x8] sm:$0xff] %v2489
  %2494 = vst [vmem:[#allocation3 + $0x10] sm:$0xff] %v2490
  %2495 = vst [vmem:[#allocation3 + $0x18] sm:$0xff] %v2491
  // Predicated region
  $region130: #{tpu_custom_call.1} parent=0 // pred_check
    _
  $region131: #{tpu_custom_call.1} parent=0 // pred_check_branch
    %2497 = sbr.rel target = $region133
  $region132: #{tpu_custom_call.1} parent=0 // pred_region
    %2498 = sst [smem:[#allocation10]] [#allocation9]
    %2499 = sst [smem:[#allocation11]] [#allocation8]
  $region133: #{tpu_custom_call.1} parent=0 // pred_fallthru
    _
  %2501 = shalt.err (0)
  %s2503 = sshll.u32 [#allocation3], 4
  %s2504 = int_to_ptr.vmem [resolvable:$true] %s2503
  %2506 = dma.vmem_to_hbm [thread:$0]  %s2504, 256, %s16, [#allocation5]
  %s2507 = scalar_lea.vmem [#allocation3], 16
  %s2508 = scalar_lea.hbm %s16, 256
  %s2509 = scalar_lea.sflag [#allocation5], 1
  // Predicated region
  $region134: #{tpu_custom_call.1} parent=0 // pred_check
    _
  $region135: #{tpu_custom_call.1} parent=0 // pred_check_branch
    %2511 = sbr.rel target = $region137
  $region136: #{tpu_custom_call.1} parent=0 // pred_region
    %2512 = sst [smem:[#allocation10]] [#allocation13]
    %2513 = sst [smem:[#allocation11]] [#allocation12]
  $region137: #{tpu_custom_call.1} parent=0 // pred_fallthru
    _
  %2515 = shalt.err (0)
  %s2517 = sshll.u32 %s2507, 4
  %s2518 = int_to_ptr.vmem [resolvable:$true] %s2517
  %2520 = dma.vmem_to_hbm [thread:$0]  %s2518, 256, %s2508, %s2509
  %s2521 = smul.u32 8, 1
  %s2522 = smul.u32 %s2521, 2
  %s2523 = sshll.u32 %s2522, 4
  %2524 = dma.done [#allocation5], %s2523
  %s2525 = sshll.u32 %s2522, 4
  %2526 = dma.done %s2509, %s2525
  %2527 = vsyncmov [#allocation4]
  %s2528 = vpop.sfrf %2527
  %p2529 = scmp.eq.s32.totalorder %s2528, 0
  %p2530 = pneg %p2529
  %2532 = shalt.err (%p2530)
  %s2533 = scalar_lea.sflag [#allocation4], 1
  %2534 = vsyncmov %s2533
  %s2535 = vpop.sfrf %2534
  %p2536 = scmp.eq.s32.totalorder %s2535, 0
  %p2537 = pneg %p2536
  %2539 = shalt.err (%p2537)
  %2540 = vsyncmov [#allocation5]
  %s2541 = vpop.sfrf %2540
  %p2542 = scmp.eq.s32.totalorder %s2541, 0
  %p2543 = pneg %p2542
  %2545 = shalt.err (%p2543)
  %s2546 = scalar_lea.sflag [#allocation5], 1
  %2547 = vsyncmov %s2546
  %s2548 = vpop.sfrf %2547
  %p2549 = scmp.eq.s32.totalorder %s2548, 0
  %p2550 = pneg %p2549
  %2552 = shalt.err (%p2550)

</llo_original>
